<compile_context>
chip_gen: v5e
topology: v5e:2x2
jax: 0.10.0
libtpu: 0.0.40
codegen_flags: <defaults>
</compile_context>

<pallas_src>
import jax
import jax.numpy as jnp
from jax.experimental import pallas as pl
from jax.experimental.pallas import tpu as pltpu

STATE_SIZE = 1080 + 6 + 1           # 1087, as in the PyTorch module
D_PAD = 1152                        # 1087 rounded up to a multiple of 128
HIDDEN = (1024, 512, 256, 1)
N_OUT_PAD = 128                     # lane-dense padded width of the 256->1 head
TM_DEFAULT = 512                    # batch tile (review: amortize per-step overhead)


def critic_kernel(x_ref, w1_ref, b1_ref, w2_ref, b2_ref,
                  w3_ref, b3_ref, w4_ref, b4_ref, o_ref):
    # Layer 1: (TM, 1152) bf16 @ (1152, 1024) bf16, f32 accumulate.
    h = jnp.dot(x_ref[...], w1_ref[...],
                preferred_element_type=jnp.float32) + b1_ref[...]
    h = jnp.maximum(h, 0.0)
    # Layer 2: (TM, 1024) @ (1024, 512)
    h = jnp.dot(h.astype(jnp.bfloat16), w2_ref[...],
                preferred_element_type=jnp.float32) + b2_ref[...]
    h = jnp.maximum(h, 0.0)
    # Layer 3: (TM, 512) @ (512, 256)
    h = jnp.dot(h.astype(jnp.bfloat16), w3_ref[...],
                preferred_element_type=jnp.float32) + b3_ref[...]
    h = jnp.maximum(h, 0.0)
    # Layer 4 (256 -> 1), padded to N=128 for lane-dense unmasked stores.
    # Kept in f32 (tiny matmul) so the head numerics match the f32 reference.
    v = jnp.dot(h, w4_ref[...], preferred_element_type=jnp.float32) + b4_ref[...]
    o_ref[...] = jnp.tanh(v)


def pack_params(params):
    """One-time packing: pad/cast weights so the per-call path touches only x."""
    (w1, b1), (w2, b2), (w3, b3), (w4, b4) = params
    w1p = jnp.pad(w1, ((0, D_PAD - STATE_SIZE), (0, 0))).astype(jnp.bfloat16)
    w2b = w2.astype(jnp.bfloat16)
    w3b = w3.astype(jnp.bfloat16)
    # 256->1 head padded to 256->128 (real column 0, zeros elsewhere), f32.
    w4p = jnp.pad(w4.reshape(HIDDEN[2], 1), ((0, 0), (0, N_OUT_PAD - 1))).astype(jnp.float32)
    b4p = jnp.pad(b4.reshape(1, 1), ((0, 0), (0, N_OUT_PAD - 1))).astype(jnp.float32)
    return (w1p, b1, w2b, b2, w3b, b3, w4p, b4p)


def critic_forward(x, packed_params, tm=TM_DEFAULT):
    """x: (B, STATE_SIZE) f32.  packed_params: output of pack_params()."""
    B, D = x.shape
    assert D == STATE_SIZE
    w1p, b1, w2b, b2, w3b, b3, w4p, b4p = packed_params

    # Stream x as bf16; pad features 1087 -> 1152 with zeros (matching W1's zero rows).
    xp = jnp.pad(x.astype(jnp.bfloat16), ((0, 0), (0, D_PAD - D)))

    # Batch tile: TM for real batches; small batches round up to a multiple of 16
    # (bf16 sublane packing).
    TM = tm if B >= tm else max(16, -(-B // 16) * 16)
    Bp = -(-B // TM) * TM
    if Bp != B:
        xp = jnp.pad(xp, ((0, Bp - B), (0, 0)))
    grid = (Bp // TM,)

    const = lambda i: (0, 0)   # weights/biases: same block every grid step -> VMEM-resident
    out = pl.pallas_call(
        critic_kernel,
        out_shape=jax.ShapeDtypeStruct((Bp, N_OUT_PAD), jnp.float32),
        grid=grid,
        in_specs=[
            pl.BlockSpec((TM, D_PAD), lambda i: (i, 0)),        # x tile streams (bf16)
            pl.BlockSpec((D_PAD, HIDDEN[0]), const),            # W1 (bf16, padded rows)
            pl.BlockSpec((1, HIDDEN[0]), const),                # b1
            pl.BlockSpec((HIDDEN[0], HIDDEN[1]), const),        # W2 (bf16)
            pl.BlockSpec((1, HIDDEN[1]), const),                # b2
            pl.BlockSpec((HIDDEN[1], HIDDEN[2]), const),        # W3 (bf16)
            pl.BlockSpec((1, HIDDEN[2]), const),                # b3
            pl.BlockSpec((HIDDEN[2], N_OUT_PAD), const),        # W4 padded to (256, 128), f32
            pl.BlockSpec((1, N_OUT_PAD), const),                # b4 padded to (1, 128)
        ],
        out_specs=pl.BlockSpec((TM, N_OUT_PAD), lambda i: (i, 0)),
        compiler_params=pltpu.CompilerParams(
            # Batch tiles are independent; lets multi-TC chips (v7x) shard the grid.
            dimension_semantics=("parallel",),
            # Explicit scoped-VMEM budget: covers TM=512 double-buffered blocks on
            # every generation (v5e default is only 16 MiB; v7x physical is 64 MiB).
            vmem_limit_bytes=32 * 1024 * 1024,
        ),
    )(xp, w1p, b1, w2b, b2, w3b, b3, w4p, b4p)
    # Drop padded batch rows and the 127 zero padding columns of the head.
    return out[:B, 0:1]


def init_params(key):
    """Deterministic init mimicking nn.Linear's U(-1/sqrt(fan_in), +1/sqrt(fan_in))."""
    dims = (STATE_SIZE,) + HIDDEN
    params = []
    for i in range(len(HIDDEN)):
        fan_in, fan_out = dims[i], dims[i + 1]
        key, kw, kb = jax.random.split(key, 3)
        bound = 1.0 / jnp.sqrt(jnp.float32(fan_in))
        w = jax.random.uniform(kw, (fan_in, fan_out), jnp.float32, -bound, bound)
        b = jax.random.uniform(kb, (1, fan_out), jnp.float32, -bound, bound)
        params.append((w, b))
    return params


def reference_forward_matched(x, params):
    """Pure-JAX reference using the same bf16-input / f32-accumulate numerics."""
    (w1, b1), (w2, b2), (w3, b3), (w4, b4) = params
    h = jnp.dot(x.astype(jnp.bfloat16), w1.astype(jnp.bfloat16),
                preferred_element_type=jnp.float32) + b1
    h = jnp.maximum(h, 0.0)
    h = jnp.dot(h.astype(jnp.bfloat16), w2.astype(jnp.bfloat16),
                preferred_element_type=jnp.float32) + b2
    h = jnp.maximum(h, 0.0)
    h = jnp.dot(h.astype(jnp.bfloat16), w3.astype(jnp.bfloat16),
                preferred_element_type=jnp.float32) + b3
    h = jnp.maximum(h, 0.0)
    v = h @ w4 + b4
    return jnp.tanh(v)


def reference_forward_f32(x, params):
    h = x
    for i, (w, b) in enumerate(params):
        h = h @ w + b
        if i < len(params) - 1:
            h = jnp.maximum(h, 0.0)
    return jnp.tanh(h)


if __name__ == "__main__":
    key = jax.random.PRNGKey(0)
    key, kx = jax.random.split(key)
    params = init_params(key)
    packed = pack_params(params)          # one-time weight packing (pad + bf16 cast)

    fwd = jax.jit(lambda xx, pp: critic_forward(xx, pp))

    ok = True
    # B=8 exercises the small-batch path (TM=16, grid=(1,));
    # B=1024 exercises the tiled path (TM=512, grid=(2,)).
    for B in (8, 1024):
        x = jax.random.normal(jax.random.fold_in(kx, B), (B, STATE_SIZE), jnp.float32)
        out = jax.block_until_ready(fwd(x, packed))
        assert out.shape == (B, 1)
        # Tight check vs a reference with identical bf16-stream / f32-accumulate numerics.
        ref = reference_forward_matched(x, params)
        ok &= bool(jnp.allclose(out, ref, atol=2e-3, rtol=2e-3))
        # Loose sanity check vs the full-f32 PyTorch-equivalent forward (bf16 streaming
        # intentionally deviates from exact f32 parity).
        ref32 = reference_forward_f32(x, params)
        ok &= bool(jnp.allclose(out, ref32, atol=1e-1, rtol=1e-1))

    assert ok, "mismatch vs JAX reference"
    print("KERNEL_OK")
</pallas_src>

<mosaic_0001>
module attributes {stable_mosaic.version = 11 : i64} {
  func.func @critic_kernel(%arg0: i32, %arg1: memref<16x1152xbf16, #tpu.memory_space<vmem>>, %arg2: memref<1152x1024xbf16, #tpu.memory_space<vmem>>, %arg3: memref<1x1024xf32, #tpu.memory_space<vmem>>, %arg4: memref<1024x512xbf16, #tpu.memory_space<vmem>>, %arg5: memref<1x512xf32, #tpu.memory_space<vmem>>, %arg6: memref<512x256xbf16, #tpu.memory_space<vmem>>, %arg7: memref<1x256xf32, #tpu.memory_space<vmem>>, %arg8: memref<256x128xf32, #tpu.memory_space<vmem>>, %arg9: memref<1x128xf32, #tpu.memory_space<vmem>>, %arg10: memref<16x128xf32, #tpu.memory_space<vmem>>) attributes {dimension_semantics = [#tpu.dimension_semantics<parallel>], iteration_bounds = array<i64: 1>, scalar_prefetch = 0 : i64, scratch_operands = 0 : i64, tpu.core_type = #tpu.core_type<tc>, window_params = [{transform_indices = @transform_0, window_bounds = array<i64: 16, 1152>}, {pipeline_mode = #tpu.pipeline_mode<synchronous>, transform_indices = @transform_1, window_bounds = array<i64: 1152, 1024>}, {pipeline_mode = #tpu.pipeline_mode<synchronous>, transform_indices = @transform_2, window_bounds = array<i64: 1, 1024>}, {pipeline_mode = #tpu.pipeline_mode<synchronous>, transform_indices = @transform_3, window_bounds = array<i64: 1024, 512>}, {pipeline_mode = #tpu.pipeline_mode<synchronous>, transform_indices = @transform_4, window_bounds = array<i64: 1, 512>}, {pipeline_mode = #tpu.pipeline_mode<synchronous>, transform_indices = @transform_5, window_bounds = array<i64: 512, 256>}, {pipeline_mode = #tpu.pipeline_mode<synchronous>, transform_indices = @transform_6, window_bounds = array<i64: 1, 256>}, {pipeline_mode = #tpu.pipeline_mode<synchronous>, transform_indices = @transform_7, window_bounds = array<i64: 256, 128>}, {pipeline_mode = #tpu.pipeline_mode<synchronous>, transform_indices = @transform_8, window_bounds = array<i64: 1, 128>}, {transform_indices = @transform_9, window_bounds = array<i64: 16, 128>}]} {
    %c0 = arith.constant 0 : index
    %c0_0 = arith.constant 0 : index
    %0 = vector.load %arg1[%c0, %c0_0] : memref<16x1152xbf16, #tpu.memory_space<vmem>>, vector<16x1152xbf16>
    %c0_1 = arith.constant 0 : index
    %c0_2 = arith.constant 0 : index
    %1 = vector.load %arg2[%c0_1, %c0_2] : memref<1152x1024xbf16, #tpu.memory_space<vmem>>, vector<1152x1024xbf16>
    %cst = arith.constant dense<0.000000e+00> : vector<16x1024xf32>
    %2 = tpu.matmul %0, %1, %cst {dimension_numbers = #tpu.dot_dimension_numbers<[1], [0], [0], [1], [0, 0, 1, 1], [], []>} : vector<16x1152xbf16>, vector<1152x1024xbf16>, vector<16x1024xf32> -> vector<16x1024xf32>
    %c0_3 = arith.constant 0 : index
    %c0_4 = arith.constant 0 : index
    %3 = vector.load %arg3[%c0_3, %c0_4] : memref<1x1024xf32, #tpu.memory_space<vmem>>, vector<1x1024xf32>
    %4 = vector.broadcast %3 : vector<1x1024xf32> to vector<16x1024xf32>
    %5 = arith.addf %2, %4 : vector<16x1024xf32>
    %cst_5 = arith.constant 0.000000e+00 : f32
    %6 = vector.broadcast %cst_5 : f32 to vector<16x1024xf32>
    %7 = arith.maximumf %5, %6 : vector<16x1024xf32>
    %8 = arith.truncf %7 : vector<16x1024xf32> to vector<16x1024xbf16>
    %c0_6 = arith.constant 0 : index
    %c0_7 = arith.constant 0 : index
    %9 = vector.load %arg4[%c0_6, %c0_7] : memref<1024x512xbf16, #tpu.memory_space<vmem>>, vector<1024x512xbf16>
    %cst_8 = arith.constant dense<0.000000e+00> : vector<16x512xf32>
    %10 = tpu.matmul %8, %9, %cst_8 {dimension_numbers = #tpu.dot_dimension_numbers<[1], [0], [0], [1], [0, 0, 1, 1], [], []>} : vector<16x1024xbf16>, vector<1024x512xbf16>, vector<16x512xf32> -> vector<16x512xf32>
    %c0_9 = arith.constant 0 : index
    %c0_10 = arith.constant 0 : index
    %11 = vector.load %arg5[%c0_9, %c0_10] : memref<1x512xf32, #tpu.memory_space<vmem>>, vector<1x512xf32>
    %12 = vector.broadcast %11 : vector<1x512xf32> to vector<16x512xf32>
    %13 = arith.addf %10, %12 : vector<16x512xf32>
    %cst_11 = arith.constant 0.000000e+00 : f32
    %14 = vector.broadcast %cst_11 : f32 to vector<16x512xf32>
    %15 = arith.maximumf %13, %14 : vector<16x512xf32>
    %16 = arith.truncf %15 : vector<16x512xf32> to vector<16x512xbf16>
    %c0_12 = arith.constant 0 : index
    %c0_13 = arith.constant 0 : index
    %17 = vector.load %arg6[%c0_12, %c0_13] : memref<512x256xbf16, #tpu.memory_space<vmem>>, vector<512x256xbf16>
    %cst_14 = arith.constant dense<0.000000e+00> : vector<16x256xf32>
    %18 = tpu.matmul %16, %17, %cst_14 {dimension_numbers = #tpu.dot_dimension_numbers<[1], [0], [0], [1], [0, 0, 1, 1], [], []>} : vector<16x512xbf16>, vector<512x256xbf16>, vector<16x256xf32> -> vector<16x256xf32>
    %c0_15 = arith.constant 0 : index
    %c0_16 = arith.constant 0 : index
    %19 = vector.load %arg7[%c0_15, %c0_16] : memref<1x256xf32, #tpu.memory_space<vmem>>, vector<1x256xf32>
    %20 = vector.broadcast %19 : vector<1x256xf32> to vector<16x256xf32>
    %21 = arith.addf %18, %20 : vector<16x256xf32>
    %cst_17 = arith.constant 0.000000e+00 : f32
    %22 = vector.broadcast %cst_17 : f32 to vector<16x256xf32>
    %23 = arith.maximumf %21, %22 : vector<16x256xf32>
    %c0_18 = arith.constant 0 : index
    %c0_19 = arith.constant 0 : index
    %24 = vector.load %arg8[%c0_18, %c0_19] : memref<256x128xf32, #tpu.memory_space<vmem>>, vector<256x128xf32>
    %cst_20 = arith.constant dense<0.000000e+00> : vector<16x128xf32>
    %25 = tpu.matmul %23, %24, %cst_20 {dimension_numbers = #tpu.dot_dimension_numbers<[1], [0], [0], [1], [0, 0, 1, 1], [], []>} : vector<16x256xf32>, vector<256x128xf32>, vector<16x128xf32> -> vector<16x128xf32>
    %c0_21 = arith.constant 0 : index
    %c0_22 = arith.constant 0 : index
    %26 = vector.load %arg9[%c0_21, %c0_22] : memref<1x128xf32, #tpu.memory_space<vmem>>, vector<1x128xf32>
    %27 = vector.broadcast %26 : vector<1x128xf32> to vector<16x128xf32>
    %28 = arith.addf %25, %27 : vector<16x128xf32>
    %29 = math.tanh %28 : vector<16x128xf32>
    %c0_23 = arith.constant 0 : index
    %c0_24 = arith.constant 0 : index
    %30 = vector.load %arg10[%c0_23, %c0_24] : memref<16x128xf32, #tpu.memory_space<vmem>>, vector<16x128xf32>
    tpu.vector_store %arg10[%c0_23, %c0_24], %29 {strides = array<i32>} : memref<16x128xf32, #tpu.memory_space<vmem>>, vector<16x128xf32>,
    return
  }
  func.func @transform_0(%arg0: i32) -> (i32, i32) {
    %c0_i32 = arith.constant 0 : i32
    %c0_i32_0 = arith.constant 0 : i32
    return %arg0, %c0_i32 : i32, i32
  }
  func.func @transform_1(%arg0: i32) -> (i32, i32) {
    %c0_i32 = arith.constant 0 : i32
    %c0_i32_0 = arith.constant 0 : i32
    %c0_i32_1 = arith.constant 0 : i32
    return %c0_i32, %c0_i32_0 : i32, i32
  }
  func.func @transform_2(%arg0: i32) -> (i32, i32) {
    %c0_i32 = arith.constant 0 : i32
    %c0_i32_0 = arith.constant 0 : i32
    %c0_i32_1 = arith.constant 0 : i32
    return %c0_i32, %c0_i32_0 : i32, i32
  }
  func.func @transform_3(%arg0: i32) -> (i32, i32) {
    %c0_i32 = arith.constant 0 : i32
    %c0_i32_0 = arith.constant 0 : i32
    %c0_i32_1 = arith.constant 0 : i32
    return %c0_i32, %c0_i32_0 : i32, i32
  }
  func.func @transform_4(%arg0: i32) -> (i32, i32) {
    %c0_i32 = arith.constant 0 : i32
    %c0_i32_0 = arith.constant 0 : i32
    %c0_i32_1 = arith.constant 0 : i32
    return %c0_i32, %c0_i32_0 : i32, i32
  }
  func.func @transform_5(%arg0: i32) -> (i32, i32) {
    %c0_i32 = arith.constant 0 : i32
    %c0_i32_0 = arith.constant 0 : i32
    %c0_i32_1 = arith.constant 0 : i32
    return %c0_i32, %c0_i32_0 : i32, i32
  }
  func.func @transform_6(%arg0: i32) -> (i32, i32) {
    %c0_i32 = arith.constant 0 : i32
    %c0_i32_0 = arith.constant 0 : i32
    %c0_i32_1 = arith.constant 0 : i32
    return %c0_i32, %c0_i32_0 : i32, i32
  }
  func.func @transform_7(%arg0: i32) -> (i32, i32) {
    %c0_i32 = arith.constant 0 : i32
    %c0_i32_0 = arith.constant 0 : i32
    %c0_i32_1 = arith.constant 0 : i32
    return %c0_i32, %c0_i32_0 : i32, i32
  }
  func.func @transform_8(%arg0: i32) -> (i32, i32) {
    %c0_i32 = arith.constant 0 : i32
    %c0_i32_0 = arith.constant 0 : i32
    %c0_i32_1 = arith.constant 0 : i32
    return %c0_i32, %c0_i32_0 : i32, i32
  }
  func.func @transform_9(%arg0: i32) -> (i32, i32) {
    %c0_i32 = arith.constant 0 : i32
    %c0_i32_0 = arith.constant 0 : i32
    return %arg0, %c0_i32 : i32, i32
  }
}

</mosaic_0001>

<llo_original>
// kernel: _lambda_.1
$region0: #{_lambda_.1}
  #allocation0 [shape = 'u32[]', space=smem, size = 0x4, offset = 0x4, fixed_abs, tag = 'smem constant byte address 0x4 - core index']
  #allocation1 [shape = 'u32[72,128]{1,0:T(1,128)}', space=vmem, size = 0x9000, scoped, tag = 'internal scratch']
  %s0 = inlined_call_operand.vmem [shape: bf16[16,1152], index: 0, kind: input, shape index: {}]
  %s1 = inlined_call_operand.hbm [shape: bf16[1152,1024], index: 1, kind: input, shape index: {}]
  %s2 = inlined_call_operand.hbm [shape: f32[1,1024], index: 2, kind: input, shape index: {}]
  %s3 = inlined_call_operand.hbm [shape: bf16[1024,512], index: 3, kind: input, shape index: {}]
  %s4 = inlined_call_operand.hbm [shape: f32[1,512], index: 4, kind: input, shape index: {}]
  %s5 = inlined_call_operand.hbm [shape: bf16[512,256], index: 5, kind: input, shape index: {}]
  %s6 = inlined_call_operand.hbm [shape: f32[1,256], index: 6, kind: input, shape index: {}]
  %s7 = inlined_call_operand.hbm [shape: f32[256,128], index: 7, kind: input, shape index: {}]
  %s8 = inlined_call_operand.hbm [shape: f32[1,128], index: 8, kind: input, shape index: {}]
  %s9 = inlined_call_operand.vmem [shape: f32[16,128], index: 9, kind: output, shape index: {}]
  %s10 = sld [smem:[#allocation0]]
  $region78: #{_lambda_.1} parent=0
    _
  %s12 = ssub.s32 1, %s10
  %s13 = scalar_select 0, %s12, %s10
  $region1: #{_lambda_.1} parent=0
    #allocation2 [shape = 'u8[2359296]{0}', space=vmem, size = 0x240000, scoped, tag = 'input window, operand 1, single buffered']
    #allocation3 [shape = 's32[1]{0}', space=sflag, size = 0x4, scoped, tag = 'scoped memory for _lambda_.1']
    #allocation4 [shape = 'u8[4096]{0}', space=vmem, size = 0x1000, scoped, tag = 'input window, operand 2, single buffered']
    #allocation5 [shape = 's32[1]{0}', space=sflag, size = 0x4, scoped, tag = 'scoped memory for _lambda_.1']
    #allocation6 [shape = 'u8[1048576]{0}', space=vmem, size = 0x100000, scoped, tag = 'input window, operand 3, single buffered']
    #allocation7 [shape = 'u8[2048]{0}', space=vmem, size = 0x800, scoped, tag = 'input window, operand 4, single buffered']
    #allocation8 [shape = 's32[1]{0}', space=sflag, size = 0x4, scoped, tag = 'scoped memory for _lambda_.1']
    #allocation9 [shape = 'u8[262144]{0}', space=vmem, size = 0x40000, scoped, tag = 'input window, operand 5, single buffered']
    #allocation10 [shape = 'u8[1024]{0}', space=vmem, size = 0x400, scoped, tag = 'input window, operand 6, single buffered']
    #allocation11 [shape = 's32[1]{0}', space=sflag, size = 0x4, scoped, tag = 'scoped memory for _lambda_.1']
    #allocation12 [shape = 'u8[131072]{0}', space=vmem, size = 0x20000, scoped, tag = 'input window, operand 7, single buffered']
    #allocation13 [shape = 'u8[512]{0}', space=vmem, size = 0x400, scoped, tag = 'input window, operand 8, single buffered']
    #allocation14 [shape = 's32[1]{0}', space=sflag, size = 0x4, scoped, tag = 'scoped memory for _lambda_.1']
    %14 = vsyncpa [#allocation3], 0
    %15 = vsyncpa [#allocation5], 0
    %16 = vsyncpa [#allocation8], 0
    %17 = vsyncpa [#allocation11], 0
    %18 = vsyncpa [#allocation14], 0
    // Predicated region
    $region2: #{_lambda_.1} parent=1 // pred_check
      _
    $region3: #{_lambda_.1} parent=1 // pred_check_branch
      %20 = sbr.rel (0) target = $region5
    $region4: #{_lambda_.1} parent=1 // pred_region
      _
    $region5: #{_lambda_.1} parent=1 // pred_fallthru
      _
    // Predicated region
    $region6: #{_lambda_.1} parent=1 // pred_check
      _
    $region7: #{_lambda_.1} parent=1 // pred_check_branch
      %22 = sbr.rel (0) target = $region9
    $region8: #{_lambda_.1} parent=1 // pred_region
      %24 = vsyncadd [#allocation3], 0
      %s25 = sshll.u32 %s1, 4
      %s26 = int_to_ptr.hbm [resolvable:$true] %s25
      %s27 = sshll.u32 [#allocation2], 4
      %s28 = int_to_ptr.vmem [resolvable:$true] %s27
      %33 = dma.hbm_to_vmem [thread:$0]  %s26, 73728, %s28, [#allocation3], 512, 512, 32
    $region9: #{_lambda_.1} parent=1 // pred_fallthru
      _
    // Predicated region
    $region10: #{_lambda_.1} parent=1 // pred_check
      _
    $region11: #{_lambda_.1} parent=1 // pred_check_branch
      %35 = sbr.rel (0) target = $region13
    $region12: #{_lambda_.1} parent=1 // pred_region
      %37 = vsyncadd [#allocation5], 0
      %s39 = sshll.u32 %s2, 4
      %s40 = int_to_ptr.hbm [resolvable:$true] %s39
      %s41 = sshll.u32 [#allocation4], 4
      %s42 = int_to_ptr.vmem [resolvable:$true] %s41
      %44 = dma.hbm_to_vmem [thread:$0]  %s40, 128, %s42, [#allocation5]
    $region13: #{_lambda_.1} parent=1 // pred_fallthru
      _
    // Predicated region
    $region14: #{_lambda_.1} parent=1 // pred_check
      _
    $region15: #{_lambda_.1} parent=1 // pred_check_branch
      %46 = sbr.rel (0) target = $region17
    $region16: #{_lambda_.1} parent=1 // pred_region
      %48 = vsyncadd [#allocation5], 0
      %s49 = sshll.u32 %s3, 4
      %s50 = int_to_ptr.hbm [resolvable:$true] %s49
      %s51 = sshll.u32 [#allocation6], 4
      %s52 = int_to_ptr.vmem [resolvable:$true] %s51
      %57 = dma.hbm_to_vmem [thread:$0]  %s50, 32768, %s52, [#allocation5], 256, 256, 16
    $region17: #{_lambda_.1} parent=1 // pred_fallthru
      _
    // Predicated region
    $region18: #{_lambda_.1} parent=1 // pred_check
      _
    $region19: #{_lambda_.1} parent=1 // pred_check_branch
      %59 = sbr.rel (0) target = $region21
    $region20: #{_lambda_.1} parent=1 // pred_region
      %61 = vsyncadd [#allocation8], 0
      %s63 = sshll.u32 %s4, 4
      %s64 = int_to_ptr.hbm [resolvable:$true] %s63
      %s65 = sshll.u32 [#allocation7], 4
      %s66 = int_to_ptr.vmem [resolvable:$true] %s65
      %68 = dma.hbm_to_vmem [thread:$0]  %s64, 64, %s66, [#allocation8]
    $region21: #{_lambda_.1} parent=1 // pred_fallthru
      _
    // Predicated region
    $region22: #{_lambda_.1} parent=1 // pred_check
      _
    $region23: #{_lambda_.1} parent=1 // pred_check_branch
      %70 = sbr.rel (0) target = $region25
    $region24: #{_lambda_.1} parent=1 // pred_region
      %72 = vsyncadd [#allocation8], 0
      %s73 = sshll.u32 %s5, 4
      %s74 = int_to_ptr.hbm [resolvable:$true] %s73
      %s75 = sshll.u32 [#allocation9], 4
      %s76 = int_to_ptr.vmem [resolvable:$true] %s75
      %81 = dma.hbm_to_vmem [thread:$0]  %s74, 8192, %s76, [#allocation8], 128, 128, 8
    $region25: #{_lambda_.1} parent=1 // pred_fallthru
      _
    // Predicated region
    $region26: #{_lambda_.1} parent=1 // pred_check
      _
    $region27: #{_lambda_.1} parent=1 // pred_check_branch
      %83 = sbr.rel (0) target = $region29
    $region28: #{_lambda_.1} parent=1 // pred_region
      %85 = vsyncadd [#allocation11], 0
      %s87 = sshll.u32 %s6, 4
      %s88 = int_to_ptr.hbm [resolvable:$true] %s87
      %s89 = sshll.u32 [#allocation10], 4
      %s90 = int_to_ptr.vmem [resolvable:$true] %s89
      %92 = dma.hbm_to_vmem [thread:$0]  %s88, 32, %s90, [#allocation11]
    $region29: #{_lambda_.1} parent=1 // pred_fallthru
      _
    // Predicated region
    $region30: #{_lambda_.1} parent=1 // pred_check
      _
    $region31: #{_lambda_.1} parent=1 // pred_check_branch
      %94 = sbr.rel (0) target = $region33
    $region32: #{_lambda_.1} parent=1 // pred_region
      %96 = vsyncadd [#allocation11], 0
      %s97 = sshll.u32 %s7, 4
      %s98 = int_to_ptr.hbm [resolvable:$true] %s97
      %s99 = sshll.u32 [#allocation12], 4
      %s100 = int_to_ptr.vmem [resolvable:$true] %s99
      %105 = dma.hbm_to_vmem [thread:$0]  %s98, 4096, %s100, [#allocation11], 128, 128, 8
    $region33: #{_lambda_.1} parent=1 // pred_fallthru
      _
    // Predicated region
    $region34: #{_lambda_.1} parent=1 // pred_check
      _
    $region35: #{_lambda_.1} parent=1 // pred_check_branch
      %107 = sbr.rel (0) target = $region37
    $region36: #{_lambda_.1} parent=1 // pred_region
      %109 = vsyncadd [#allocation14], 0
      %s111 = sshll.u32 %s8, 4
      %s112 = int_to_ptr.hbm [resolvable:$true] %s111
      %s113 = sshll.u32 [#allocation13], 4
      %s114 = int_to_ptr.vmem [resolvable:$true] %s113
      %116 = dma.hbm_to_vmem [thread:$0]  %s112, 16, %s114, [#allocation14]
    $region37: #{_lambda_.1} parent=1 // pred_fallthru
      _
    // Predicated region
    $region38: #{_lambda_.1} parent=1 // pred_check
      _
    $region39: #{_lambda_.1} parent=1 // pred_check_branch
      %118 = sbr.rel (0) target = $region41
    $region40: #{_lambda_.1} parent=1 // pred_region
      %120 = dma.done [#allocation3], 73728
    $region41: #{_lambda_.1} parent=1 // pred_fallthru
      _
    // Predicated region
    $region42: #{_lambda_.1} parent=1 // pred_check
      _
    $region43: #{_lambda_.1} parent=1 // pred_check_branch
      %122 = sbr.rel (0) target = $region45
    $region44: #{_lambda_.1} parent=1 // pred_region
      %124 = dma.done [#allocation5], 128
    $region45: #{_lambda_.1} parent=1 // pred_fallthru
      _
    // Predicated region
    $region46: #{_lambda_.1} parent=1 // pred_check
      _
    $region47: #{_lambda_.1} parent=1 // pred_check_branch
      %126 = sbr.rel (0) target = $region49
    $region48: #{_lambda_.1} parent=1 // pred_region
      %128 = dma.done [#allocation5], 32768
    $region49: #{_lambda_.1} parent=1 // pred_fallthru
      _
    // Predicated region
    $region50: #{_lambda_.1} parent=1 // pred_check
      _
    $region51: #{_lambda_.1} parent=1 // pred_check_branch
      %130 = sbr.rel (0) target = $region53
    $region52: #{_lambda_.1} parent=1 // pred_region
      %132 = dma.done [#allocation8], 64
    $region53: #{_lambda_.1} parent=1 // pred_fallthru
      _
    // Predicated region
    $region54: #{_lambda_.1} parent=1 // pred_check
      _
    $region55: #{_lambda_.1} parent=1 // pred_check_branch
      %134 = sbr.rel (0) target = $region57
    $region56: #{_lambda_.1} parent=1 // pred_region
      %136 = dma.done [#allocation8], 8192
    $region57: #{_lambda_.1} parent=1 // pred_fallthru
      _
    // Predicated region
    $region58: #{_lambda_.1} parent=1 // pred_check
      _
    $region59: #{_lambda_.1} parent=1 // pred_check_branch
      %138 = sbr.rel (0) target = $region61
    $region60: #{_lambda_.1} parent=1 // pred_region
      %140 = dma.done [#allocation11], 32
    $region61: #{_lambda_.1} parent=1 // pred_fallthru
      _
    // Predicated region
    $region62: #{_lambda_.1} parent=1 // pred_check
      _
    $region63: #{_lambda_.1} parent=1 // pred_check_branch
      %142 = sbr.rel (0) target = $region65
    $region64: #{_lambda_.1} parent=1 // pred_region
      %144 = dma.done [#allocation11], 4096
    $region65: #{_lambda_.1} parent=1 // pred_fallthru
      _
    // Predicated region
    $region66: #{_lambda_.1} parent=1 // pred_check
      _
    $region67: #{_lambda_.1} parent=1 // pred_check_branch
      %146 = sbr.rel (0) target = $region69
    $region68: #{_lambda_.1} parent=1 // pred_region
      %148 = dma.done [#allocation14], 16
    $region69: #{_lambda_.1} parent=1 // pred_fallthru
      _
    %v149 = vld [vmem:[%s0] sm:$0xff]
    %v150 = vld [vmem:[%s0 + $0x8] sm:$0xff]
    %v151 = vld [vmem:[%s0 + $0x10] sm:$0xff]
    %v152 = vld [vmem:[%s0 + $0x18] sm:$0xff]
    %v153 = vld [vmem:[%s0 + $0x20] sm:$0xf]
    %v154 = vld [vmem:[%s0 + $0x24] sm:$0xff]
    %v155 = vld [vmem:[%s0 + $0x2c] sm:$0xff]
    %v156 = vld [vmem:[%s0 + $0x34] sm:$0xff]
    %v157 = vld [vmem:[%s0 + $0x3c] sm:$0xff]
    %v158 = vld [vmem:[%s0 + $0x44] sm:$0xf]
    %v159 = vld [vmem:[#allocation2] sm:$0xff]
    %v160 = vld [vmem:[#allocation2 + $0x8] sm:$0xff]
    %v161 = vld [vmem:[#allocation2 + $0x10] sm:$0xff]
    %v162 = vld [vmem:[#allocation2 + $0x18] sm:$0xff]
    %v163 = vld [vmem:[#allocation2 + $0x20] sm:$0xff]
    %v164 = vld [vmem:[#allocation2 + $0x28] sm:$0xff]
    %v165 = vld [vmem:[#allocation2 + $0x30] sm:$0xff]
    %v166 = vld [vmem:[#allocation2 + $0x38] sm:$0xff]
    %v167 = vld [vmem:[#allocation2 + $0x40] sm:$0xff]
    %v168 = vld [vmem:[#allocation2 + $0x48] sm:$0xff]
    %v169 = vld [vmem:[#allocation2 + $0x50] sm:$0xff]
    %v170 = vld [vmem:[#allocation2 + $0x58] sm:$0xff]
    %v171 = vld [vmem:[#allocation2 + $0x60] sm:$0xff]
    %v172 = vld [vmem:[#allocation2 + $0x68] sm:$0xff]
    %v173 = vld [vmem:[#allocation2 + $0x70] sm:$0xff]
    %v174 = vld [vmem:[#allocation2 + $0x78] sm:$0xff]
    %v175 = vld [vmem:[#allocation2 + $0x80] sm:$0xff]
    %v176 = vld [vmem:[#allocation2 + $0x88] sm:$0xff]
    %v177 = vld [vmem:[#allocation2 + $0x90] sm:$0xff]
    %v178 = vld [vmem:[#allocation2 + $0x98] sm:$0xff]
    %v179 = vld [vmem:[#allocation2 + $0xa0] sm:$0xff]
    %v180 = vld [vmem:[#allocation2 + $0xa8] sm:$0xff]
    %v181 = vld [vmem:[#allocation2 + $0xb0] sm:$0xff]
    %v182 = vld [vmem:[#allocation2 + $0xb8] sm:$0xff]
    %v183 = vld [vmem:[#allocation2 + $0xc0] sm:$0xff]
    %v184 = vld [vmem:[#allocation2 + $0xc8] sm:$0xff]
    %v185 = vld [vmem:[#allocation2 + $0xd0] sm:$0xff]
    %v186 = vld [vmem:[#allocation2 + $0xd8] sm:$0xff]
    %v187 = vld [vmem:[#allocation2 + $0xe0] sm:$0xff]
    %v188 = vld [vmem:[#allocation2 + $0xe8] sm:$0xff]
    %v189 = vld [vmem:[#allocation2 + $0xf0] sm:$0xff]
    %v190 = vld [vmem:[#allocation2 + $0xf8] sm:$0xff]
    %v191 = vld [vmem:[#allocation2 + $0x100] sm:$0xff]
    %v192 = vld [vmem:[#allocation2 + $0x108] sm:$0xff]
    %v193 = vld [vmem:[#allocation2 + $0x110] sm:$0xff]
    %v194 = vld [vmem:[#allocation2 + $0x118] sm:$0xff]
    %v195 = vld [vmem:[#allocation2 + $0x120] sm:$0xff]
    %v196 = vld [vmem:[#allocation2 + $0x128] sm:$0xff]
    %v197 = vld [vmem:[#allocation2 + $0x130] sm:$0xff]
    %v198 = vld [vmem:[#allocation2 + $0x138] sm:$0xff]
    %v199 = vld [vmem:[#allocation2 + $0x140] sm:$0xff]
    %v200 = vld [vmem:[#allocation2 + $0x148] sm:$0xff]
    %v201 = vld [vmem:[#allocation2 + $0x150] sm:$0xff]
    %v202 = vld [vmem:[#allocation2 + $0x158] sm:$0xff]
    %v203 = vld [vmem:[#allocation2 + $0x160] sm:$0xff]
    %v204 = vld [vmem:[#allocation2 + $0x168] sm:$0xff]
    %v205 = vld [vmem:[#allocation2 + $0x170] sm:$0xff]
    %v206 = vld [vmem:[#allocation2 + $0x178] sm:$0xff]
    %v207 = vld [vmem:[#allocation2 + $0x180] sm:$0xff]
    %v208 = vld [vmem:[#allocation2 + $0x188] sm:$0xff]
    %v209 = vld [vmem:[#allocation2 + $0x190] sm:$0xff]
    %v210 = vld [vmem:[#allocation2 + $0x198] sm:$0xff]
    %v211 = vld [vmem:[#allocation2 + $0x1a0] sm:$0xff]
    %v212 = vld [vmem:[#allocation2 + $0x1a8] sm:$0xff]
    %v213 = vld [vmem:[#allocation2 + $0x1b0] sm:$0xff]
    %v214 = vld [vmem:[#allocation2 + $0x1b8] sm:$0xff]
    %v215 = vld [vmem:[#allocation2 + $0x1c0] sm:$0xff]
    %v216 = vld [vmem:[#allocation2 + $0x1c8] sm:$0xff]
    %v217 = vld [vmem:[#allocation2 + $0x1d0] sm:$0xff]
    %v218 = vld [vmem:[#allocation2 + $0x1d8] sm:$0xff]
    %v219 = vld [vmem:[#allocation2 + $0x1e0] sm:$0xff]
    %v220 = vld [vmem:[#allocation2 + $0x1e8] sm:$0xff]
    %v221 = vld [vmem:[#allocation2 + $0x1f0] sm:$0xff]
    %v222 = vld [vmem:[#allocation2 + $0x1f8] sm:$0xff]
    %v223 = vld [vmem:[#allocation2 + $0x200] sm:$0xff]
    %v224 = vld [vmem:[#allocation2 + $0x208] sm:$0xff]
    %v225 = vld [vmem:[#allocation2 + $0x210] sm:$0xff]
    %v226 = vld [vmem:[#allocation2 + $0x218] sm:$0xff]
    %v227 = vld [vmem:[#allocation2 + $0x220] sm:$0xff]
    %v228 = vld [vmem:[#allocation2 + $0x228] sm:$0xff]
    %v229 = vld [vmem:[#allocation2 + $0x230] sm:$0xff]
    %v230 = vld [vmem:[#allocation2 + $0x238] sm:$0xff]
    %v231 = vld [vmem:[#allocation2 + $0x240] sm:$0xff]
    %v232 = vld [vmem:[#allocation2 + $0x248] sm:$0xff]
    %v233 = vld [vmem:[#allocation2 + $0x250] sm:$0xff]
    %v234 = vld [vmem:[#allocation2 + $0x258] sm:$0xff]
    %v235 = vld [vmem:[#allocation2 + $0x260] sm:$0xff]
    %v236 = vld [vmem:[#allocation2 + $0x268] sm:$0xff]
    %v237 = vld [vmem:[#allocation2 + $0x270] sm:$0xff]
    %v238 = vld [vmem:[#allocation2 + $0x278] sm:$0xff]
    %v239 = vld [vmem:[#allocation2 + $0x280] sm:$0xff]
    %v240 = vld [vmem:[#allocation2 + $0x288] sm:$0xff]
    %v241 = vld [vmem:[#allocation2 + $0x290] sm:$0xff]
    %v242 = vld [vmem:[#allocation2 + $0x298] sm:$0xff]
    %v243 = vld [vmem:[#allocation2 + $0x2a0] sm:$0xff]
    %v244 = vld [vmem:[#allocation2 + $0x2a8] sm:$0xff]
    %v245 = vld [vmem:[#allocation2 + $0x2b0] sm:$0xff]
    %v246 = vld [vmem:[#allocation2 + $0x2b8] sm:$0xff]
    %v247 = vld [vmem:[#allocation2 + $0x2c0] sm:$0xff]
    %v248 = vld [vmem:[#allocation2 + $0x2c8] sm:$0xff]
    %v249 = vld [vmem:[#allocation2 + $0x2d0] sm:$0xff]
    %v250 = vld [vmem:[#allocation2 + $0x2d8] sm:$0xff]
    %v251 = vld [vmem:[#allocation2 + $0x2e0] sm:$0xff]
    %v252 = vld [vmem:[#allocation2 + $0x2e8] sm:$0xff]
    %v253 = vld [vmem:[#allocation2 + $0x2f0] sm:$0xff]
    %v254 = vld [vmem:[#allocation2 + $0x2f8] sm:$0xff]
    %v255 = vld [vmem:[#allocation2 + $0x300] sm:$0xff]
    %v256 = vld [vmem:[#allocation2 + $0x308] sm:$0xff]
    %v257 = vld [vmem:[#allocation2 + $0x310] sm:$0xff]
    %v258 = vld [vmem:[#allocation2 + $0x318] sm:$0xff]
    %v259 = vld [vmem:[#allocation2 + $0x320] sm:$0xff]
    %v260 = vld [vmem:[#allocation2 + $0x328] sm:$0xff]
    %v261 = vld [vmem:[#allocation2 + $0x330] sm:$0xff]
    %v262 = vld [vmem:[#allocation2 + $0x338] sm:$0xff]
    %v263 = vld [vmem:[#allocation2 + $0x340] sm:$0xff]
    %v264 = vld [vmem:[#allocation2 + $0x348] sm:$0xff]
    %v265 = vld [vmem:[#allocation2 + $0x350] sm:$0xff]
    %v266 = vld [vmem:[#allocation2 + $0x358] sm:$0xff]
    %v267 = vld [vmem:[#allocation2 + $0x360] sm:$0xff]
    %v268 = vld [vmem:[#allocation2 + $0x368] sm:$0xff]
    %v269 = vld [vmem:[#allocation2 + $0x370] sm:$0xff]
    %v270 = vld [vmem:[#allocation2 + $0x378] sm:$0xff]
    %v271 = vld [vmem:[#allocation2 + $0x380] sm:$0xff]
    %v272 = vld [vmem:[#allocation2 + $0x388] sm:$0xff]
    %v273 = vld [vmem:[#allocation2 + $0x390] sm:$0xff]
    %v274 = vld [vmem:[#allocation2 + $0x398] sm:$0xff]
    %v275 = vld [vmem:[#allocation2 + $0x3a0] sm:$0xff]
    %v276 = vld [vmem:[#allocation2 + $0x3a8] sm:$0xff]
    %v277 = vld [vmem:[#allocation2 + $0x3b0] sm:$0xff]
    %v278 = vld [vmem:[#allocation2 + $0x3b8] sm:$0xff]
    %v279 = vld [vmem:[#allocation2 + $0x3c0] sm:$0xff]
    %v280 = vld [vmem:[#allocation2 + $0x3c8] sm:$0xff]
    %v281 = vld [vmem:[#allocation2 + $0x3d0] sm:$0xff]
    %v282 = vld [vmem:[#allocation2 + $0x3d8] sm:$0xff]
    %v283 = vld [vmem:[#allocation2 + $0x3e0] sm:$0xff]
    %v284 = vld [vmem:[#allocation2 + $0x3e8] sm:$0xff]
    %v285 = vld [vmem:[#allocation2 + $0x3f0] sm:$0xff]
    %v286 = vld [vmem:[#allocation2 + $0x3f8] sm:$0xff]
    %v287 = vld [vmem:[#allocation2 + $0x400] sm:$0xff]
    %v288 = vld [vmem:[#allocation2 + $0x408] sm:$0xff]
    %v289 = vld [vmem:[#allocation2 + $0x410] sm:$0xff]
    %v290 = vld [vmem:[#allocation2 + $0x418] sm:$0xff]
    %v291 = vld [vmem:[#allocation2 + $0x420] sm:$0xff]
    %v292 = vld [vmem:[#allocation2 + $0x428] sm:$0xff]
    %v293 = vld [vmem:[#allocation2 + $0x430] sm:$0xff]
    %v294 = vld [vmem:[#allocation2 + $0x438] sm:$0xff]
    %v295 = vld [vmem:[#allocation2 + $0x440] sm:$0xff]
    %v296 = vld [vmem:[#allocation2 + $0x448] sm:$0xff]
    %v297 = vld [vmem:[#allocation2 + $0x450] sm:$0xff]
    %v298 = vld [vmem:[#allocation2 + $0x458] sm:$0xff]
    %v299 = vld [vmem:[#allocation2 + $0x460] sm:$0xff]
    %v300 = vld [vmem:[#allocation2 + $0x468] sm:$0xff]
    %v301 = vld [vmem:[#allocation2 + $0x470] sm:$0xff]
    %v302 = vld [vmem:[#allocation2 + $0x478] sm:$0xff]
    %v303 = vld [vmem:[#allocation2 + $0x480] sm:$0xff]
    %v304 = vld [vmem:[#allocation2 + $0x488] sm:$0xff]
    %v305 = vld [vmem:[#allocation2 + $0x490] sm:$0xff]
    %v306 = vld [vmem:[#allocation2 + $0x498] sm:$0xff]
    %v307 = vld [vmem:[#allocation2 + $0x4a0] sm:$0xff]
    %v308 = vld [vmem:[#allocation2 + $0x4a8] sm:$0xff]
    %v309 = vld [vmem:[#allocation2 + $0x4b0] sm:$0xff]
    %v310 = vld [vmem:[#allocation2 + $0x4b8] sm:$0xff]
    %v311 = vld [vmem:[#allocation2 + $0x4c0] sm:$0xff]
    %v312 = vld [vmem:[#allocation2 + $0x4c8] sm:$0xff]
    %v313 = vld [vmem:[#allocation2 + $0x4d0] sm:$0xff]
    %v314 = vld [vmem:[#allocation2 + $0x4d8] sm:$0xff]
    %v315 = vld [vmem:[#allocation2 + $0x4e0] sm:$0xff]
    %v316 = vld [vmem:[#allocation2 + $0x4e8] sm:$0xff]
    %v317 = vld [vmem:[#allocation2 + $0x4f0] sm:$0xff]
    %v318 = vld [vmem:[#allocation2 + $0x4f8] sm:$0xff]
    %v319 = vld [vmem:[#allocation2 + $0x500] sm:$0xff]
    %v320 = vld [vmem:[#allocation2 + $0x508] sm:$0xff]
    %v321 = vld [vmem:[#allocation2 + $0x510] sm:$0xff]
    %v322 = vld [vmem:[#allocation2 + $0x518] sm:$0xff]
    %v323 = vld [vmem:[#allocation2 + $0x520] sm:$0xff]
    %v324 = vld [vmem:[#allocation2 + $0x528] sm:$0xff]
    %v325 = vld [vmem:[#allocation2 + $0x530] sm:$0xff]
    %v326 = vld [vmem:[#allocation2 + $0x538] sm:$0xff]
    %v327 = vld [vmem:[#allocation2 + $0x540] sm:$0xff]
    %v328 = vld [vmem:[#allocation2 + $0x548] sm:$0xff]
    %v329 = vld [vmem:[#allocation2 + $0x550] sm:$0xff]
    %v330 = vld [vmem:[#allocation2 + $0x558] sm:$0xff]
    %v331 = vld [vmem:[#allocation2 + $0x560] sm:$0xff]
    %v332 = vld [vmem:[#allocation2 + $0x568] sm:$0xff]
    %v333 = vld [vmem:[#allocation2 + $0x570] sm:$0xff]
    %v334 = vld [vmem:[#allocation2 + $0x578] sm:$0xff]
    %v335 = vld [vmem:[#allocation2 + $0x580] sm:$0xff]
    %v336 = vld [vmem:[#allocation2 + $0x588] sm:$0xff]
    %v337 = vld [vmem:[#allocation2 + $0x590] sm:$0xff]
    %v338 = vld [vmem:[#allocation2 + $0x598] sm:$0xff]
    %v339 = vld [vmem:[#allocation2 + $0x5a0] sm:$0xff]
    %v340 = vld [vmem:[#allocation2 + $0x5a8] sm:$0xff]
    %v341 = vld [vmem:[#allocation2 + $0x5b0] sm:$0xff]
    %v342 = vld [vmem:[#allocation2 + $0x5b8] sm:$0xff]
    %v343 = vld [vmem:[#allocation2 + $0x5c0] sm:$0xff]
    %v344 = vld [vmem:[#allocation2 + $0x5c8] sm:$0xff]
    %v345 = vld [vmem:[#allocation2 + $0x5d0] sm:$0xff]
    %v346 = vld [vmem:[#allocation2 + $0x5d8] sm:$0xff]
    %v347 = vld [vmem:[#allocation2 + $0x5e0] sm:$0xff]
    %v348 = vld [vmem:[#allocation2 + $0x5e8] sm:$0xff]
    %v349 = vld [vmem:[#allocation2 + $0x5f0] sm:$0xff]
    %v350 = vld [vmem:[#allocation2 + $0x5f8] sm:$0xff]
    %v351 = vld [vmem:[#allocation2 + $0x600] sm:$0xff]
    %v352 = vld [vmem:[#allocation2 + $0x608] sm:$0xff]
    %v353 = vld [vmem:[#allocation2 + $0x610] sm:$0xff]
    %v354 = vld [vmem:[#allocation2 + $0x618] sm:$0xff]
    %v355 = vld [vmem:[#allocation2 + $0x620] sm:$0xff]
    %v356 = vld [vmem:[#allocation2 + $0x628] sm:$0xff]
    %v357 = vld [vmem:[#allocation2 + $0x630] sm:$0xff]
    %v358 = vld [vmem:[#allocation2 + $0x638] sm:$0xff]
    %v359 = vld [vmem:[#allocation2 + $0x640] sm:$0xff]
    %v360 = vld [vmem:[#allocation2 + $0x648] sm:$0xff]
    %v361 = vld [vmem:[#allocation2 + $0x650] sm:$0xff]
    %v362 = vld [vmem:[#allocation2 + $0x658] sm:$0xff]
    %v363 = vld [vmem:[#allocation2 + $0x660] sm:$0xff]
    %v364 = vld [vmem:[#allocation2 + $0x668] sm:$0xff]
    %v365 = vld [vmem:[#allocation2 + $0x670] sm:$0xff]
    %v366 = vld [vmem:[#allocation2 + $0x678] sm:$0xff]
    %v367 = vld [vmem:[#allocation2 + $0x680] sm:$0xff]
    %v368 = vld [vmem:[#allocation2 + $0x688] sm:$0xff]
    %v369 = vld [vmem:[#allocation2 + $0x690] sm:$0xff]
    %v370 = vld [vmem:[#allocation2 + $0x698] sm:$0xff]
    %v371 = vld [vmem:[#allocation2 + $0x6a0] sm:$0xff]
    %v372 = vld [vmem:[#allocation2 + $0x6a8] sm:$0xff]
    %v373 = vld [vmem:[#allocation2 + $0x6b0] sm:$0xff]
    %v374 = vld [vmem:[#allocation2 + $0x6b8] sm:$0xff]
    %v375 = vld [vmem:[#allocation2 + $0x6c0] sm:$0xff]
    %v376 = vld [vmem:[#allocation2 + $0x6c8] sm:$0xff]
    %v377 = vld [vmem:[#allocation2 + $0x6d0] sm:$0xff]
    %v378 = vld [vmem:[#allocation2 + $0x6d8] sm:$0xff]
    %v379 = vld [vmem:[#allocation2 + $0x6e0] sm:$0xff]
    %v380 = vld [vmem:[#allocation2 + $0x6e8] sm:$0xff]
    %v381 = vld [vmem:[#allocation2 + $0x6f0] sm:$0xff]
    %v382 = vld [vmem:[#allocation2 + $0x6f8] sm:$0xff]
    %v383 = vld [vmem:[#allocation2 + $0x700] sm:$0xff]
    %v384 = vld [vmem:[#allocation2 + $0x708] sm:$0xff]
    %v385 = vld [vmem:[#allocation2 + $0x710] sm:$0xff]
    %v386 = vld [vmem:[#allocation2 + $0x718] sm:$0xff]
    %v387 = vld [vmem:[#allocation2 + $0x720] sm:$0xff]
    %v388 = vld [vmem:[#allocation2 + $0x728] sm:$0xff]
    %v389 = vld [vmem:[#allocation2 + $0x730] sm:$0xff]
    %v390 = vld [vmem:[#allocation2 + $0x738] sm:$0xff]
    %v391 = vld [vmem:[#allocation2 + $0x740] sm:$0xff]
    %v392 = vld [vmem:[#allocation2 + $0x748] sm:$0xff]
    %v393 = vld [vmem:[#allocation2 + $0x750] sm:$0xff]
    %v394 = vld [vmem:[#allocation2 + $0x758] sm:$0xff]
    %v395 = vld [vmem:[#allocation2 + $0x760] sm:$0xff]
    %v396 = vld [vmem:[#allocation2 + $0x768] sm:$0xff]
    %v397 = vld [vmem:[#allocation2 + $0x770] sm:$0xff]
    %v398 = vld [vmem:[#allocation2 + $0x778] sm:$0xff]
    %v399 = vld [vmem:[#allocation2 + $0x780] sm:$0xff]
    %v400 = vld [vmem:[#allocation2 + $0x788] sm:$0xff]
    %v401 = vld [vmem:[#allocation2 + $0x790] sm:$0xff]
    %v402 = vld [vmem:[#allocation2 + $0x798] sm:$0xff]
    %v403 = vld [vmem:[#allocation2 + $0x7a0] sm:$0xff]
    %v404 = vld [vmem:[#allocation2 + $0x7a8] sm:$0xff]
    %v405 = vld [vmem:[#allocation2 + $0x7b0] sm:$0xff]
    %v406 = vld [vmem:[#allocation2 + $0x7b8] sm:$0xff]
    %v407 = vld [vmem:[#allocation2 + $0x7c0] sm:$0xff]
    %v408 = vld [vmem:[#allocation2 + $0x7c8] sm:$0xff]
    %v409 = vld [vmem:[#allocation2 + $0x7d0] sm:$0xff]
    %v410 = vld [vmem:[#allocation2 + $0x7d8] sm:$0xff]
    %v411 = vld [vmem:[#allocation2 + $0x7e0] sm:$0xff]
    %v412 = vld [vmem:[#allocation2 + $0x7e8] sm:$0xff]
    %v413 = vld [vmem:[#allocation2 + $0x7f0] sm:$0xff]
    %v414 = vld [vmem:[#allocation2 + $0x7f8] sm:$0xff]
    %v415 = vld [vmem:[#allocation2 + $0x800] sm:$0xff]
    %v416 = vld [vmem:[#allocation2 + $0x808] sm:$0xff]
    %v417 = vld [vmem:[#allocation2 + $0x810] sm:$0xff]
    %v418 = vld [vmem:[#allocation2 + $0x818] sm:$0xff]
    %v419 = vld [vmem:[#allocation2 + $0x820] sm:$0xff]
    %v420 = vld [vmem:[#allocation2 + $0x828] sm:$0xff]
    %v421 = vld [vmem:[#allocation2 + $0x830] sm:$0xff]
    %v422 = vld [vmem:[#allocation2 + $0x838] sm:$0xff]
    %v423 = vld [vmem:[#allocation2 + $0x840] sm:$0xff]
    %v424 = vld [vmem:[#allocation2 + $0x848] sm:$0xff]
    %v425 = vld [vmem:[#allocation2 + $0x850] sm:$0xff]
    %v426 = vld [vmem:[#allocation2 + $0x858] sm:$0xff]
    %v427 = vld [vmem:[#allocation2 + $0x860] sm:$0xff]
    %v428 = vld [vmem:[#allocation2 + $0x868] sm:$0xff]
    %v429 = vld [vmem:[#allocation2 + $0x870] sm:$0xff]
    %v430 = vld [vmem:[#allocation2 + $0x878] sm:$0xff]
    %v431 = vld [vmem:[#allocation2 + $0x880] sm:$0xff]
    %v432 = vld [vmem:[#allocation2 + $0x888] sm:$0xff]
    %v433 = vld [vmem:[#allocation2 + $0x890] sm:$0xff]
    %v434 = vld [vmem:[#allocation2 + $0x898] sm:$0xff]
    %v435 = vld [vmem:[#allocation2 + $0x8a0] sm:$0xff]
    %v436 = vld [vmem:[#allocation2 + $0x8a8] sm:$0xff]
    %v437 = vld [vmem:[#allocation2 + $0x8b0] sm:$0xff]
    %v438 = vld [vmem:[#allocation2 + $0x8b8] sm:$0xff]
    %v439 = vld [vmem:[#allocation2 + $0x8c0] sm:$0xff]
    %v440 = vld [vmem:[#allocation2 + $0x8c8] sm:$0xff]
    %v441 = vld [vmem:[#allocation2 + $0x8d0] sm:$0xff]
    %v442 = vld [vmem:[#allocation2 + $0x8d8] sm:$0xff]
    %v443 = vld [vmem:[#allocation2 + $0x8e0] sm:$0xff]
    %v444 = vld [vmem:[#allocation2 + $0x8e8] sm:$0xff]
    %v445 = vld [vmem:[#allocation2 + $0x8f0] sm:$0xff]
    %v446 = vld [vmem:[#allocation2 + $0x8f8] sm:$0xff]
    %v447 = vld [vmem:[#allocation2 + $0x900] sm:$0xff]
    %v448 = vld [vmem:[#allocation2 + $0x908] sm:$0xff]
    %v449 = vld [vmem:[#allocation2 + $0x910] sm:$0xff]
    %v450 = vld [vmem:[#allocation2 + $0x918] sm:$0xff]
    %v451 = vld [vmem:[#allocation2 + $0x920] sm:$0xff]
    %v452 = vld [vmem:[#allocation2 + $0x928] sm:$0xff]
    %v453 = vld [vmem:[#allocation2 + $0x930] sm:$0xff]
    %v454 = vld [vmem:[#allocation2 + $0x938] sm:$0xff]
    %v455 = vld [vmem:[#allocation2 + $0x940] sm:$0xff]
    %v456 = vld [vmem:[#allocation2 + $0x948] sm:$0xff]
    %v457 = vld [vmem:[#allocation2 + $0x950] sm:$0xff]
    %v458 = vld [vmem:[#allocation2 + $0x958] sm:$0xff]
    %v459 = vld [vmem:[#allocation2 + $0x960] sm:$0xff]
    %v460 = vld [vmem:[#allocation2 + $0x968] sm:$0xff]
    %v461 = vld [vmem:[#allocation2 + $0x970] sm:$0xff]
    %v462 = vld [vmem:[#allocation2 + $0x978] sm:$0xff]
    %v463 = vld [vmem:[#allocation2 + $0x980] sm:$0xff]
    %v464 = vld [vmem:[#allocation2 + $0x988] sm:$0xff]
    %v465 = vld [vmem:[#allocation2 + $0x990] sm:$0xff]
    %v466 = vld [vmem:[#allocation2 + $0x998] sm:$0xff]
    %v467 = vld [vmem:[#allocation2 + $0x9a0] sm:$0xff]
    %v468 = vld [vmem:[#allocation2 + $0x9a8] sm:$0xff]
    %v469 = vld [vmem:[#allocation2 + $0x9b0] sm:$0xff]
    %v470 = vld [vmem:[#allocation2 + $0x9b8] sm:$0xff]
    %v471 = vld [vmem:[#allocation2 + $0x9c0] sm:$0xff]
    %v472 = vld [vmem:[#allocation2 + $0x9c8] sm:$0xff]
    %v473 = vld [vmem:[#allocation2 + $0x9d0] sm:$0xff]
    %v474 = vld [vmem:[#allocation2 + $0x9d8] sm:$0xff]
    %v475 = vld [vmem:[#allocation2 + $0x9e0] sm:$0xff]
    %v476 = vld [vmem:[#allocation2 + $0x9e8] sm:$0xff]
    %v477 = vld [vmem:[#allocation2 + $0x9f0] sm:$0xff]
    %v478 = vld [vmem:[#allocation2 + $0x9f8] sm:$0xff]
    %v479 = vld [vmem:[#allocation2 + $0xa00] sm:$0xff]
    %v480 = vld [vmem:[#allocation2 + $0xa08] sm:$0xff]
    %v481 = vld [vmem:[#allocation2 + $0xa10] sm:$0xff]
    %v482 = vld [vmem:[#allocation2 + $0xa18] sm:$0xff]
    %v483 = vld [vmem:[#allocation2 + $0xa20] sm:$0xff]
    %v484 = vld [vmem:[#allocation2 + $0xa28] sm:$0xff]
    %v485 = vld [vmem:[#allocation2 + $0xa30] sm:$0xff]
    %v486 = vld [vmem:[#allocation2 + $0xa38] sm:$0xff]
    %v487 = vld [vmem:[#allocation2 + $0xa40] sm:$0xff]
    %v488 = vld [vmem:[#allocation2 + $0xa48] sm:$0xff]
    %v489 = vld [vmem:[#allocation2 + $0xa50] sm:$0xff]
    %v490 = vld [vmem:[#allocation2 + $0xa58] sm:$0xff]
    %v491 = vld [vmem:[#allocation2 + $0xa60] sm:$0xff]
    %v492 = vld [vmem:[#allocation2 + $0xa68] sm:$0xff]
    %v493 = vld [vmem:[#allocation2 + $0xa70] sm:$0xff]
    %v494 = vld [vmem:[#allocation2 + $0xa78] sm:$0xff]
    %v495 = vld [vmem:[#allocation2 + $0xa80] sm:$0xff]
    %v496 = vld [vmem:[#allocation2 + $0xa88] sm:$0xff]
    %v497 = vld [vmem:[#allocation2 + $0xa90] sm:$0xff]
    %v498 = vld [vmem:[#allocation2 + $0xa98] sm:$0xff]
    %v499 = vld [vmem:[#allocation2 + $0xaa0] sm:$0xff]
    %v500 = vld [vmem:[#allocation2 + $0xaa8] sm:$0xff]
    %v501 = vld [vmem:[#allocation2 + $0xab0] sm:$0xff]
    %v502 = vld [vmem:[#allocation2 + $0xab8] sm:$0xff]
    %v503 = vld [vmem:[#allocation2 + $0xac0] sm:$0xff]
    %v504 = vld [vmem:[#allocation2 + $0xac8] sm:$0xff]
    %v505 = vld [vmem:[#allocation2 + $0xad0] sm:$0xff]
    %v506 = vld [vmem:[#allocation2 + $0xad8] sm:$0xff]
    %v507 = vld [vmem:[#allocation2 + $0xae0] sm:$0xff]
    %v508 = vld [vmem:[#allocation2 + $0xae8] sm:$0xff]
    %v509 = vld [vmem:[#allocation2 + $0xaf0] sm:$0xff]
    %v510 = vld [vmem:[#allocation2 + $0xaf8] sm:$0xff]
    %v511 = vld [vmem:[#allocation2 + $0xb00] sm:$0xff]
    %v512 = vld [vmem:[#allocation2 + $0xb08] sm:$0xff]
    %v513 = vld [vmem:[#allocation2 + $0xb10] sm:$0xff]
    %v514 = vld [vmem:[#allocation2 + $0xb18] sm:$0xff]
    %v515 = vld [vmem:[#allocation2 + $0xb20] sm:$0xff]
    %v516 = vld [vmem:[#allocation2 + $0xb28] sm:$0xff]
    %v517 = vld [vmem:[#allocation2 + $0xb30] sm:$0xff]
    %v518 = vld [vmem:[#allocation2 + $0xb38] sm:$0xff]
    %v519 = vld [vmem:[#allocation2 + $0xb40] sm:$0xff]
    %v520 = vld [vmem:[#allocation2 + $0xb48] sm:$0xff]
    %v521 = vld [vmem:[#allocation2 + $0xb50] sm:$0xff]
    %v522 = vld [vmem:[#allocation2 + $0xb58] sm:$0xff]
    %v523 = vld [vmem:[#allocation2 + $0xb60] sm:$0xff]
    %v524 = vld [vmem:[#allocation2 + $0xb68] sm:$0xff]
    %v525 = vld [vmem:[#allocation2 + $0xb70] sm:$0xff]
    %v526 = vld [vmem:[#allocation2 + $0xb78] sm:$0xff]
    %v527 = vld [vmem:[#allocation2 + $0xb80] sm:$0xff]
    %v528 = vld [vmem:[#allocation2 + $0xb88] sm:$0xff]
    %v529 = vld [vmem:[#allocation2 + $0xb90] sm:$0xff]
    %v530 = vld [vmem:[#allocation2 + $0xb98] sm:$0xff]
    %v531 = vld [vmem:[#allocation2 + $0xba0] sm:$0xff]
    %v532 = vld [vmem:[#allocation2 + $0xba8] sm:$0xff]
    %v533 = vld [vmem:[#allocation2 + $0xbb0] sm:$0xff]
    %v534 = vld [vmem:[#allocation2 + $0xbb8] sm:$0xff]
    %v535 = vld [vmem:[#allocation2 + $0xbc0] sm:$0xff]
    %v536 = vld [vmem:[#allocation2 + $0xbc8] sm:$0xff]
    %v537 = vld [vmem:[#allocation2 + $0xbd0] sm:$0xff]
    %v538 = vld [vmem:[#allocation2 + $0xbd8] sm:$0xff]
    %v539 = vld [vmem:[#allocation2 + $0xbe0] sm:$0xff]
    %v540 = vld [vmem:[#allocation2 + $0xbe8] sm:$0xff]
    %v541 = vld [vmem:[#allocation2 + $0xbf0] sm:$0xff]
    %v542 = vld [vmem:[#allocation2 + $0xbf8] sm:$0xff]
    %v543 = vld [vmem:[#allocation2 + $0xc00] sm:$0xff]
    %v544 = vld [vmem:[#allocation2 + $0xc08] sm:$0xff]
    %v545 = vld [vmem:[#allocation2 + $0xc10] sm:$0xff]
    %v546 = vld [vmem:[#allocation2 + $0xc18] sm:$0xff]
    %v547 = vld [vmem:[#allocation2 + $0xc20] sm:$0xff]
    %v548 = vld [vmem:[#allocation2 + $0xc28] sm:$0xff]
    %v549 = vld [vmem:[#allocation2 + $0xc30] sm:$0xff]
    %v550 = vld [vmem:[#allocation2 + $0xc38] sm:$0xff]
    %v551 = vld [vmem:[#allocation2 + $0xc40] sm:$0xff]
    %v552 = vld [vmem:[#allocation2 + $0xc48] sm:$0xff]
    %v553 = vld [vmem:[#allocation2 + $0xc50] sm:$0xff]
    %v554 = vld [vmem:[#allocation2 + $0xc58] sm:$0xff]
    %v555 = vld [vmem:[#allocation2 + $0xc60] sm:$0xff]
    %v556 = vld [vmem:[#allocation2 + $0xc68] sm:$0xff]
    %v557 = vld [vmem:[#allocation2 + $0xc70] sm:$0xff]
    %v558 = vld [vmem:[#allocation2 + $0xc78] sm:$0xff]
    %v559 = vld [vmem:[#allocation2 + $0xc80] sm:$0xff]
    %v560 = vld [vmem:[#allocation2 + $0xc88] sm:$0xff]
    %v561 = vld [vmem:[#allocation2 + $0xc90] sm:$0xff]
    %v562 = vld [vmem:[#allocation2 + $0xc98] sm:$0xff]
    %v563 = vld [vmem:[#allocation2 + $0xca0] sm:$0xff]
    %v564 = vld [vmem:[#allocation2 + $0xca8] sm:$0xff]
    %v565 = vld [vmem:[#allocation2 + $0xcb0] sm:$0xff]
    %v566 = vld [vmem:[#allocation2 + $0xcb8] sm:$0xff]
    %v567 = vld [vmem:[#allocation2 + $0xcc0] sm:$0xff]
    %v568 = vld [vmem:[#allocation2 + $0xcc8] sm:$0xff]
    %v569 = vld [vmem:[#allocation2 + $0xcd0] sm:$0xff]
    %v570 = vld [vmem:[#allocation2 + $0xcd8] sm:$0xff]
    %v571 = vld [vmem:[#allocation2 + $0xce0] sm:$0xff]
    %v572 = vld [vmem:[#allocation2 + $0xce8] sm:$0xff]
    %v573 = vld [vmem:[#allocation2 + $0xcf0] sm:$0xff]
    %v574 = vld [vmem:[#allocation2 + $0xcf8] sm:$0xff]
    %v575 = vld [vmem:[#allocation2 + $0xd00] sm:$0xff]
    %v576 = vld [vmem:[#allocation2 + $0xd08] sm:$0xff]
    %v577 = vld [vmem:[#allocation2 + $0xd10] sm:$0xff]
    %v578 = vld [vmem:[#allocation2 + $0xd18] sm:$0xff]
    %v579 = vld [vmem:[#allocation2 + $0xd20] sm:$0xff]
    %v580 = vld [vmem:[#allocation2 + $0xd28] sm:$0xff]
    %v581 = vld [vmem:[#allocation2 + $0xd30] sm:$0xff]
    %v582 = vld [vmem:[#allocation2 + $0xd38] sm:$0xff]
    %v583 = vld [vmem:[#allocation2 + $0xd40] sm:$0xff]
    %v584 = vld [vmem:[#allocation2 + $0xd48] sm:$0xff]
    %v585 = vld [vmem:[#allocation2 + $0xd50] sm:$0xff]
    %v586 = vld [vmem:[#allocation2 + $0xd58] sm:$0xff]
    %v587 = vld [vmem:[#allocation2 + $0xd60] sm:$0xff]
    %v588 = vld [vmem:[#allocation2 + $0xd68] sm:$0xff]
    %v589 = vld [vmem:[#allocation2 + $0xd70] sm:$0xff]
    %v590 = vld [vmem:[#allocation2 + $0xd78] sm:$0xff]
    %v591 = vld [vmem:[#allocation2 + $0xd80] sm:$0xff]
    %v592 = vld [vmem:[#allocation2 + $0xd88] sm:$0xff]
    %v593 = vld [vmem:[#allocation2 + $0xd90] sm:$0xff]
    %v594 = vld [vmem:[#allocation2 + $0xd98] sm:$0xff]
    %v595 = vld [vmem:[#allocation2 + $0xda0] sm:$0xff]
    %v596 = vld [vmem:[#allocation2 + $0xda8] sm:$0xff]
    %v597 = vld [vmem:[#allocation2 + $0xdb0] sm:$0xff]
    %v598 = vld [vmem:[#allocation2 + $0xdb8] sm:$0xff]
    %v599 = vld [vmem:[#allocation2 + $0xdc0] sm:$0xff]
    %v600 = vld [vmem:[#allocation2 + $0xdc8] sm:$0xff]
    %v601 = vld [vmem:[#allocation2 + $0xdd0] sm:$0xff]
    %v602 = vld [vmem:[#allocation2 + $0xdd8] sm:$0xff]
    %v603 = vld [vmem:[#allocation2 + $0xde0] sm:$0xff]
    %v604 = vld [vmem:[#allocation2 + $0xde8] sm:$0xff]
    %v605 = vld [vmem:[#allocation2 + $0xdf0] sm:$0xff]
    %v606 = vld [vmem:[#allocation2 + $0xdf8] sm:$0xff]
    %v607 = vld [vmem:[#allocation2 + $0xe00] sm:$0xff]
    %v608 = vld [vmem:[#allocation2 + $0xe08] sm:$0xff]
    %v609 = vld [vmem:[#allocation2 + $0xe10] sm:$0xff]
    %v610 = vld [vmem:[#allocation2 + $0xe18] sm:$0xff]
    %v611 = vld [vmem:[#allocation2 + $0xe20] sm:$0xff]
    %v612 = vld [vmem:[#allocation2 + $0xe28] sm:$0xff]
    %v613 = vld [vmem:[#allocation2 + $0xe30] sm:$0xff]
    %v614 = vld [vmem:[#allocation2 + $0xe38] sm:$0xff]
    %v615 = vld [vmem:[#allocation2 + $0xe40] sm:$0xff]
    %v616 = vld [vmem:[#allocation2 + $0xe48] sm:$0xff]
    %v617 = vld [vmem:[#allocation2 + $0xe50] sm:$0xff]
    %v618 = vld [vmem:[#allocation2 + $0xe58] sm:$0xff]
    %v619 = vld [vmem:[#allocation2 + $0xe60] sm:$0xff]
    %v620 = vld [vmem:[#allocation2 + $0xe68] sm:$0xff]
    %v621 = vld [vmem:[#allocation2 + $0xe70] sm:$0xff]
    %v622 = vld [vmem:[#allocation2 + $0xe78] sm:$0xff]
    %v623 = vld [vmem:[#allocation2 + $0xe80] sm:$0xff]
    %v624 = vld [vmem:[#allocation2 + $0xe88] sm:$0xff]
    %v625 = vld [vmem:[#allocation2 + $0xe90] sm:$0xff]
    %v626 = vld [vmem:[#allocation2 + $0xe98] sm:$0xff]
    %v627 = vld [vmem:[#allocation2 + $0xea0] sm:$0xff]
    %v628 = vld [vmem:[#allocation2 + $0xea8] sm:$0xff]
    %v629 = vld [vmem:[#allocation2 + $0xeb0] sm:$0xff]
    %v630 = vld [vmem:[#allocation2 + $0xeb8] sm:$0xff]
    %v631 = vld [vmem:[#allocation2 + $0xec0] sm:$0xff]
    %v632 = vld [vmem:[#allocation2 + $0xec8] sm:$0xff]
    %v633 = vld [vmem:[#allocation2 + $0xed0] sm:$0xff]
    %v634 = vld [vmem:[#allocation2 + $0xed8] sm:$0xff]
    %v635 = vld [vmem:[#allocation2 + $0xee0] sm:$0xff]
    %v636 = vld [vmem:[#allocation2 + $0xee8] sm:$0xff]
    %v637 = vld [vmem:[#allocation2 + $0xef0] sm:$0xff]
    %v638 = vld [vmem:[#allocation2 + $0xef8] sm:$0xff]
    %v639 = vld [vmem:[#allocation2 + $0xf00] sm:$0xff]
    %v640 = vld [vmem:[#allocation2 + $0xf08] sm:$0xff]
    %v641 = vld [vmem:[#allocation2 + $0xf10] sm:$0xff]
    %v642 = vld [vmem:[#allocation2 + $0xf18] sm:$0xff]
    %v643 = vld [vmem:[#allocation2 + $0xf20] sm:$0xff]
    %v644 = vld [vmem:[#allocation2 + $0xf28] sm:$0xff]
    %v645 = vld [vmem:[#allocation2 + $0xf30] sm:$0xff]
    %v646 = vld [vmem:[#allocation2 + $0xf38] sm:$0xff]
    %v647 = vld [vmem:[#allocation2 + $0xf40] sm:$0xff]
    %v648 = vld [vmem:[#allocation2 + $0xf48] sm:$0xff]
    %v649 = vld [vmem:[#allocation2 + $0xf50] sm:$0xff]
    %v650 = vld [vmem:[#allocation2 + $0xf58] sm:$0xff]
    %v651 = vld [vmem:[#allocation2 + $0xf60] sm:$0xff]
    %v652 = vld [vmem:[#allocation2 + $0xf68] sm:$0xff]
    %v653 = vld [vmem:[#allocation2 + $0xf70] sm:$0xff]
    %v654 = vld [vmem:[#allocation2 + $0xf78] sm:$0xff]
    %v655 = vld [vmem:[#allocation2 + $0xf80] sm:$0xff]
    %v656 = vld [vmem:[#allocation2 + $0xf88] sm:$0xff]
    %v657 = vld [vmem:[#allocation2 + $0xf90] sm:$0xff]
    %v658 = vld [vmem:[#allocation2 + $0xf98] sm:$0xff]
    %v659 = vld [vmem:[#allocation2 + $0xfa0] sm:$0xff]
    %v660 = vld [vmem:[#allocation2 + $0xfa8] sm:$0xff]
    %v661 = vld [vmem:[#allocation2 + $0xfb0] sm:$0xff]
    %v662 = vld [vmem:[#allocation2 + $0xfb8] sm:$0xff]
    %v663 = vld [vmem:[#allocation2 + $0xfc0] sm:$0xff]
    %v664 = vld [vmem:[#allocation2 + $0xfc8] sm:$0xff]
    %v665 = vld [vmem:[#allocation2 + $0xfd0] sm:$0xff]
    %v666 = vld [vmem:[#allocation2 + $0xfd8] sm:$0xff]
    %v667 = vld [vmem:[#allocation2 + $0xfe0] sm:$0xff]
    %v668 = vld [vmem:[#allocation2 + $0xfe8] sm:$0xff]
    %v669 = vld [vmem:[#allocation2 + $0xff0] sm:$0xff]
    %v670 = vld [vmem:[#allocation2 + $0xff8] sm:$0xff]
    %v671 = vld [vmem:[#allocation2 + $0x1000] sm:$0xff]
    %v672 = vld [vmem:[#allocation2 + $0x1008] sm:$0xff]
    %v673 = vld [vmem:[#allocation2 + $0x1010] sm:$0xff]
    %v674 = vld [vmem:[#allocation2 + $0x1018] sm:$0xff]
    %v675 = vld [vmem:[#allocation2 + $0x1020] sm:$0xff]
    %v676 = vld [vmem:[#allocation2 + $0x1028] sm:$0xff]
    %v677 = vld [vmem:[#allocation2 + $0x1030] sm:$0xff]
    %v678 = vld [vmem:[#allocation2 + $0x1038] sm:$0xff]
    %v679 = vld [vmem:[#allocation2 + $0x1040] sm:$0xff]
    %v680 = vld [vmem:[#allocation2 + $0x1048] sm:$0xff]
    %v681 = vld [vmem:[#allocation2 + $0x1050] sm:$0xff]
    %v682 = vld [vmem:[#allocation2 + $0x1058] sm:$0xff]
    %v683 = vld [vmem:[#allocation2 + $0x1060] sm:$0xff]
    %v684 = vld [vmem:[#allocation2 + $0x1068] sm:$0xff]
    %v685 = vld [vmem:[#allocation2 + $0x1070] sm:$0xff]
    %v686 = vld [vmem:[#allocation2 + $0x1078] sm:$0xff]
    %v687 = vld [vmem:[#allocation2 + $0x1080] sm:$0xff]
    %v688 = vld [vmem:[#allocation2 + $0x1088] sm:$0xff]
    %v689 = vld [vmem:[#allocation2 + $0x1090] sm:$0xff]
    %v690 = vld [vmem:[#allocation2 + $0x1098] sm:$0xff]
    %v691 = vld [vmem:[#allocation2 + $0x10a0] sm:$0xff]
    %v692 = vld [vmem:[#allocation2 + $0x10a8] sm:$0xff]
    %v693 = vld [vmem:[#allocation2 + $0x10b0] sm:$0xff]
    %v694 = vld [vmem:[#allocation2 + $0x10b8] sm:$0xff]
    %v695 = vld [vmem:[#allocation2 + $0x10c0] sm:$0xff]
    %v696 = vld [vmem:[#allocation2 + $0x10c8] sm:$0xff]
    %v697 = vld [vmem:[#allocation2 + $0x10d0] sm:$0xff]
    %v698 = vld [vmem:[#allocation2 + $0x10d8] sm:$0xff]
    %v699 = vld [vmem:[#allocation2 + $0x10e0] sm:$0xff]
    %v700 = vld [vmem:[#allocation2 + $0x10e8] sm:$0xff]
    %v701 = vld [vmem:[#allocation2 + $0x10f0] sm:$0xff]
    %v702 = vld [vmem:[#allocation2 + $0x10f8] sm:$0xff]
    %v703 = vld [vmem:[#allocation2 + $0x1100] sm:$0xff]
    %v704 = vld [vmem:[#allocation2 + $0x1108] sm:$0xff]
    %v705 = vld [vmem:[#allocation2 + $0x1110] sm:$0xff]
    %v706 = vld [vmem:[#allocation2 + $0x1118] sm:$0xff]
    %v707 = vld [vmem:[#allocation2 + $0x1120] sm:$0xff]
    %v708 = vld [vmem:[#allocation2 + $0x1128] sm:$0xff]
    %v709 = vld [vmem:[#allocation2 + $0x1130] sm:$0xff]
    %v710 = vld [vmem:[#allocation2 + $0x1138] sm:$0xff]
    %v711 = vld [vmem:[#allocation2 + $0x1140] sm:$0xff]
    %v712 = vld [vmem:[#allocation2 + $0x1148] sm:$0xff]
    %v713 = vld [vmem:[#allocation2 + $0x1150] sm:$0xff]
    %v714 = vld [vmem:[#allocation2 + $0x1158] sm:$0xff]
    %v715 = vld [vmem:[#allocation2 + $0x1160] sm:$0xff]
    %v716 = vld [vmem:[#allocation2 + $0x1168] sm:$0xff]
    %v717 = vld [vmem:[#allocation2 + $0x1170] sm:$0xff]
    %v718 = vld [vmem:[#allocation2 + $0x1178] sm:$0xff]
    %v719 = vld [vmem:[#allocation2 + $0x1180] sm:$0xff]
    %v720 = vld [vmem:[#allocation2 + $0x1188] sm:$0xff]
    %v721 = vld [vmem:[#allocation2 + $0x1190] sm:$0xff]
    %v722 = vld [vmem:[#allocation2 + $0x1198] sm:$0xff]
    %v723 = vld [vmem:[#allocation2 + $0x11a0] sm:$0xff]
    %v724 = vld [vmem:[#allocation2 + $0x11a8] sm:$0xff]
    %v725 = vld [vmem:[#allocation2 + $0x11b0] sm:$0xff]
    %v726 = vld [vmem:[#allocation2 + $0x11b8] sm:$0xff]
    %v727 = vld [vmem:[#allocation2 + $0x11c0] sm:$0xff]
    %v728 = vld [vmem:[#allocation2 + $0x11c8] sm:$0xff]
    %v729 = vld [vmem:[#allocation2 + $0x11d0] sm:$0xff]
    %v730 = vld [vmem:[#allocation2 + $0x11d8] sm:$0xff]
    %v731 = vld [vmem:[#allocation2 + $0x11e0] sm:$0xff]
    %v732 = vld [vmem:[#allocation2 + $0x11e8] sm:$0xff]
    %v733 = vld [vmem:[#allocation2 + $0x11f0] sm:$0xff]
    %v734 = vld [vmem:[#allocation2 + $0x11f8] sm:$0xff]
    %v735 = vld [vmem:[#allocation4] sm:$0xff]
    %v737 = vperm.slane %v735, 0
    %v738 = vperm.slane %v735, 1
    %v739 = vperm.slane %v735, 2
    %v740 = vperm.slane %v735, 3
    %v741 = vperm.slane %v735, 4
    %v742 = vperm.slane %v735, 5
    %v743 = vperm.slane %v735, 6
    %v744 = vperm.slane %v735, 7
    %v763 = vunpack.c.l.b16 %v149
    %v764 = vunpack.c.h.b16 %v149
    %v765 = vunpack.c.l.b16 %v150
    %v766 = vunpack.c.h.b16 %v150
    %v767 = vunpack.c.l.b16 %v151
    %v768 = vunpack.c.h.b16 %v151
    %v769 = vunpack.c.l.b16 %v152
    %v770 = vunpack.c.h.b16 %v152
    %v771 = vunpack.c.l.b16 %v153
    %v772 = vunpack.c.l.b16 %v154
    %v773 = vunpack.c.h.b16 %v154
    %v774 = vunpack.c.l.b16 %v155
    %v775 = vunpack.c.h.b16 %v155
    %v776 = vunpack.c.l.b16 %v156
    %v777 = vunpack.c.h.b16 %v156
    %v778 = vunpack.c.l.b16 %v157
    %v779 = vunpack.c.h.b16 %v157
    %v780 = vunpack.c.l.b16 %v158
    %v781 = vpack.c.b16 %v772, %v763
    %v782 = vpack.c.b16 %v773, %v764
    %v783 = vpack.c.b16 %v774, %v765
    %v784 = vpack.c.b16 %v775, %v766
    %v785 = vpack.c.b16 %v776, %v767
    %v786 = vpack.c.b16 %v777, %v768
    %v787 = vpack.c.b16 %v778, %v769
    %v788 = vpack.c.b16 %v779, %v770
    %v789 = vpack.c.b16 %v780, %v771
    %v1375 = vunpack.c.l.b16 %v159
    %v1376 = vunpack.c.h.b16 %v159
    %v1377 = vunpack.c.l.b16 %v160
    %v1378 = vunpack.c.h.b16 %v160
    %v1379 = vunpack.c.l.b16 %v161
    %v1380 = vunpack.c.h.b16 %v161
    %v1381 = vunpack.c.l.b16 %v162
    %v1382 = vunpack.c.h.b16 %v162
    %v1383 = vunpack.c.l.b16 %v163
    %v1384 = vunpack.c.h.b16 %v163
    %v1385 = vunpack.c.l.b16 %v164
    %v1386 = vunpack.c.h.b16 %v164
    %v1387 = vunpack.c.l.b16 %v165
    %v1388 = vunpack.c.h.b16 %v165
    %v1389 = vunpack.c.l.b16 %v166
    %v1390 = vunpack.c.h.b16 %v166
    %v1391 = vunpack.c.l.b16 %v167
    %v1392 = vunpack.c.h.b16 %v167
    %v1393 = vunpack.c.l.b16 %v168
    %v1394 = vunpack.c.h.b16 %v168
    %v1395 = vunpack.c.l.b16 %v169
    %v1396 = vunpack.c.h.b16 %v169
    %v1397 = vunpack.c.l.b16 %v170
    %v1398 = vunpack.c.h.b16 %v170
    %v1399 = vunpack.c.l.b16 %v171
    %v1400 = vunpack.c.h.b16 %v171
    %v1401 = vunpack.c.l.b16 %v172
    %v1402 = vunpack.c.h.b16 %v172
    %v1403 = vunpack.c.l.b16 %v173
    %v1404 = vunpack.c.h.b16 %v173
    %v1405 = vunpack.c.l.b16 %v174
    %v1406 = vunpack.c.h.b16 %v174
    %v1407 = vunpack.c.l.b16 %v175
    %v1408 = vunpack.c.h.b16 %v175
    %v1409 = vunpack.c.l.b16 %v176
    %v1410 = vunpack.c.h.b16 %v176
    %v1411 = vunpack.c.l.b16 %v177
    %v1412 = vunpack.c.h.b16 %v177
    %v1413 = vunpack.c.l.b16 %v178
    %v1414 = vunpack.c.h.b16 %v178
    %v1415 = vunpack.c.l.b16 %v179
    %v1416 = vunpack.c.h.b16 %v179
    %v1417 = vunpack.c.l.b16 %v180
    %v1418 = vunpack.c.h.b16 %v180
    %v1419 = vunpack.c.l.b16 %v181
    %v1420 = vunpack.c.h.b16 %v181
    %v1421 = vunpack.c.l.b16 %v182
    %v1422 = vunpack.c.h.b16 %v182
    %v1423 = vunpack.c.l.b16 %v183
    %v1424 = vunpack.c.h.b16 %v183
    %v1425 = vunpack.c.l.b16 %v184
    %v1426 = vunpack.c.h.b16 %v184
    %v1427 = vunpack.c.l.b16 %v185
    %v1428 = vunpack.c.h.b16 %v185
    %v1429 = vunpack.c.l.b16 %v186
    %v1430 = vunpack.c.h.b16 %v186
    %v1431 = vunpack.c.l.b16 %v187
    %v1432 = vunpack.c.h.b16 %v187
    %v1433 = vunpack.c.l.b16 %v188
    %v1434 = vunpack.c.h.b16 %v188
    %v1435 = vunpack.c.l.b16 %v189
    %v1436 = vunpack.c.h.b16 %v189
    %v1437 = vunpack.c.l.b16 %v190
    %v1438 = vunpack.c.h.b16 %v190
    %v1439 = vunpack.c.l.b16 %v191
    %v1440 = vunpack.c.h.b16 %v191
    %v1441 = vunpack.c.l.b16 %v192
    %v1442 = vunpack.c.h.b16 %v192
    %v1443 = vunpack.c.l.b16 %v193
    %v1444 = vunpack.c.h.b16 %v193
    %v1445 = vunpack.c.l.b16 %v194
    %v1446 = vunpack.c.h.b16 %v194
    %v1447 = vunpack.c.l.b16 %v195
    %v1448 = vunpack.c.h.b16 %v195
    %v1449 = vunpack.c.l.b16 %v196
    %v1450 = vunpack.c.h.b16 %v196
    %v1451 = vunpack.c.l.b16 %v197
    %v1452 = vunpack.c.h.b16 %v197
    %v1453 = vunpack.c.l.b16 %v198
    %v1454 = vunpack.c.h.b16 %v198
    %v1455 = vunpack.c.l.b16 %v199
    %v1456 = vunpack.c.h.b16 %v199
    %v1457 = vunpack.c.l.b16 %v200
    %v1458 = vunpack.c.h.b16 %v200
    %v1459 = vunpack.c.l.b16 %v201
    %v1460 = vunpack.c.h.b16 %v201
    %v1461 = vunpack.c.l.b16 %v202
    %v1462 = vunpack.c.h.b16 %v202
    %v1463 = vunpack.c.l.b16 %v203
    %v1464 = vunpack.c.h.b16 %v203
    %v1465 = vunpack.c.l.b16 %v204
    %v1466 = vunpack.c.h.b16 %v204
    %v1467 = vunpack.c.l.b16 %v205
    %v1468 = vunpack.c.h.b16 %v205
    %v1469 = vunpack.c.l.b16 %v206
    %v1470 = vunpack.c.h.b16 %v206
    %v1471 = vunpack.c.l.b16 %v207
    %v1472 = vunpack.c.h.b16 %v207
    %v1473 = vunpack.c.l.b16 %v208
    %v1474 = vunpack.c.h.b16 %v208
    %v1475 = vunpack.c.l.b16 %v209
    %v1476 = vunpack.c.h.b16 %v209
    %v1477 = vunpack.c.l.b16 %v210
    %v1478 = vunpack.c.h.b16 %v210
    %v1479 = vunpack.c.l.b16 %v211
    %v1480 = vunpack.c.h.b16 %v211
    %v1481 = vunpack.c.l.b16 %v212
    %v1482 = vunpack.c.h.b16 %v212
    %v1483 = vunpack.c.l.b16 %v213
    %v1484 = vunpack.c.h.b16 %v213
    %v1485 = vunpack.c.l.b16 %v214
    %v1486 = vunpack.c.h.b16 %v214
    %v1487 = vunpack.c.l.b16 %v215
    %v1488 = vunpack.c.h.b16 %v215
    %v1489 = vunpack.c.l.b16 %v216
    %v1490 = vunpack.c.h.b16 %v216
    %v1491 = vunpack.c.l.b16 %v217
    %v1492 = vunpack.c.h.b16 %v217
    %v1493 = vunpack.c.l.b16 %v218
    %v1494 = vunpack.c.h.b16 %v218
    %v1495 = vunpack.c.l.b16 %v219
    %v1496 = vunpack.c.h.b16 %v219
    %v1497 = vunpack.c.l.b16 %v220
    %v1498 = vunpack.c.h.b16 %v220
    %v1499 = vunpack.c.l.b16 %v221
    %v1500 = vunpack.c.h.b16 %v221
    %v1501 = vunpack.c.l.b16 %v222
    %v1502 = vunpack.c.h.b16 %v222
    %v1503 = vunpack.c.l.b16 %v223
    %v1504 = vunpack.c.h.b16 %v223
    %v1505 = vunpack.c.l.b16 %v224
    %v1506 = vunpack.c.h.b16 %v224
    %v1507 = vunpack.c.l.b16 %v225
    %v1508 = vunpack.c.h.b16 %v225
    %v1509 = vunpack.c.l.b16 %v226
    %v1510 = vunpack.c.h.b16 %v226
    %v1511 = vunpack.c.l.b16 %v227
    %v1512 = vunpack.c.h.b16 %v227
    %v1513 = vunpack.c.l.b16 %v228
    %v1514 = vunpack.c.h.b16 %v228
    %v1515 = vunpack.c.l.b16 %v229
    %v1516 = vunpack.c.h.b16 %v229
    %v1517 = vunpack.c.l.b16 %v230
    %v1518 = vunpack.c.h.b16 %v230
    %v1519 = vunpack.c.l.b16 %v231
    %v1520 = vunpack.c.h.b16 %v231
    %v1521 = vunpack.c.l.b16 %v232
    %v1522 = vunpack.c.h.b16 %v232
    %v1523 = vunpack.c.l.b16 %v233
    %v1524 = vunpack.c.h.b16 %v233
    %v1525 = vunpack.c.l.b16 %v234
    %v1526 = vunpack.c.h.b16 %v234
    %v1527 = vunpack.c.l.b16 %v235
    %v1528 = vunpack.c.h.b16 %v235
    %v1529 = vunpack.c.l.b16 %v236
    %v1530 = vunpack.c.h.b16 %v236
    %v1531 = vunpack.c.l.b16 %v237
    %v1532 = vunpack.c.h.b16 %v237
    %v1533 = vunpack.c.l.b16 %v238
    %v1534 = vunpack.c.h.b16 %v238
    %v1535 = vunpack.c.l.b16 %v239
    %v1536 = vunpack.c.h.b16 %v239
    %v1537 = vunpack.c.l.b16 %v240
    %v1538 = vunpack.c.h.b16 %v240
    %v1539 = vunpack.c.l.b16 %v241
    %v1540 = vunpack.c.h.b16 %v241
    %v1541 = vunpack.c.l.b16 %v242
    %v1542 = vunpack.c.h.b16 %v242
    %v1543 = vunpack.c.l.b16 %v243
    %v1544 = vunpack.c.h.b16 %v243
    %v1545 = vunpack.c.l.b16 %v244
    %v1546 = vunpack.c.h.b16 %v244
    %v1547 = vunpack.c.l.b16 %v245
    %v1548 = vunpack.c.h.b16 %v245
    %v1549 = vunpack.c.l.b16 %v246
    %v1550 = vunpack.c.h.b16 %v246
    %v1551 = vunpack.c.l.b16 %v247
    %v1552 = vunpack.c.h.b16 %v247
    %v1553 = vunpack.c.l.b16 %v248
    %v1554 = vunpack.c.h.b16 %v248
    %v1555 = vunpack.c.l.b16 %v249
    %v1556 = vunpack.c.h.b16 %v249
    %v1557 = vunpack.c.l.b16 %v250
    %v1558 = vunpack.c.h.b16 %v250
    %v1559 = vunpack.c.l.b16 %v251
    %v1560 = vunpack.c.h.b16 %v251
    %v1561 = vunpack.c.l.b16 %v252
    %v1562 = vunpack.c.h.b16 %v252
    %v1563 = vunpack.c.l.b16 %v253
    %v1564 = vunpack.c.h.b16 %v253
    %v1565 = vunpack.c.l.b16 %v254
    %v1566 = vunpack.c.h.b16 %v254
    %v1567 = vunpack.c.l.b16 %v255
    %v1568 = vunpack.c.h.b16 %v255
    %v1569 = vunpack.c.l.b16 %v256
    %v1570 = vunpack.c.h.b16 %v256
    %v1571 = vunpack.c.l.b16 %v257
    %v1572 = vunpack.c.h.b16 %v257
    %v1573 = vunpack.c.l.b16 %v258
    %v1574 = vunpack.c.h.b16 %v258
    %v1575 = vunpack.c.l.b16 %v259
    %v1576 = vunpack.c.h.b16 %v259
    %v1577 = vunpack.c.l.b16 %v260
    %v1578 = vunpack.c.h.b16 %v260
    %v1579 = vunpack.c.l.b16 %v261
    %v1580 = vunpack.c.h.b16 %v261
    %v1581 = vunpack.c.l.b16 %v262
    %v1582 = vunpack.c.h.b16 %v262
    %v1583 = vunpack.c.l.b16 %v263
    %v1584 = vunpack.c.h.b16 %v263
    %v1585 = vunpack.c.l.b16 %v264
    %v1586 = vunpack.c.h.b16 %v264
    %v1587 = vunpack.c.l.b16 %v265
    %v1588 = vunpack.c.h.b16 %v265
    %v1589 = vunpack.c.l.b16 %v266
    %v1590 = vunpack.c.h.b16 %v266
    %v1591 = vunpack.c.l.b16 %v267
    %v1592 = vunpack.c.h.b16 %v267
    %v1593 = vunpack.c.l.b16 %v268
    %v1594 = vunpack.c.h.b16 %v268
    %v1595 = vunpack.c.l.b16 %v269
    %v1596 = vunpack.c.h.b16 %v269
    %v1597 = vunpack.c.l.b16 %v270
    %v1598 = vunpack.c.h.b16 %v270
    %v1599 = vunpack.c.l.b16 %v271
    %v1600 = vunpack.c.h.b16 %v271
    %v1601 = vunpack.c.l.b16 %v272
    %v1602 = vunpack.c.h.b16 %v272
    %v1603 = vunpack.c.l.b16 %v273
    %v1604 = vunpack.c.h.b16 %v273
    %v1605 = vunpack.c.l.b16 %v274
    %v1606 = vunpack.c.h.b16 %v274
    %v1607 = vunpack.c.l.b16 %v275
    %v1608 = vunpack.c.h.b16 %v275
    %v1609 = vunpack.c.l.b16 %v276
    %v1610 = vunpack.c.h.b16 %v276
    %v1611 = vunpack.c.l.b16 %v277
    %v1612 = vunpack.c.h.b16 %v277
    %v1613 = vunpack.c.l.b16 %v278
    %v1614 = vunpack.c.h.b16 %v278
    %v1615 = vunpack.c.l.b16 %v279
    %v1616 = vunpack.c.h.b16 %v279
    %v1617 = vunpack.c.l.b16 %v280
    %v1618 = vunpack.c.h.b16 %v280
    %v1619 = vunpack.c.l.b16 %v281
    %v1620 = vunpack.c.h.b16 %v281
    %v1621 = vunpack.c.l.b16 %v282
    %v1622 = vunpack.c.h.b16 %v282
    %v1623 = vunpack.c.l.b16 %v283
    %v1624 = vunpack.c.h.b16 %v283
    %v1625 = vunpack.c.l.b16 %v284
    %v1626 = vunpack.c.h.b16 %v284
    %v1627 = vunpack.c.l.b16 %v285
    %v1628 = vunpack.c.h.b16 %v285
    %v1629 = vunpack.c.l.b16 %v286
    %v1630 = vunpack.c.h.b16 %v286
    %v1631 = vunpack.c.l.b16 %v287
    %v1632 = vunpack.c.h.b16 %v287
    %v1633 = vunpack.c.l.b16 %v288
    %v1634 = vunpack.c.h.b16 %v288
    %v1635 = vunpack.c.l.b16 %v289
    %v1636 = vunpack.c.h.b16 %v289
    %v1637 = vunpack.c.l.b16 %v290
    %v1638 = vunpack.c.h.b16 %v290
    %v1639 = vunpack.c.l.b16 %v291
    %v1640 = vunpack.c.h.b16 %v291
    %v1641 = vunpack.c.l.b16 %v292
    %v1642 = vunpack.c.h.b16 %v292
    %v1643 = vunpack.c.l.b16 %v293
    %v1644 = vunpack.c.h.b16 %v293
    %v1645 = vunpack.c.l.b16 %v294
    %v1646 = vunpack.c.h.b16 %v294
    %v1647 = vunpack.c.l.b16 %v295
    %v1648 = vunpack.c.h.b16 %v295
    %v1649 = vunpack.c.l.b16 %v296
    %v1650 = vunpack.c.h.b16 %v296
    %v1651 = vunpack.c.l.b16 %v297
    %v1652 = vunpack.c.h.b16 %v297
    %v1653 = vunpack.c.l.b16 %v298
    %v1654 = vunpack.c.h.b16 %v298
    %v1655 = vunpack.c.l.b16 %v299
    %v1656 = vunpack.c.h.b16 %v299
    %v1657 = vunpack.c.l.b16 %v300
    %v1658 = vunpack.c.h.b16 %v300
    %v1659 = vunpack.c.l.b16 %v301
    %v1660 = vunpack.c.h.b16 %v301
    %v1661 = vunpack.c.l.b16 %v302
    %v1662 = vunpack.c.h.b16 %v302
    %v1663 = vunpack.c.l.b16 %v303
    %v1664 = vunpack.c.h.b16 %v303
    %v1665 = vunpack.c.l.b16 %v304
    %v1666 = vunpack.c.h.b16 %v304
    %v1667 = vunpack.c.l.b16 %v305
    %v1668 = vunpack.c.h.b16 %v305
    %v1669 = vunpack.c.l.b16 %v306
    %v1670 = vunpack.c.h.b16 %v306
    %v1671 = vunpack.c.l.b16 %v307
    %v1672 = vunpack.c.h.b16 %v307
    %v1673 = vunpack.c.l.b16 %v308
    %v1674 = vunpack.c.h.b16 %v308
    %v1675 = vunpack.c.l.b16 %v309
    %v1676 = vunpack.c.h.b16 %v309
    %v1677 = vunpack.c.l.b16 %v310
    %v1678 = vunpack.c.h.b16 %v310
    %v1679 = vunpack.c.l.b16 %v311
    %v1680 = vunpack.c.h.b16 %v311
    %v1681 = vunpack.c.l.b16 %v312
    %v1682 = vunpack.c.h.b16 %v312
    %v1683 = vunpack.c.l.b16 %v313
    %v1684 = vunpack.c.h.b16 %v313
    %v1685 = vunpack.c.l.b16 %v314
    %v1686 = vunpack.c.h.b16 %v314
    %v1687 = vunpack.c.l.b16 %v315
    %v1688 = vunpack.c.h.b16 %v315
    %v1689 = vunpack.c.l.b16 %v316
    %v1690 = vunpack.c.h.b16 %v316
    %v1691 = vunpack.c.l.b16 %v317
    %v1692 = vunpack.c.h.b16 %v317
    %v1693 = vunpack.c.l.b16 %v318
    %v1694 = vunpack.c.h.b16 %v318
    %v1695 = vunpack.c.l.b16 %v319
    %v1696 = vunpack.c.h.b16 %v319
    %v1697 = vunpack.c.l.b16 %v320
    %v1698 = vunpack.c.h.b16 %v320
    %v1699 = vunpack.c.l.b16 %v321
    %v1700 = vunpack.c.h.b16 %v321
    %v1701 = vunpack.c.l.b16 %v322
    %v1702 = vunpack.c.h.b16 %v322
    %v1703 = vunpack.c.l.b16 %v323
    %v1704 = vunpack.c.h.b16 %v323
    %v1705 = vunpack.c.l.b16 %v324
    %v1706 = vunpack.c.h.b16 %v324
    %v1707 = vunpack.c.l.b16 %v325
    %v1708 = vunpack.c.h.b16 %v325
    %v1709 = vunpack.c.l.b16 %v326
    %v1710 = vunpack.c.h.b16 %v326
    %v1711 = vunpack.c.l.b16 %v327
    %v1712 = vunpack.c.h.b16 %v327
    %v1713 = vunpack.c.l.b16 %v328
    %v1714 = vunpack.c.h.b16 %v328
    %v1715 = vunpack.c.l.b16 %v329
    %v1716 = vunpack.c.h.b16 %v329
    %v1717 = vunpack.c.l.b16 %v330
    %v1718 = vunpack.c.h.b16 %v330
    %v1719 = vunpack.c.l.b16 %v331
    %v1720 = vunpack.c.h.b16 %v331
    %v1721 = vunpack.c.l.b16 %v332
    %v1722 = vunpack.c.h.b16 %v332
    %v1723 = vunpack.c.l.b16 %v333
    %v1724 = vunpack.c.h.b16 %v333
    %v1725 = vunpack.c.l.b16 %v334
    %v1726 = vunpack.c.h.b16 %v334
    %v1727 = vunpack.c.l.b16 %v335
    %v1728 = vunpack.c.h.b16 %v335
    %v1729 = vunpack.c.l.b16 %v336
    %v1730 = vunpack.c.h.b16 %v336
    %v1731 = vunpack.c.l.b16 %v337
    %v1732 = vunpack.c.h.b16 %v337
    %v1733 = vunpack.c.l.b16 %v338
    %v1734 = vunpack.c.h.b16 %v338
    %v1735 = vunpack.c.l.b16 %v339
    %v1736 = vunpack.c.h.b16 %v339
    %v1737 = vunpack.c.l.b16 %v340
    %v1738 = vunpack.c.h.b16 %v340
    %v1739 = vunpack.c.l.b16 %v341
    %v1740 = vunpack.c.h.b16 %v341
    %v1741 = vunpack.c.l.b16 %v342
    %v1742 = vunpack.c.h.b16 %v342
    %v1743 = vunpack.c.l.b16 %v343
    %v1744 = vunpack.c.h.b16 %v343
    %v1745 = vunpack.c.l.b16 %v344
    %v1746 = vunpack.c.h.b16 %v344
    %v1747 = vunpack.c.l.b16 %v345
    %v1748 = vunpack.c.h.b16 %v345
    %v1749 = vunpack.c.l.b16 %v346
    %v1750 = vunpack.c.h.b16 %v346
    %v1751 = vunpack.c.l.b16 %v347
    %v1752 = vunpack.c.h.b16 %v347
    %v1753 = vunpack.c.l.b16 %v348
    %v1754 = vunpack.c.h.b16 %v348
    %v1755 = vunpack.c.l.b16 %v349
    %v1756 = vunpack.c.h.b16 %v349
    %v1757 = vunpack.c.l.b16 %v350
    %v1758 = vunpack.c.h.b16 %v350
    %v1759 = vunpack.c.l.b16 %v351
    %v1760 = vunpack.c.h.b16 %v351
    %v1761 = vunpack.c.l.b16 %v352
    %v1762 = vunpack.c.h.b16 %v352
    %v1763 = vunpack.c.l.b16 %v353
    %v1764 = vunpack.c.h.b16 %v353
    %v1765 = vunpack.c.l.b16 %v354
    %v1766 = vunpack.c.h.b16 %v354
    %v1767 = vunpack.c.l.b16 %v355
    %v1768 = vunpack.c.h.b16 %v355
    %v1769 = vunpack.c.l.b16 %v356
    %v1770 = vunpack.c.h.b16 %v356
    %v1771 = vunpack.c.l.b16 %v357
    %v1772 = vunpack.c.h.b16 %v357
    %v1773 = vunpack.c.l.b16 %v358
    %v1774 = vunpack.c.h.b16 %v358
    %v1775 = vunpack.c.l.b16 %v359
    %v1776 = vunpack.c.h.b16 %v359
    %v1777 = vunpack.c.l.b16 %v360
    %v1778 = vunpack.c.h.b16 %v360
    %v1779 = vunpack.c.l.b16 %v361
    %v1780 = vunpack.c.h.b16 %v361
    %v1781 = vunpack.c.l.b16 %v362
    %v1782 = vunpack.c.h.b16 %v362
    %v1783 = vunpack.c.l.b16 %v363
    %v1784 = vunpack.c.h.b16 %v363
    %v1785 = vunpack.c.l.b16 %v364
    %v1786 = vunpack.c.h.b16 %v364
    %v1787 = vunpack.c.l.b16 %v365
    %v1788 = vunpack.c.h.b16 %v365
    %v1789 = vunpack.c.l.b16 %v366
    %v1790 = vunpack.c.h.b16 %v366
    %v1791 = vunpack.c.l.b16 %v367
    %v1792 = vunpack.c.h.b16 %v367
    %v1793 = vunpack.c.l.b16 %v368
    %v1794 = vunpack.c.h.b16 %v368
    %v1795 = vunpack.c.l.b16 %v369
    %v1796 = vunpack.c.h.b16 %v369
    %v1797 = vunpack.c.l.b16 %v370
    %v1798 = vunpack.c.h.b16 %v370
    %v1799 = vunpack.c.l.b16 %v371
    %v1800 = vunpack.c.h.b16 %v371
    %v1801 = vunpack.c.l.b16 %v372
    %v1802 = vunpack.c.h.b16 %v372
    %v1803 = vunpack.c.l.b16 %v373
    %v1804 = vunpack.c.h.b16 %v373
    %v1805 = vunpack.c.l.b16 %v374
    %v1806 = vunpack.c.h.b16 %v374
    %v1807 = vunpack.c.l.b16 %v375
    %v1808 = vunpack.c.h.b16 %v375
    %v1809 = vunpack.c.l.b16 %v376
    %v1810 = vunpack.c.h.b16 %v376
    %v1811 = vunpack.c.l.b16 %v377
    %v1812 = vunpack.c.h.b16 %v377
    %v1813 = vunpack.c.l.b16 %v378
    %v1814 = vunpack.c.h.b16 %v378
    %v1815 = vunpack.c.l.b16 %v379
    %v1816 = vunpack.c.h.b16 %v379
    %v1817 = vunpack.c.l.b16 %v380
    %v1818 = vunpack.c.h.b16 %v380
    %v1819 = vunpack.c.l.b16 %v381
    %v1820 = vunpack.c.h.b16 %v381
    %v1821 = vunpack.c.l.b16 %v382
    %v1822 = vunpack.c.h.b16 %v382
    %v1823 = vunpack.c.l.b16 %v383
    %v1824 = vunpack.c.h.b16 %v383
    %v1825 = vunpack.c.l.b16 %v384
    %v1826 = vunpack.c.h.b16 %v384
    %v1827 = vunpack.c.l.b16 %v385
    %v1828 = vunpack.c.h.b16 %v385
    %v1829 = vunpack.c.l.b16 %v386
    %v1830 = vunpack.c.h.b16 %v386
    %v1831 = vunpack.c.l.b16 %v387
    %v1832 = vunpack.c.h.b16 %v387
    %v1833 = vunpack.c.l.b16 %v388
    %v1834 = vunpack.c.h.b16 %v388
    %v1835 = vunpack.c.l.b16 %v389
    %v1836 = vunpack.c.h.b16 %v389
    %v1837 = vunpack.c.l.b16 %v390
    %v1838 = vunpack.c.h.b16 %v390
    %v1839 = vunpack.c.l.b16 %v391
    %v1840 = vunpack.c.h.b16 %v391
    %v1841 = vunpack.c.l.b16 %v392
    %v1842 = vunpack.c.h.b16 %v392
    %v1843 = vunpack.c.l.b16 %v393
    %v1844 = vunpack.c.h.b16 %v393
    %v1845 = vunpack.c.l.b16 %v394
    %v1846 = vunpack.c.h.b16 %v394
    %v1847 = vunpack.c.l.b16 %v395
    %v1848 = vunpack.c.h.b16 %v395
    %v1849 = vunpack.c.l.b16 %v396
    %v1850 = vunpack.c.h.b16 %v396
    %v1851 = vunpack.c.l.b16 %v397
    %v1852 = vunpack.c.h.b16 %v397
    %v1853 = vunpack.c.l.b16 %v398
    %v1854 = vunpack.c.h.b16 %v398
    %v1855 = vunpack.c.l.b16 %v399
    %v1856 = vunpack.c.h.b16 %v399
    %v1857 = vunpack.c.l.b16 %v400
    %v1858 = vunpack.c.h.b16 %v400
    %v1859 = vunpack.c.l.b16 %v401
    %v1860 = vunpack.c.h.b16 %v401
    %v1861 = vunpack.c.l.b16 %v402
    %v1862 = vunpack.c.h.b16 %v402
    %v1863 = vunpack.c.l.b16 %v403
    %v1864 = vunpack.c.h.b16 %v403
    %v1865 = vunpack.c.l.b16 %v404
    %v1866 = vunpack.c.h.b16 %v404
    %v1867 = vunpack.c.l.b16 %v405
    %v1868 = vunpack.c.h.b16 %v405
    %v1869 = vunpack.c.l.b16 %v406
    %v1870 = vunpack.c.h.b16 %v406
    %v1871 = vunpack.c.l.b16 %v407
    %v1872 = vunpack.c.h.b16 %v407
    %v1873 = vunpack.c.l.b16 %v408
    %v1874 = vunpack.c.h.b16 %v408
    %v1875 = vunpack.c.l.b16 %v409
    %v1876 = vunpack.c.h.b16 %v409
    %v1877 = vunpack.c.l.b16 %v410
    %v1878 = vunpack.c.h.b16 %v410
    %v1879 = vunpack.c.l.b16 %v411
    %v1880 = vunpack.c.h.b16 %v411
    %v1881 = vunpack.c.l.b16 %v412
    %v1882 = vunpack.c.h.b16 %v412
    %v1883 = vunpack.c.l.b16 %v413
    %v1884 = vunpack.c.h.b16 %v413
    %v1885 = vunpack.c.l.b16 %v414
    %v1886 = vunpack.c.h.b16 %v414
    %v1887 = vunpack.c.l.b16 %v415
    %v1888 = vunpack.c.h.b16 %v415
    %v1889 = vunpack.c.l.b16 %v416
    %v1890 = vunpack.c.h.b16 %v416
    %v1891 = vunpack.c.l.b16 %v417
    %v1892 = vunpack.c.h.b16 %v417
    %v1893 = vunpack.c.l.b16 %v418
    %v1894 = vunpack.c.h.b16 %v418
    %v1895 = vunpack.c.l.b16 %v419
    %v1896 = vunpack.c.h.b16 %v419
    %v1897 = vunpack.c.l.b16 %v420
    %v1898 = vunpack.c.h.b16 %v420
    %v1899 = vunpack.c.l.b16 %v421
    %v1900 = vunpack.c.h.b16 %v421
    %v1901 = vunpack.c.l.b16 %v422
    %v1902 = vunpack.c.h.b16 %v422
    %v1903 = vunpack.c.l.b16 %v423
    %v1904 = vunpack.c.h.b16 %v423
    %v1905 = vunpack.c.l.b16 %v424
    %v1906 = vunpack.c.h.b16 %v424
    %v1907 = vunpack.c.l.b16 %v425
    %v1908 = vunpack.c.h.b16 %v425
    %v1909 = vunpack.c.l.b16 %v426
    %v1910 = vunpack.c.h.b16 %v426
    %v1911 = vunpack.c.l.b16 %v427
    %v1912 = vunpack.c.h.b16 %v427
    %v1913 = vunpack.c.l.b16 %v428
    %v1914 = vunpack.c.h.b16 %v428
    %v1915 = vunpack.c.l.b16 %v429
    %v1916 = vunpack.c.h.b16 %v429
    %v1917 = vunpack.c.l.b16 %v430
    %v1918 = vunpack.c.h.b16 %v430
    %v1919 = vunpack.c.l.b16 %v431
    %v1920 = vunpack.c.h.b16 %v431
    %v1921 = vunpack.c.l.b16 %v432
    %v1922 = vunpack.c.h.b16 %v432
    %v1923 = vunpack.c.l.b16 %v433
    %v1924 = vunpack.c.h.b16 %v433
    %v1925 = vunpack.c.l.b16 %v434
    %v1926 = vunpack.c.h.b16 %v434
    %v1927 = vunpack.c.l.b16 %v435
    %v1928 = vunpack.c.h.b16 %v435
    %v1929 = vunpack.c.l.b16 %v436
    %v1930 = vunpack.c.h.b16 %v436
    %v1931 = vunpack.c.l.b16 %v437
    %v1932 = vunpack.c.h.b16 %v437
    %v1933 = vunpack.c.l.b16 %v438
    %v1934 = vunpack.c.h.b16 %v438
    %v1935 = vunpack.c.l.b16 %v439
    %v1936 = vunpack.c.h.b16 %v439
    %v1937 = vunpack.c.l.b16 %v440
    %v1938 = vunpack.c.h.b16 %v440
    %v1939 = vunpack.c.l.b16 %v441
    %v1940 = vunpack.c.h.b16 %v441
    %v1941 = vunpack.c.l.b16 %v442
    %v1942 = vunpack.c.h.b16 %v442
    %v1943 = vunpack.c.l.b16 %v443
    %v1944 = vunpack.c.h.b16 %v443
    %v1945 = vunpack.c.l.b16 %v444
    %v1946 = vunpack.c.h.b16 %v444
    %v1947 = vunpack.c.l.b16 %v445
    %v1948 = vunpack.c.h.b16 %v445
    %v1949 = vunpack.c.l.b16 %v446
    %v1950 = vunpack.c.h.b16 %v446
    %v1951 = vunpack.c.l.b16 %v447
    %v1952 = vunpack.c.h.b16 %v447
    %v1953 = vunpack.c.l.b16 %v448
    %v1954 = vunpack.c.h.b16 %v448
    %v1955 = vunpack.c.l.b16 %v449
    %v1956 = vunpack.c.h.b16 %v449
    %v1957 = vunpack.c.l.b16 %v450
    %v1958 = vunpack.c.h.b16 %v450
    %v1959 = vunpack.c.l.b16 %v451
    %v1960 = vunpack.c.h.b16 %v451
    %v1961 = vunpack.c.l.b16 %v452
    %v1962 = vunpack.c.h.b16 %v452
    %v1963 = vunpack.c.l.b16 %v453
    %v1964 = vunpack.c.h.b16 %v453
    %v1965 = vunpack.c.l.b16 %v454
    %v1966 = vunpack.c.h.b16 %v454
    %v1967 = vunpack.c.l.b16 %v455
    %v1968 = vunpack.c.h.b16 %v455
    %v1969 = vunpack.c.l.b16 %v456
    %v1970 = vunpack.c.h.b16 %v456
    %v1971 = vunpack.c.l.b16 %v457
    %v1972 = vunpack.c.h.b16 %v457
    %v1973 = vunpack.c.l.b16 %v458
    %v1974 = vunpack.c.h.b16 %v458
    %v1975 = vunpack.c.l.b16 %v459
    %v1976 = vunpack.c.h.b16 %v459
    %v1977 = vunpack.c.l.b16 %v460
    %v1978 = vunpack.c.h.b16 %v460
    %v1979 = vunpack.c.l.b16 %v461
    %v1980 = vunpack.c.h.b16 %v461
    %v1981 = vunpack.c.l.b16 %v462
    %v1982 = vunpack.c.h.b16 %v462
    %v1983 = vunpack.c.l.b16 %v463
    %v1984 = vunpack.c.h.b16 %v463
    %v1985 = vunpack.c.l.b16 %v464
    %v1986 = vunpack.c.h.b16 %v464
    %v1987 = vunpack.c.l.b16 %v465
    %v1988 = vunpack.c.h.b16 %v465
    %v1989 = vunpack.c.l.b16 %v466
    %v1990 = vunpack.c.h.b16 %v466
    %v1991 = vunpack.c.l.b16 %v467
    %v1992 = vunpack.c.h.b16 %v467
    %v1993 = vunpack.c.l.b16 %v468
    %v1994 = vunpack.c.h.b16 %v468
    %v1995 = vunpack.c.l.b16 %v469
    %v1996 = vunpack.c.h.b16 %v469
    %v1997 = vunpack.c.l.b16 %v470
    %v1998 = vunpack.c.h.b16 %v470
    %v1999 = vunpack.c.l.b16 %v471
    %v2000 = vunpack.c.h.b16 %v471
    %v2001 = vunpack.c.l.b16 %v472
    %v2002 = vunpack.c.h.b16 %v472
    %v2003 = vunpack.c.l.b16 %v473
    %v2004 = vunpack.c.h.b16 %v473
    %v2005 = vunpack.c.l.b16 %v474
    %v2006 = vunpack.c.h.b16 %v474
    %v2007 = vunpack.c.l.b16 %v475
    %v2008 = vunpack.c.h.b16 %v475
    %v2009 = vunpack.c.l.b16 %v476
    %v2010 = vunpack.c.h.b16 %v476
    %v2011 = vunpack.c.l.b16 %v477
    %v2012 = vunpack.c.h.b16 %v477
    %v2013 = vunpack.c.l.b16 %v478
    %v2014 = vunpack.c.h.b16 %v478
    %v2015 = vunpack.c.l.b16 %v479
    %v2016 = vunpack.c.h.b16 %v479
    %v2017 = vunpack.c.l.b16 %v480
    %v2018 = vunpack.c.h.b16 %v480
    %v2019 = vunpack.c.l.b16 %v481
    %v2020 = vunpack.c.h.b16 %v481
    %v2021 = vunpack.c.l.b16 %v482
    %v2022 = vunpack.c.h.b16 %v482
    %v2023 = vunpack.c.l.b16 %v483
    %v2024 = vunpack.c.h.b16 %v483
    %v2025 = vunpack.c.l.b16 %v484
    %v2026 = vunpack.c.h.b16 %v484
    %v2027 = vunpack.c.l.b16 %v485
    %v2028 = vunpack.c.h.b16 %v485
    %v2029 = vunpack.c.l.b16 %v486
    %v2030 = vunpack.c.h.b16 %v486
    %v2031 = vunpack.c.l.b16 %v487
    %v2032 = vunpack.c.h.b16 %v487
    %v2033 = vunpack.c.l.b16 %v488
    %v2034 = vunpack.c.h.b16 %v488
    %v2035 = vunpack.c.l.b16 %v489
    %v2036 = vunpack.c.h.b16 %v489
    %v2037 = vunpack.c.l.b16 %v490
    %v2038 = vunpack.c.h.b16 %v490
    %v2039 = vunpack.c.l.b16 %v491
    %v2040 = vunpack.c.h.b16 %v491
    %v2041 = vunpack.c.l.b16 %v492
    %v2042 = vunpack.c.h.b16 %v492
    %v2043 = vunpack.c.l.b16 %v493
    %v2044 = vunpack.c.h.b16 %v493
    %v2045 = vunpack.c.l.b16 %v494
    %v2046 = vunpack.c.h.b16 %v494
    %v2047 = vunpack.c.l.b16 %v495
    %v2048 = vunpack.c.h.b16 %v495
    %v2049 = vunpack.c.l.b16 %v496
    %v2050 = vunpack.c.h.b16 %v496
    %v2051 = vunpack.c.l.b16 %v497
    %v2052 = vunpack.c.h.b16 %v497
    %v2053 = vunpack.c.l.b16 %v498
    %v2054 = vunpack.c.h.b16 %v498
    %v2055 = vunpack.c.l.b16 %v499
    %v2056 = vunpack.c.h.b16 %v499
    %v2057 = vunpack.c.l.b16 %v500
    %v2058 = vunpack.c.h.b16 %v500
    %v2059 = vunpack.c.l.b16 %v501
    %v2060 = vunpack.c.h.b16 %v501
    %v2061 = vunpack.c.l.b16 %v502
    %v2062 = vunpack.c.h.b16 %v502
    %v2063 = vunpack.c.l.b16 %v503
    %v2064 = vunpack.c.h.b16 %v503
    %v2065 = vunpack.c.l.b16 %v504
    %v2066 = vunpack.c.h.b16 %v504
    %v2067 = vunpack.c.l.b16 %v505
    %v2068 = vunpack.c.h.b16 %v505
    %v2069 = vunpack.c.l.b16 %v506
    %v2070 = vunpack.c.h.b16 %v506
    %v2071 = vunpack.c.l.b16 %v507
    %v2072 = vunpack.c.h.b16 %v507
    %v2073 = vunpack.c.l.b16 %v508
    %v2074 = vunpack.c.h.b16 %v508
    %v2075 = vunpack.c.l.b16 %v509
    %v2076 = vunpack.c.h.b16 %v509
    %v2077 = vunpack.c.l.b16 %v510
    %v2078 = vunpack.c.h.b16 %v510
    %v2079 = vunpack.c.l.b16 %v511
    %v2080 = vunpack.c.h.b16 %v511
    %v2081 = vunpack.c.l.b16 %v512
    %v2082 = vunpack.c.h.b16 %v512
    %v2083 = vunpack.c.l.b16 %v513
    %v2084 = vunpack.c.h.b16 %v513
    %v2085 = vunpack.c.l.b16 %v514
    %v2086 = vunpack.c.h.b16 %v514
    %v2087 = vunpack.c.l.b16 %v515
    %v2088 = vunpack.c.h.b16 %v515
    %v2089 = vunpack.c.l.b16 %v516
    %v2090 = vunpack.c.h.b16 %v516
    %v2091 = vunpack.c.l.b16 %v517
    %v2092 = vunpack.c.h.b16 %v517
    %v2093 = vunpack.c.l.b16 %v518
    %v2094 = vunpack.c.h.b16 %v518
    %v2095 = vunpack.c.l.b16 %v519
    %v2096 = vunpack.c.h.b16 %v519
    %v2097 = vunpack.c.l.b16 %v520
    %v2098 = vunpack.c.h.b16 %v520
    %v2099 = vunpack.c.l.b16 %v521
    %v2100 = vunpack.c.h.b16 %v521
    %v2101 = vunpack.c.l.b16 %v522
    %v2102 = vunpack.c.h.b16 %v522
    %v2103 = vunpack.c.l.b16 %v523
    %v2104 = vunpack.c.h.b16 %v523
    %v2105 = vunpack.c.l.b16 %v524
    %v2106 = vunpack.c.h.b16 %v524
    %v2107 = vunpack.c.l.b16 %v525
    %v2108 = vunpack.c.h.b16 %v525
    %v2109 = vunpack.c.l.b16 %v526
    %v2110 = vunpack.c.h.b16 %v526
    %v2111 = vunpack.c.l.b16 %v527
    %v2112 = vunpack.c.h.b16 %v527
    %v2113 = vunpack.c.l.b16 %v528
    %v2114 = vunpack.c.h.b16 %v528
    %v2115 = vunpack.c.l.b16 %v529
    %v2116 = vunpack.c.h.b16 %v529
    %v2117 = vunpack.c.l.b16 %v530
    %v2118 = vunpack.c.h.b16 %v530
    %v2119 = vunpack.c.l.b16 %v531
    %v2120 = vunpack.c.h.b16 %v531
    %v2121 = vunpack.c.l.b16 %v532
    %v2122 = vunpack.c.h.b16 %v532
    %v2123 = vunpack.c.l.b16 %v533
    %v2124 = vunpack.c.h.b16 %v533
    %v2125 = vunpack.c.l.b16 %v534
    %v2126 = vunpack.c.h.b16 %v534
    %v2127 = vunpack.c.l.b16 %v535
    %v2128 = vunpack.c.h.b16 %v535
    %v2129 = vunpack.c.l.b16 %v536
    %v2130 = vunpack.c.h.b16 %v536
    %v2131 = vunpack.c.l.b16 %v537
    %v2132 = vunpack.c.h.b16 %v537
    %v2133 = vunpack.c.l.b16 %v538
    %v2134 = vunpack.c.h.b16 %v538
    %v2135 = vunpack.c.l.b16 %v539
    %v2136 = vunpack.c.h.b16 %v539
    %v2137 = vunpack.c.l.b16 %v540
    %v2138 = vunpack.c.h.b16 %v540
    %v2139 = vunpack.c.l.b16 %v541
    %v2140 = vunpack.c.h.b16 %v541
    %v2141 = vunpack.c.l.b16 %v542
    %v2142 = vunpack.c.h.b16 %v542
    %v2143 = vunpack.c.l.b16 %v543
    %v2144 = vunpack.c.h.b16 %v543
    %v2145 = vunpack.c.l.b16 %v544
    %v2146 = vunpack.c.h.b16 %v544
    %v2147 = vunpack.c.l.b16 %v545
    %v2148 = vunpack.c.h.b16 %v545
    %v2149 = vunpack.c.l.b16 %v546
    %v2150 = vunpack.c.h.b16 %v546
    %v2151 = vunpack.c.l.b16 %v547
    %v2152 = vunpack.c.h.b16 %v547
    %v2153 = vunpack.c.l.b16 %v548
    %v2154 = vunpack.c.h.b16 %v548
    %v2155 = vunpack.c.l.b16 %v549
    %v2156 = vunpack.c.h.b16 %v549
    %v2157 = vunpack.c.l.b16 %v550
    %v2158 = vunpack.c.h.b16 %v550
    %v2159 = vunpack.c.l.b16 %v551
    %v2160 = vunpack.c.h.b16 %v551
    %v2161 = vunpack.c.l.b16 %v552
    %v2162 = vunpack.c.h.b16 %v552
    %v2163 = vunpack.c.l.b16 %v553
    %v2164 = vunpack.c.h.b16 %v553
    %v2165 = vunpack.c.l.b16 %v554
    %v2166 = vunpack.c.h.b16 %v554
    %v2167 = vunpack.c.l.b16 %v555
    %v2168 = vunpack.c.h.b16 %v555
    %v2169 = vunpack.c.l.b16 %v556
    %v2170 = vunpack.c.h.b16 %v556
    %v2171 = vunpack.c.l.b16 %v557
    %v2172 = vunpack.c.h.b16 %v557
    %v2173 = vunpack.c.l.b16 %v558
    %v2174 = vunpack.c.h.b16 %v558
    %v2175 = vunpack.c.l.b16 %v559
    %v2176 = vunpack.c.h.b16 %v559
    %v2177 = vunpack.c.l.b16 %v560
    %v2178 = vunpack.c.h.b16 %v560
    %v2179 = vunpack.c.l.b16 %v561
    %v2180 = vunpack.c.h.b16 %v561
    %v2181 = vunpack.c.l.b16 %v562
    %v2182 = vunpack.c.h.b16 %v562
    %v2183 = vunpack.c.l.b16 %v563
    %v2184 = vunpack.c.h.b16 %v563
    %v2185 = vunpack.c.l.b16 %v564
    %v2186 = vunpack.c.h.b16 %v564
    %v2187 = vunpack.c.l.b16 %v565
    %v2188 = vunpack.c.h.b16 %v565
    %v2189 = vunpack.c.l.b16 %v566
    %v2190 = vunpack.c.h.b16 %v566
    %v2191 = vunpack.c.l.b16 %v567
    %v2192 = vunpack.c.h.b16 %v567
    %v2193 = vunpack.c.l.b16 %v568
    %v2194 = vunpack.c.h.b16 %v568
    %v2195 = vunpack.c.l.b16 %v569
    %v2196 = vunpack.c.h.b16 %v569
    %v2197 = vunpack.c.l.b16 %v570
    %v2198 = vunpack.c.h.b16 %v570
    %v2199 = vunpack.c.l.b16 %v571
    %v2200 = vunpack.c.h.b16 %v571
    %v2201 = vunpack.c.l.b16 %v572
    %v2202 = vunpack.c.h.b16 %v572
    %v2203 = vunpack.c.l.b16 %v573
    %v2204 = vunpack.c.h.b16 %v573
    %v2205 = vunpack.c.l.b16 %v574
    %v2206 = vunpack.c.h.b16 %v574
    %v2207 = vunpack.c.l.b16 %v575
    %v2208 = vunpack.c.h.b16 %v575
    %v2209 = vunpack.c.l.b16 %v576
    %v2210 = vunpack.c.h.b16 %v576
    %v2211 = vunpack.c.l.b16 %v577
    %v2212 = vunpack.c.h.b16 %v577
    %v2213 = vunpack.c.l.b16 %v578
    %v2214 = vunpack.c.h.b16 %v578
    %v2215 = vunpack.c.l.b16 %v579
    %v2216 = vunpack.c.h.b16 %v579
    %v2217 = vunpack.c.l.b16 %v580
    %v2218 = vunpack.c.h.b16 %v580
    %v2219 = vunpack.c.l.b16 %v581
    %v2220 = vunpack.c.h.b16 %v581
    %v2221 = vunpack.c.l.b16 %v582
    %v2222 = vunpack.c.h.b16 %v582
    %v2223 = vunpack.c.l.b16 %v583
    %v2224 = vunpack.c.h.b16 %v583
    %v2225 = vunpack.c.l.b16 %v584
    %v2226 = vunpack.c.h.b16 %v584
    %v2227 = vunpack.c.l.b16 %v585
    %v2228 = vunpack.c.h.b16 %v585
    %v2229 = vunpack.c.l.b16 %v586
    %v2230 = vunpack.c.h.b16 %v586
    %v2231 = vunpack.c.l.b16 %v587
    %v2232 = vunpack.c.h.b16 %v587
    %v2233 = vunpack.c.l.b16 %v588
    %v2234 = vunpack.c.h.b16 %v588
    %v2235 = vunpack.c.l.b16 %v589
    %v2236 = vunpack.c.h.b16 %v589
    %v2237 = vunpack.c.l.b16 %v590
    %v2238 = vunpack.c.h.b16 %v590
    %v2239 = vunpack.c.l.b16 %v591
    %v2240 = vunpack.c.h.b16 %v591
    %v2241 = vunpack.c.l.b16 %v592
    %v2242 = vunpack.c.h.b16 %v592
    %v2243 = vunpack.c.l.b16 %v593
    %v2244 = vunpack.c.h.b16 %v593
    %v2245 = vunpack.c.l.b16 %v594
    %v2246 = vunpack.c.h.b16 %v594
    %v2247 = vunpack.c.l.b16 %v595
    %v2248 = vunpack.c.h.b16 %v595
    %v2249 = vunpack.c.l.b16 %v596
    %v2250 = vunpack.c.h.b16 %v596
    %v2251 = vunpack.c.l.b16 %v597
    %v2252 = vunpack.c.h.b16 %v597
    %v2253 = vunpack.c.l.b16 %v598
    %v2254 = vunpack.c.h.b16 %v598
    %v2255 = vunpack.c.l.b16 %v599
    %v2256 = vunpack.c.h.b16 %v599
    %v2257 = vunpack.c.l.b16 %v600
    %v2258 = vunpack.c.h.b16 %v600
    %v2259 = vunpack.c.l.b16 %v601
    %v2260 = vunpack.c.h.b16 %v601
    %v2261 = vunpack.c.l.b16 %v602
    %v2262 = vunpack.c.h.b16 %v602
    %v2263 = vunpack.c.l.b16 %v603
    %v2264 = vunpack.c.h.b16 %v603
    %v2265 = vunpack.c.l.b16 %v604
    %v2266 = vunpack.c.h.b16 %v604
    %v2267 = vunpack.c.l.b16 %v605
    %v2268 = vunpack.c.h.b16 %v605
    %v2269 = vunpack.c.l.b16 %v606
    %v2270 = vunpack.c.h.b16 %v606
    %v2271 = vunpack.c.l.b16 %v607
    %v2272 = vunpack.c.h.b16 %v607
    %v2273 = vunpack.c.l.b16 %v608
    %v2274 = vunpack.c.h.b16 %v608
    %v2275 = vunpack.c.l.b16 %v609
    %v2276 = vunpack.c.h.b16 %v609
    %v2277 = vunpack.c.l.b16 %v610
    %v2278 = vunpack.c.h.b16 %v610
    %v2279 = vunpack.c.l.b16 %v611
    %v2280 = vunpack.c.h.b16 %v611
    %v2281 = vunpack.c.l.b16 %v612
    %v2282 = vunpack.c.h.b16 %v612
    %v2283 = vunpack.c.l.b16 %v613
    %v2284 = vunpack.c.h.b16 %v613
    %v2285 = vunpack.c.l.b16 %v614
    %v2286 = vunpack.c.h.b16 %v614
    %v2287 = vunpack.c.l.b16 %v615
    %v2288 = vunpack.c.h.b16 %v615
    %v2289 = vunpack.c.l.b16 %v616
    %v2290 = vunpack.c.h.b16 %v616
    %v2291 = vunpack.c.l.b16 %v617
    %v2292 = vunpack.c.h.b16 %v617
    %v2293 = vunpack.c.l.b16 %v618
    %v2294 = vunpack.c.h.b16 %v618
    %v2295 = vunpack.c.l.b16 %v619
    %v2296 = vunpack.c.h.b16 %v619
    %v2297 = vunpack.c.l.b16 %v620
    %v2298 = vunpack.c.h.b16 %v620
    %v2299 = vunpack.c.l.b16 %v621
    %v2300 = vunpack.c.h.b16 %v621
    %v2301 = vunpack.c.l.b16 %v622
    %v2302 = vunpack.c.h.b16 %v622
    %v2303 = vunpack.c.l.b16 %v623
    %v2304 = vunpack.c.h.b16 %v623
    %v2305 = vunpack.c.l.b16 %v624
    %v2306 = vunpack.c.h.b16 %v624
    %v2307 = vunpack.c.l.b16 %v625
    %v2308 = vunpack.c.h.b16 %v625
    %v2309 = vunpack.c.l.b16 %v626
    %v2310 = vunpack.c.h.b16 %v626
    %v2311 = vunpack.c.l.b16 %v627
    %v2312 = vunpack.c.h.b16 %v627
    %v2313 = vunpack.c.l.b16 %v628
    %v2314 = vunpack.c.h.b16 %v628
    %v2315 = vunpack.c.l.b16 %v629
    %v2316 = vunpack.c.h.b16 %v629
    %v2317 = vunpack.c.l.b16 %v630
    %v2318 = vunpack.c.h.b16 %v630
    %v2319 = vunpack.c.l.b16 %v631
    %v2320 = vunpack.c.h.b16 %v631
    %v2321 = vunpack.c.l.b16 %v632
    %v2322 = vunpack.c.h.b16 %v632
    %v2323 = vunpack.c.l.b16 %v633
    %v2324 = vunpack.c.h.b16 %v633
    %v2325 = vunpack.c.l.b16 %v634
    %v2326 = vunpack.c.h.b16 %v634
    %v2327 = vunpack.c.l.b16 %v635
    %v2328 = vunpack.c.h.b16 %v635
    %v2329 = vunpack.c.l.b16 %v636
    %v2330 = vunpack.c.h.b16 %v636
    %v2331 = vunpack.c.l.b16 %v637
    %v2332 = vunpack.c.h.b16 %v637
    %v2333 = vunpack.c.l.b16 %v638
    %v2334 = vunpack.c.h.b16 %v638
    %v2335 = vunpack.c.l.b16 %v639
    %v2336 = vunpack.c.h.b16 %v639
    %v2337 = vunpack.c.l.b16 %v640
    %v2338 = vunpack.c.h.b16 %v640
    %v2339 = vunpack.c.l.b16 %v641
    %v2340 = vunpack.c.h.b16 %v641
    %v2341 = vunpack.c.l.b16 %v642
    %v2342 = vunpack.c.h.b16 %v642
    %v2343 = vunpack.c.l.b16 %v643
    %v2344 = vunpack.c.h.b16 %v643
    %v2345 = vunpack.c.l.b16 %v644
    %v2346 = vunpack.c.h.b16 %v644
    %v2347 = vunpack.c.l.b16 %v645
    %v2348 = vunpack.c.h.b16 %v645
    %v2349 = vunpack.c.l.b16 %v646
    %v2350 = vunpack.c.h.b16 %v646
    %v2351 = vunpack.c.l.b16 %v647
    %v2352 = vunpack.c.h.b16 %v647
    %v2353 = vunpack.c.l.b16 %v648
    %v2354 = vunpack.c.h.b16 %v648
    %v2355 = vunpack.c.l.b16 %v649
    %v2356 = vunpack.c.h.b16 %v649
    %v2357 = vunpack.c.l.b16 %v650
    %v2358 = vunpack.c.h.b16 %v650
    %v2359 = vunpack.c.l.b16 %v651
    %v2360 = vunpack.c.h.b16 %v651
    %v2361 = vunpack.c.l.b16 %v652
    %v2362 = vunpack.c.h.b16 %v652
    %v2363 = vunpack.c.l.b16 %v653
    %v2364 = vunpack.c.h.b16 %v653
    %v2365 = vunpack.c.l.b16 %v654
    %v2366 = vunpack.c.h.b16 %v654
    %v2367 = vunpack.c.l.b16 %v655
    %v2368 = vunpack.c.h.b16 %v655
    %v2369 = vunpack.c.l.b16 %v656
    %v2370 = vunpack.c.h.b16 %v656
    %v2371 = vunpack.c.l.b16 %v657
    %v2372 = vunpack.c.h.b16 %v657
    %v2373 = vunpack.c.l.b16 %v658
    %v2374 = vunpack.c.h.b16 %v658
    %v2375 = vunpack.c.l.b16 %v659
    %v2376 = vunpack.c.h.b16 %v659
    %v2377 = vunpack.c.l.b16 %v660
    %v2378 = vunpack.c.h.b16 %v660
    %v2379 = vunpack.c.l.b16 %v661
    %v2380 = vunpack.c.h.b16 %v661
    %v2381 = vunpack.c.l.b16 %v662
    %v2382 = vunpack.c.h.b16 %v662
    %v2383 = vunpack.c.l.b16 %v663
    %v2384 = vunpack.c.h.b16 %v663
    %v2385 = vunpack.c.l.b16 %v664
    %v2386 = vunpack.c.h.b16 %v664
    %v2387 = vunpack.c.l.b16 %v665
    %v2388 = vunpack.c.h.b16 %v665
    %v2389 = vunpack.c.l.b16 %v666
    %v2390 = vunpack.c.h.b16 %v666
    %v2391 = vunpack.c.l.b16 %v667
    %v2392 = vunpack.c.h.b16 %v667
    %v2393 = vunpack.c.l.b16 %v668
    %v2394 = vunpack.c.h.b16 %v668
    %v2395 = vunpack.c.l.b16 %v669
    %v2396 = vunpack.c.h.b16 %v669
    %v2397 = vunpack.c.l.b16 %v670
    %v2398 = vunpack.c.h.b16 %v670
    %v2399 = vunpack.c.l.b16 %v671
    %v2400 = vunpack.c.h.b16 %v671
    %v2401 = vunpack.c.l.b16 %v672
    %v2402 = vunpack.c.h.b16 %v672
    %v2403 = vunpack.c.l.b16 %v673
    %v2404 = vunpack.c.h.b16 %v673
    %v2405 = vunpack.c.l.b16 %v674
    %v2406 = vunpack.c.h.b16 %v674
    %v2407 = vunpack.c.l.b16 %v675
    %v2408 = vunpack.c.h.b16 %v675
    %v2409 = vunpack.c.l.b16 %v676
    %v2410 = vunpack.c.h.b16 %v676
    %v2411 = vunpack.c.l.b16 %v677
    %v2412 = vunpack.c.h.b16 %v677
    %v2413 = vunpack.c.l.b16 %v678
    %v2414 = vunpack.c.h.b16 %v678
    %v2415 = vunpack.c.l.b16 %v679
    %v2416 = vunpack.c.h.b16 %v679
    %v2417 = vunpack.c.l.b16 %v680
    %v2418 = vunpack.c.h.b16 %v680
    %v2419 = vunpack.c.l.b16 %v681
    %v2420 = vunpack.c.h.b16 %v681
    %v2421 = vunpack.c.l.b16 %v682
    %v2422 = vunpack.c.h.b16 %v682
    %v2423 = vunpack.c.l.b16 %v683
    %v2424 = vunpack.c.h.b16 %v683
    %v2425 = vunpack.c.l.b16 %v684
    %v2426 = vunpack.c.h.b16 %v684
    %v2427 = vunpack.c.l.b16 %v685
    %v2428 = vunpack.c.h.b16 %v685
    %v2429 = vunpack.c.l.b16 %v686
    %v2430 = vunpack.c.h.b16 %v686
    %v2431 = vunpack.c.l.b16 %v687
    %v2432 = vunpack.c.h.b16 %v687
    %v2433 = vunpack.c.l.b16 %v688
    %v2434 = vunpack.c.h.b16 %v688
    %v2435 = vunpack.c.l.b16 %v689
    %v2436 = vunpack.c.h.b16 %v689
    %v2437 = vunpack.c.l.b16 %v690
    %v2438 = vunpack.c.h.b16 %v690
    %v2439 = vunpack.c.l.b16 %v691
    %v2440 = vunpack.c.h.b16 %v691
    %v2441 = vunpack.c.l.b16 %v692
    %v2442 = vunpack.c.h.b16 %v692
    %v2443 = vunpack.c.l.b16 %v693
    %v2444 = vunpack.c.h.b16 %v693
    %v2445 = vunpack.c.l.b16 %v694
    %v2446 = vunpack.c.h.b16 %v694
    %v2447 = vunpack.c.l.b16 %v695
    %v2448 = vunpack.c.h.b16 %v695
    %v2449 = vunpack.c.l.b16 %v696
    %v2450 = vunpack.c.h.b16 %v696
    %v2451 = vunpack.c.l.b16 %v697
    %v2452 = vunpack.c.h.b16 %v697
    %v2453 = vunpack.c.l.b16 %v698
    %v2454 = vunpack.c.h.b16 %v698
    %v2455 = vunpack.c.l.b16 %v699
    %v2456 = vunpack.c.h.b16 %v699
    %v2457 = vunpack.c.l.b16 %v700
    %v2458 = vunpack.c.h.b16 %v700
    %v2459 = vunpack.c.l.b16 %v701
    %v2460 = vunpack.c.h.b16 %v701
    %v2461 = vunpack.c.l.b16 %v702
    %v2462 = vunpack.c.h.b16 %v702
    %v2463 = vunpack.c.l.b16 %v703
    %v2464 = vunpack.c.h.b16 %v703
    %v2465 = vunpack.c.l.b16 %v704
    %v2466 = vunpack.c.h.b16 %v704
    %v2467 = vunpack.c.l.b16 %v705
    %v2468 = vunpack.c.h.b16 %v705
    %v2469 = vunpack.c.l.b16 %v706
    %v2470 = vunpack.c.h.b16 %v706
    %v2471 = vunpack.c.l.b16 %v707
    %v2472 = vunpack.c.h.b16 %v707
    %v2473 = vunpack.c.l.b16 %v708
    %v2474 = vunpack.c.h.b16 %v708
    %v2475 = vunpack.c.l.b16 %v709
    %v2476 = vunpack.c.h.b16 %v709
    %v2477 = vunpack.c.l.b16 %v710
    %v2478 = vunpack.c.h.b16 %v710
    %v2479 = vunpack.c.l.b16 %v711
    %v2480 = vunpack.c.h.b16 %v711
    %v2481 = vunpack.c.l.b16 %v712
    %v2482 = vunpack.c.h.b16 %v712
    %v2483 = vunpack.c.l.b16 %v713
    %v2484 = vunpack.c.h.b16 %v713
    %v2485 = vunpack.c.l.b16 %v714
    %v2486 = vunpack.c.h.b16 %v714
    %v2487 = vunpack.c.l.b16 %v715
    %v2488 = vunpack.c.h.b16 %v715
    %v2489 = vunpack.c.l.b16 %v716
    %v2490 = vunpack.c.h.b16 %v716
    %v2491 = vunpack.c.l.b16 %v717
    %v2492 = vunpack.c.h.b16 %v717
    %v2493 = vunpack.c.l.b16 %v718
    %v2494 = vunpack.c.h.b16 %v718
    %v2495 = vunpack.c.l.b16 %v719
    %v2496 = vunpack.c.h.b16 %v719
    %v2497 = vunpack.c.l.b16 %v720
    %v2498 = vunpack.c.h.b16 %v720
    %v2499 = vunpack.c.l.b16 %v721
    %v2500 = vunpack.c.h.b16 %v721
    %v2501 = vunpack.c.l.b16 %v722
    %v2502 = vunpack.c.h.b16 %v722
    %v2503 = vunpack.c.l.b16 %v723
    %v2504 = vunpack.c.h.b16 %v723
    %v2505 = vunpack.c.l.b16 %v724
    %v2506 = vunpack.c.h.b16 %v724
    %v2507 = vunpack.c.l.b16 %v725
    %v2508 = vunpack.c.h.b16 %v725
    %v2509 = vunpack.c.l.b16 %v726
    %v2510 = vunpack.c.h.b16 %v726
    %v2511 = vunpack.c.l.b16 %v727
    %v2512 = vunpack.c.h.b16 %v727
    %v2513 = vunpack.c.l.b16 %v728
    %v2514 = vunpack.c.h.b16 %v728
    %v2515 = vunpack.c.l.b16 %v729
    %v2516 = vunpack.c.h.b16 %v729
    %v2517 = vunpack.c.l.b16 %v730
    %v2518 = vunpack.c.h.b16 %v730
    %v2519 = vunpack.c.l.b16 %v731
    %v2520 = vunpack.c.h.b16 %v731
    %v2521 = vunpack.c.l.b16 %v732
    %v2522 = vunpack.c.h.b16 %v732
    %v2523 = vunpack.c.l.b16 %v733
    %v2524 = vunpack.c.h.b16 %v733
    %v2525 = vunpack.c.l.b16 %v734
    %v2526 = vunpack.c.h.b16 %v734
    %v2527 = vpack.c.b16 %v1383, %v1375
    %v2528 = vpack.c.b16 %v1384, %v1376
    %v2529 = vpack.c.b16 %v1385, %v1377
    %v2530 = vpack.c.b16 %v1386, %v1378
    %v2531 = vpack.c.b16 %v1387, %v1379
    %v2532 = vpack.c.b16 %v1388, %v1380
    %v2533 = vpack.c.b16 %v1389, %v1381
    %v2534 = vpack.c.b16 %v1390, %v1382
    %v2535 = vpack.c.b16 %v1399, %v1391
    %v2536 = vpack.c.b16 %v1400, %v1392
    %v2537 = vpack.c.b16 %v1401, %v1393
    %v2538 = vpack.c.b16 %v1402, %v1394
    %v2539 = vpack.c.b16 %v1403, %v1395
    %v2540 = vpack.c.b16 %v1404, %v1396
    %v2541 = vpack.c.b16 %v1405, %v1397
    %v2542 = vpack.c.b16 %v1406, %v1398
    %v2543 = vpack.c.b16 %v1415, %v1407
    %v2544 = vpack.c.b16 %v1416, %v1408
    %v2545 = vpack.c.b16 %v1417, %v1409
    %v2546 = vpack.c.b16 %v1418, %v1410
    %v2547 = vpack.c.b16 %v1419, %v1411
    %v2548 = vpack.c.b16 %v1420, %v1412
    %v2549 = vpack.c.b16 %v1421, %v1413
    %v2550 = vpack.c.b16 %v1422, %v1414
    %v2551 = vpack.c.b16 %v1431, %v1423
    %v2552 = vpack.c.b16 %v1432, %v1424
    %v2553 = vpack.c.b16 %v1433, %v1425
    %v2554 = vpack.c.b16 %v1434, %v1426
    %v2555 = vpack.c.b16 %v1435, %v1427
    %v2556 = vpack.c.b16 %v1436, %v1428
    %v2557 = vpack.c.b16 %v1437, %v1429
    %v2558 = vpack.c.b16 %v1438, %v1430
    %v2559 = vpack.c.b16 %v1447, %v1439
    %v2560 = vpack.c.b16 %v1448, %v1440
    %v2561 = vpack.c.b16 %v1449, %v1441
    %v2562 = vpack.c.b16 %v1450, %v1442
    %v2563 = vpack.c.b16 %v1451, %v1443
    %v2564 = vpack.c.b16 %v1452, %v1444
    %v2565 = vpack.c.b16 %v1453, %v1445
    %v2566 = vpack.c.b16 %v1454, %v1446
    %v2567 = vpack.c.b16 %v1463, %v1455
    %v2568 = vpack.c.b16 %v1464, %v1456
    %v2569 = vpack.c.b16 %v1465, %v1457
    %v2570 = vpack.c.b16 %v1466, %v1458
    %v2571 = vpack.c.b16 %v1467, %v1459
    %v2572 = vpack.c.b16 %v1468, %v1460
    %v2573 = vpack.c.b16 %v1469, %v1461
    %v2574 = vpack.c.b16 %v1470, %v1462
    %v2575 = vpack.c.b16 %v1479, %v1471
    %v2576 = vpack.c.b16 %v1480, %v1472
    %v2577 = vpack.c.b16 %v1481, %v1473
    %v2578 = vpack.c.b16 %v1482, %v1474
    %v2579 = vpack.c.b16 %v1483, %v1475
    %v2580 = vpack.c.b16 %v1484, %v1476
    %v2581 = vpack.c.b16 %v1485, %v1477
    %v2582 = vpack.c.b16 %v1486, %v1478
    %v2583 = vpack.c.b16 %v1495, %v1487
    %v2584 = vpack.c.b16 %v1496, %v1488
    %v2585 = vpack.c.b16 %v1497, %v1489
    %v2586 = vpack.c.b16 %v1498, %v1490
    %v2587 = vpack.c.b16 %v1499, %v1491
    %v2588 = vpack.c.b16 %v1500, %v1492
    %v2589 = vpack.c.b16 %v1501, %v1493
    %v2590 = vpack.c.b16 %v1502, %v1494
    %v2591 = vpack.c.b16 %v1511, %v1503
    %v2592 = vpack.c.b16 %v1512, %v1504
    %v2593 = vpack.c.b16 %v1513, %v1505
    %v2594 = vpack.c.b16 %v1514, %v1506
    %v2595 = vpack.c.b16 %v1515, %v1507
    %v2596 = vpack.c.b16 %v1516, %v1508
    %v2597 = vpack.c.b16 %v1517, %v1509
    %v2598 = vpack.c.b16 %v1518, %v1510
    %v2599 = vpack.c.b16 %v1527, %v1519
    %v2600 = vpack.c.b16 %v1528, %v1520
    %v2601 = vpack.c.b16 %v1529, %v1521
    %v2602 = vpack.c.b16 %v1530, %v1522
    %v2603 = vpack.c.b16 %v1531, %v1523
    %v2604 = vpack.c.b16 %v1532, %v1524
    %v2605 = vpack.c.b16 %v1533, %v1525
    %v2606 = vpack.c.b16 %v1534, %v1526
    %v2607 = vpack.c.b16 %v1543, %v1535
    %v2608 = vpack.c.b16 %v1544, %v1536
    %v2609 = vpack.c.b16 %v1545, %v1537
    %v2610 = vpack.c.b16 %v1546, %v1538
    %v2611 = vpack.c.b16 %v1547, %v1539
    %v2612 = vpack.c.b16 %v1548, %v1540
    %v2613 = vpack.c.b16 %v1549, %v1541
    %v2614 = vpack.c.b16 %v1550, %v1542
    %v2615 = vpack.c.b16 %v1559, %v1551
    %v2616 = vpack.c.b16 %v1560, %v1552
    %v2617 = vpack.c.b16 %v1561, %v1553
    %v2618 = vpack.c.b16 %v1562, %v1554
    %v2619 = vpack.c.b16 %v1563, %v1555
    %v2620 = vpack.c.b16 %v1564, %v1556
    %v2621 = vpack.c.b16 %v1565, %v1557
    %v2622 = vpack.c.b16 %v1566, %v1558
    %v2623 = vpack.c.b16 %v1575, %v1567
    %v2624 = vpack.c.b16 %v1576, %v1568
    %v2625 = vpack.c.b16 %v1577, %v1569
    %v2626 = vpack.c.b16 %v1578, %v1570
    %v2627 = vpack.c.b16 %v1579, %v1571
    %v2628 = vpack.c.b16 %v1580, %v1572
    %v2629 = vpack.c.b16 %v1581, %v1573
    %v2630 = vpack.c.b16 %v1582, %v1574
    %v2631 = vpack.c.b16 %v1591, %v1583
    %v2632 = vpack.c.b16 %v1592, %v1584
    %v2633 = vpack.c.b16 %v1593, %v1585
    %v2634 = vpack.c.b16 %v1594, %v1586
    %v2635 = vpack.c.b16 %v1595, %v1587
    %v2636 = vpack.c.b16 %v1596, %v1588
    %v2637 = vpack.c.b16 %v1597, %v1589
    %v2638 = vpack.c.b16 %v1598, %v1590
    %v2639 = vpack.c.b16 %v1607, %v1599
    %v2640 = vpack.c.b16 %v1608, %v1600
    %v2641 = vpack.c.b16 %v1609, %v1601
    %v2642 = vpack.c.b16 %v1610, %v1602
    %v2643 = vpack.c.b16 %v1611, %v1603
    %v2644 = vpack.c.b16 %v1612, %v1604
    %v2645 = vpack.c.b16 %v1613, %v1605
    %v2646 = vpack.c.b16 %v1614, %v1606
    %v2647 = vpack.c.b16 %v1623, %v1615
    %v2648 = vpack.c.b16 %v1624, %v1616
    %v2649 = vpack.c.b16 %v1625, %v1617
    %v2650 = vpack.c.b16 %v1626, %v1618
    %v2651 = vpack.c.b16 %v1627, %v1619
    %v2652 = vpack.c.b16 %v1628, %v1620
    %v2653 = vpack.c.b16 %v1629, %v1621
    %v2654 = vpack.c.b16 %v1630, %v1622
    %v2655 = vpack.c.b16 %v1639, %v1631
    %v2656 = vpack.c.b16 %v1640, %v1632
    %v2657 = vpack.c.b16 %v1641, %v1633
    %v2658 = vpack.c.b16 %v1642, %v1634
    %v2659 = vpack.c.b16 %v1643, %v1635
    %v2660 = vpack.c.b16 %v1644, %v1636
    %v2661 = vpack.c.b16 %v1645, %v1637
    %v2662 = vpack.c.b16 %v1646, %v1638
    %v2663 = vpack.c.b16 %v1655, %v1647
    %v2664 = vpack.c.b16 %v1656, %v1648
    %v2665 = vpack.c.b16 %v1657, %v1649
    %v2666 = vpack.c.b16 %v1658, %v1650
    %v2667 = vpack.c.b16 %v1659, %v1651
    %v2668 = vpack.c.b16 %v1660, %v1652
    %v2669 = vpack.c.b16 %v1661, %v1653
    %v2670 = vpack.c.b16 %v1662, %v1654
    %v2671 = vpack.c.b16 %v1671, %v1663
    %v2672 = vpack.c.b16 %v1672, %v1664
    %v2673 = vpack.c.b16 %v1673, %v1665
    %v2674 = vpack.c.b16 %v1674, %v1666
    %v2675 = vpack.c.b16 %v1675, %v1667
    %v2676 = vpack.c.b16 %v1676, %v1668
    %v2677 = vpack.c.b16 %v1677, %v1669
    %v2678 = vpack.c.b16 %v1678, %v1670
    %v2679 = vpack.c.b16 %v1687, %v1679
    %v2680 = vpack.c.b16 %v1688, %v1680
    %v2681 = vpack.c.b16 %v1689, %v1681
    %v2682 = vpack.c.b16 %v1690, %v1682
    %v2683 = vpack.c.b16 %v1691, %v1683
    %v2684 = vpack.c.b16 %v1692, %v1684
    %v2685 = vpack.c.b16 %v1693, %v1685
    %v2686 = vpack.c.b16 %v1694, %v1686
    %v2687 = vpack.c.b16 %v1703, %v1695
    %v2688 = vpack.c.b16 %v1704, %v1696
    %v2689 = vpack.c.b16 %v1705, %v1697
    %v2690 = vpack.c.b16 %v1706, %v1698
    %v2691 = vpack.c.b16 %v1707, %v1699
    %v2692 = vpack.c.b16 %v1708, %v1700
    %v2693 = vpack.c.b16 %v1709, %v1701
    %v2694 = vpack.c.b16 %v1710, %v1702
    %v2695 = vpack.c.b16 %v1719, %v1711
    %v2696 = vpack.c.b16 %v1720, %v1712
    %v2697 = vpack.c.b16 %v1721, %v1713
    %v2698 = vpack.c.b16 %v1722, %v1714
    %v2699 = vpack.c.b16 %v1723, %v1715
    %v2700 = vpack.c.b16 %v1724, %v1716
    %v2701 = vpack.c.b16 %v1725, %v1717
    %v2702 = vpack.c.b16 %v1726, %v1718
    %v2703 = vpack.c.b16 %v1735, %v1727
    %v2704 = vpack.c.b16 %v1736, %v1728
    %v2705 = vpack.c.b16 %v1737, %v1729
    %v2706 = vpack.c.b16 %v1738, %v1730
    %v2707 = vpack.c.b16 %v1739, %v1731
    %v2708 = vpack.c.b16 %v1740, %v1732
    %v2709 = vpack.c.b16 %v1741, %v1733
    %v2710 = vpack.c.b16 %v1742, %v1734
    %v2711 = vpack.c.b16 %v1751, %v1743
    %v2712 = vpack.c.b16 %v1752, %v1744
    %v2713 = vpack.c.b16 %v1753, %v1745
    %v2714 = vpack.c.b16 %v1754, %v1746
    %v2715 = vpack.c.b16 %v1755, %v1747
    %v2716 = vpack.c.b16 %v1756, %v1748
    %v2717 = vpack.c.b16 %v1757, %v1749
    %v2718 = vpack.c.b16 %v1758, %v1750
    %v2719 = vpack.c.b16 %v1767, %v1759
    %v2720 = vpack.c.b16 %v1768, %v1760
    %v2721 = vpack.c.b16 %v1769, %v1761
    %v2722 = vpack.c.b16 %v1770, %v1762
    %v2723 = vpack.c.b16 %v1771, %v1763
    %v2724 = vpack.c.b16 %v1772, %v1764
    %v2725 = vpack.c.b16 %v1773, %v1765
    %v2726 = vpack.c.b16 %v1774, %v1766
    %v2727 = vpack.c.b16 %v1783, %v1775
    %v2728 = vpack.c.b16 %v1784, %v1776
    %v2729 = vpack.c.b16 %v1785, %v1777
    %v2730 = vpack.c.b16 %v1786, %v1778
    %v2731 = vpack.c.b16 %v1787, %v1779
    %v2732 = vpack.c.b16 %v1788, %v1780
    %v2733 = vpack.c.b16 %v1789, %v1781
    %v2734 = vpack.c.b16 %v1790, %v1782
    %v2735 = vpack.c.b16 %v1799, %v1791
    %v2736 = vpack.c.b16 %v1800, %v1792
    %v2737 = vpack.c.b16 %v1801, %v1793
    %v2738 = vpack.c.b16 %v1802, %v1794
    %v2739 = vpack.c.b16 %v1803, %v1795
    %v2740 = vpack.c.b16 %v1804, %v1796
    %v2741 = vpack.c.b16 %v1805, %v1797
    %v2742 = vpack.c.b16 %v1806, %v1798
    %v2743 = vpack.c.b16 %v1815, %v1807
    %v2744 = vpack.c.b16 %v1816, %v1808
    %v2745 = vpack.c.b16 %v1817, %v1809
    %v2746 = vpack.c.b16 %v1818, %v1810
    %v2747 = vpack.c.b16 %v1819, %v1811
    %v2748 = vpack.c.b16 %v1820, %v1812
    %v2749 = vpack.c.b16 %v1821, %v1813
    %v2750 = vpack.c.b16 %v1822, %v1814
    %v2751 = vpack.c.b16 %v1831, %v1823
    %v2752 = vpack.c.b16 %v1832, %v1824
    %v2753 = vpack.c.b16 %v1833, %v1825
    %v2754 = vpack.c.b16 %v1834, %v1826
    %v2755 = vpack.c.b16 %v1835, %v1827
    %v2756 = vpack.c.b16 %v1836, %v1828
    %v2757 = vpack.c.b16 %v1837, %v1829
    %v2758 = vpack.c.b16 %v1838, %v1830
    %v2759 = vpack.c.b16 %v1847, %v1839
    %v2760 = vpack.c.b16 %v1848, %v1840
    %v2761 = vpack.c.b16 %v1849, %v1841
    %v2762 = vpack.c.b16 %v1850, %v1842
    %v2763 = vpack.c.b16 %v1851, %v1843
    %v2764 = vpack.c.b16 %v1852, %v1844
    %v2765 = vpack.c.b16 %v1853, %v1845
    %v2766 = vpack.c.b16 %v1854, %v1846
    %v2767 = vpack.c.b16 %v1863, %v1855
    %v2768 = vpack.c.b16 %v1864, %v1856
    %v2769 = vpack.c.b16 %v1865, %v1857
    %v2770 = vpack.c.b16 %v1866, %v1858
    %v2771 = vpack.c.b16 %v1867, %v1859
    %v2772 = vpack.c.b16 %v1868, %v1860
    %v2773 = vpack.c.b16 %v1869, %v1861
    %v2774 = vpack.c.b16 %v1870, %v1862
    %v2775 = vpack.c.b16 %v1879, %v1871
    %v2776 = vpack.c.b16 %v1880, %v1872
    %v2777 = vpack.c.b16 %v1881, %v1873
    %v2778 = vpack.c.b16 %v1882, %v1874
    %v2779 = vpack.c.b16 %v1883, %v1875
    %v2780 = vpack.c.b16 %v1884, %v1876
    %v2781 = vpack.c.b16 %v1885, %v1877
    %v2782 = vpack.c.b16 %v1886, %v1878
    %v2783 = vpack.c.b16 %v1895, %v1887
    %v2784 = vpack.c.b16 %v1896, %v1888
    %v2785 = vpack.c.b16 %v1897, %v1889
    %v2786 = vpack.c.b16 %v1898, %v1890
    %v2787 = vpack.c.b16 %v1899, %v1891
    %v2788 = vpack.c.b16 %v1900, %v1892
    %v2789 = vpack.c.b16 %v1901, %v1893
    %v2790 = vpack.c.b16 %v1902, %v1894
    %v2791 = vpack.c.b16 %v1911, %v1903
    %v2792 = vpack.c.b16 %v1912, %v1904
    %v2793 = vpack.c.b16 %v1913, %v1905
    %v2794 = vpack.c.b16 %v1914, %v1906
    %v2795 = vpack.c.b16 %v1915, %v1907
    %v2796 = vpack.c.b16 %v1916, %v1908
    %v2797 = vpack.c.b16 %v1917, %v1909
    %v2798 = vpack.c.b16 %v1918, %v1910
    %v2799 = vpack.c.b16 %v1927, %v1919
    %v2800 = vpack.c.b16 %v1928, %v1920
    %v2801 = vpack.c.b16 %v1929, %v1921
    %v2802 = vpack.c.b16 %v1930, %v1922
    %v2803 = vpack.c.b16 %v1931, %v1923
    %v2804 = vpack.c.b16 %v1932, %v1924
    %v2805 = vpack.c.b16 %v1933, %v1925
    %v2806 = vpack.c.b16 %v1934, %v1926
    %v2807 = vpack.c.b16 %v1943, %v1935
    %v2808 = vpack.c.b16 %v1944, %v1936
    %v2809 = vpack.c.b16 %v1945, %v1937
    %v2810 = vpack.c.b16 %v1946, %v1938
    %v2811 = vpack.c.b16 %v1947, %v1939
    %v2812 = vpack.c.b16 %v1948, %v1940
    %v2813 = vpack.c.b16 %v1949, %v1941
    %v2814 = vpack.c.b16 %v1950, %v1942
    %v2815 = vpack.c.b16 %v1959, %v1951
    %v2816 = vpack.c.b16 %v1960, %v1952
    %v2817 = vpack.c.b16 %v1961, %v1953
    %v2818 = vpack.c.b16 %v1962, %v1954
    %v2819 = vpack.c.b16 %v1963, %v1955
    %v2820 = vpack.c.b16 %v1964, %v1956
    %v2821 = vpack.c.b16 %v1965, %v1957
    %v2822 = vpack.c.b16 %v1966, %v1958
    %v2823 = vpack.c.b16 %v1975, %v1967
    %v2824 = vpack.c.b16 %v1976, %v1968
    %v2825 = vpack.c.b16 %v1977, %v1969
    %v2826 = vpack.c.b16 %v1978, %v1970
    %v2827 = vpack.c.b16 %v1979, %v1971
    %v2828 = vpack.c.b16 %v1980, %v1972
    %v2829 = vpack.c.b16 %v1981, %v1973
    %v2830 = vpack.c.b16 %v1982, %v1974
    %v2831 = vpack.c.b16 %v1991, %v1983
    %v2832 = vpack.c.b16 %v1992, %v1984
    %v2833 = vpack.c.b16 %v1993, %v1985
    %v2834 = vpack.c.b16 %v1994, %v1986
    %v2835 = vpack.c.b16 %v1995, %v1987
    %v2836 = vpack.c.b16 %v1996, %v1988
    %v2837 = vpack.c.b16 %v1997, %v1989
    %v2838 = vpack.c.b16 %v1998, %v1990
    %v2839 = vpack.c.b16 %v2007, %v1999
    %v2840 = vpack.c.b16 %v2008, %v2000
    %v2841 = vpack.c.b16 %v2009, %v2001
    %v2842 = vpack.c.b16 %v2010, %v2002
    %v2843 = vpack.c.b16 %v2011, %v2003
    %v2844 = vpack.c.b16 %v2012, %v2004
    %v2845 = vpack.c.b16 %v2013, %v2005
    %v2846 = vpack.c.b16 %v2014, %v2006
    %v2847 = vpack.c.b16 %v2023, %v2015
    %v2848 = vpack.c.b16 %v2024, %v2016
    %v2849 = vpack.c.b16 %v2025, %v2017
    %v2850 = vpack.c.b16 %v2026, %v2018
    %v2851 = vpack.c.b16 %v2027, %v2019
    %v2852 = vpack.c.b16 %v2028, %v2020
    %v2853 = vpack.c.b16 %v2029, %v2021
    %v2854 = vpack.c.b16 %v2030, %v2022
    %v2855 = vpack.c.b16 %v2039, %v2031
    %v2856 = vpack.c.b16 %v2040, %v2032
    %v2857 = vpack.c.b16 %v2041, %v2033
    %v2858 = vpack.c.b16 %v2042, %v2034
    %v2859 = vpack.c.b16 %v2043, %v2035
    %v2860 = vpack.c.b16 %v2044, %v2036
    %v2861 = vpack.c.b16 %v2045, %v2037
    %v2862 = vpack.c.b16 %v2046, %v2038
    %v2863 = vpack.c.b16 %v2055, %v2047
    %v2864 = vpack.c.b16 %v2056, %v2048
    %v2865 = vpack.c.b16 %v2057, %v2049
    %v2866 = vpack.c.b16 %v2058, %v2050
    %v2867 = vpack.c.b16 %v2059, %v2051
    %v2868 = vpack.c.b16 %v2060, %v2052
    %v2869 = vpack.c.b16 %v2061, %v2053
    %v2870 = vpack.c.b16 %v2062, %v2054
    %v2871 = vpack.c.b16 %v2071, %v2063
    %v2872 = vpack.c.b16 %v2072, %v2064
    %v2873 = vpack.c.b16 %v2073, %v2065
    %v2874 = vpack.c.b16 %v2074, %v2066
    %v2875 = vpack.c.b16 %v2075, %v2067
    %v2876 = vpack.c.b16 %v2076, %v2068
    %v2877 = vpack.c.b16 %v2077, %v2069
    %v2878 = vpack.c.b16 %v2078, %v2070
    %v2879 = vpack.c.b16 %v2087, %v2079
    %v2880 = vpack.c.b16 %v2088, %v2080
    %v2881 = vpack.c.b16 %v2089, %v2081
    %v2882 = vpack.c.b16 %v2090, %v2082
    %v2883 = vpack.c.b16 %v2091, %v2083
    %v2884 = vpack.c.b16 %v2092, %v2084
    %v2885 = vpack.c.b16 %v2093, %v2085
    %v2886 = vpack.c.b16 %v2094, %v2086
    %v2887 = vpack.c.b16 %v2103, %v2095
    %v2888 = vpack.c.b16 %v2104, %v2096
    %v2889 = vpack.c.b16 %v2105, %v2097
    %v2890 = vpack.c.b16 %v2106, %v2098
    %v2891 = vpack.c.b16 %v2107, %v2099
    %v2892 = vpack.c.b16 %v2108, %v2100
    %v2893 = vpack.c.b16 %v2109, %v2101
    %v2894 = vpack.c.b16 %v2110, %v2102
    %v2895 = vpack.c.b16 %v2119, %v2111
    %v2896 = vpack.c.b16 %v2120, %v2112
    %v2897 = vpack.c.b16 %v2121, %v2113
    %v2898 = vpack.c.b16 %v2122, %v2114
    %v2899 = vpack.c.b16 %v2123, %v2115
    %v2900 = vpack.c.b16 %v2124, %v2116
    %v2901 = vpack.c.b16 %v2125, %v2117
    %v2902 = vpack.c.b16 %v2126, %v2118
    %v2903 = vpack.c.b16 %v2135, %v2127
    %v2904 = vpack.c.b16 %v2136, %v2128
    %v2905 = vpack.c.b16 %v2137, %v2129
    %v2906 = vpack.c.b16 %v2138, %v2130
    %v2907 = vpack.c.b16 %v2139, %v2131
    %v2908 = vpack.c.b16 %v2140, %v2132
    %v2909 = vpack.c.b16 %v2141, %v2133
    %v2910 = vpack.c.b16 %v2142, %v2134
    %v2911 = vpack.c.b16 %v2151, %v2143
    %v2912 = vpack.c.b16 %v2152, %v2144
    %v2913 = vpack.c.b16 %v2153, %v2145
    %v2914 = vpack.c.b16 %v2154, %v2146
    %v2915 = vpack.c.b16 %v2155, %v2147
    %v2916 = vpack.c.b16 %v2156, %v2148
    %v2917 = vpack.c.b16 %v2157, %v2149
    %v2918 = vpack.c.b16 %v2158, %v2150
    %v2919 = vpack.c.b16 %v2167, %v2159
    %v2920 = vpack.c.b16 %v2168, %v2160
    %v2921 = vpack.c.b16 %v2169, %v2161
    %v2922 = vpack.c.b16 %v2170, %v2162
    %v2923 = vpack.c.b16 %v2171, %v2163
    %v2924 = vpack.c.b16 %v2172, %v2164
    %v2925 = vpack.c.b16 %v2173, %v2165
    %v2926 = vpack.c.b16 %v2174, %v2166
    %v2927 = vpack.c.b16 %v2183, %v2175
    %v2928 = vpack.c.b16 %v2184, %v2176
    %v2929 = vpack.c.b16 %v2185, %v2177
    %v2930 = vpack.c.b16 %v2186, %v2178
    %v2931 = vpack.c.b16 %v2187, %v2179
    %v2932 = vpack.c.b16 %v2188, %v2180
    %v2933 = vpack.c.b16 %v2189, %v2181
    %v2934 = vpack.c.b16 %v2190, %v2182
    %v2935 = vpack.c.b16 %v2199, %v2191
    %v2936 = vpack.c.b16 %v2200, %v2192
    %v2937 = vpack.c.b16 %v2201, %v2193
    %v2938 = vpack.c.b16 %v2202, %v2194
    %v2939 = vpack.c.b16 %v2203, %v2195
    %v2940 = vpack.c.b16 %v2204, %v2196
    %v2941 = vpack.c.b16 %v2205, %v2197
    %v2942 = vpack.c.b16 %v2206, %v2198
    %v2943 = vpack.c.b16 %v2215, %v2207
    %v2944 = vpack.c.b16 %v2216, %v2208
    %v2945 = vpack.c.b16 %v2217, %v2209
    %v2946 = vpack.c.b16 %v2218, %v2210
    %v2947 = vpack.c.b16 %v2219, %v2211
    %v2948 = vpack.c.b16 %v2220, %v2212
    %v2949 = vpack.c.b16 %v2221, %v2213
    %v2950 = vpack.c.b16 %v2222, %v2214
    %v2951 = vpack.c.b16 %v2231, %v2223
    %v2952 = vpack.c.b16 %v2232, %v2224
    %v2953 = vpack.c.b16 %v2233, %v2225
    %v2954 = vpack.c.b16 %v2234, %v2226
    %v2955 = vpack.c.b16 %v2235, %v2227
    %v2956 = vpack.c.b16 %v2236, %v2228
    %v2957 = vpack.c.b16 %v2237, %v2229
    %v2958 = vpack.c.b16 %v2238, %v2230
    %v2959 = vpack.c.b16 %v2247, %v2239
    %v2960 = vpack.c.b16 %v2248, %v2240
    %v2961 = vpack.c.b16 %v2249, %v2241
    %v2962 = vpack.c.b16 %v2250, %v2242
    %v2963 = vpack.c.b16 %v2251, %v2243
    %v2964 = vpack.c.b16 %v2252, %v2244
    %v2965 = vpack.c.b16 %v2253, %v2245
    %v2966 = vpack.c.b16 %v2254, %v2246
    %v2967 = vpack.c.b16 %v2263, %v2255
    %v2968 = vpack.c.b16 %v2264, %v2256
    %v2969 = vpack.c.b16 %v2265, %v2257
    %v2970 = vpack.c.b16 %v2266, %v2258
    %v2971 = vpack.c.b16 %v2267, %v2259
    %v2972 = vpack.c.b16 %v2268, %v2260
    %v2973 = vpack.c.b16 %v2269, %v2261
    %v2974 = vpack.c.b16 %v2270, %v2262
    %v2975 = vpack.c.b16 %v2279, %v2271
    %v2976 = vpack.c.b16 %v2280, %v2272
    %v2977 = vpack.c.b16 %v2281, %v2273
    %v2978 = vpack.c.b16 %v2282, %v2274
    %v2979 = vpack.c.b16 %v2283, %v2275
    %v2980 = vpack.c.b16 %v2284, %v2276
    %v2981 = vpack.c.b16 %v2285, %v2277
    %v2982 = vpack.c.b16 %v2286, %v2278
    %v2983 = vpack.c.b16 %v2295, %v2287
    %v2984 = vpack.c.b16 %v2296, %v2288
    %v2985 = vpack.c.b16 %v2297, %v2289
    %v2986 = vpack.c.b16 %v2298, %v2290
    %v2987 = vpack.c.b16 %v2299, %v2291
    %v2988 = vpack.c.b16 %v2300, %v2292
    %v2989 = vpack.c.b16 %v2301, %v2293
    %v2990 = vpack.c.b16 %v2302, %v2294
    %v2991 = vpack.c.b16 %v2311, %v2303
    %v2992 = vpack.c.b16 %v2312, %v2304
    %v2993 = vpack.c.b16 %v2313, %v2305
    %v2994 = vpack.c.b16 %v2314, %v2306
    %v2995 = vpack.c.b16 %v2315, %v2307
    %v2996 = vpack.c.b16 %v2316, %v2308
    %v2997 = vpack.c.b16 %v2317, %v2309
    %v2998 = vpack.c.b16 %v2318, %v2310
    %v2999 = vpack.c.b16 %v2327, %v2319
    %v3000 = vpack.c.b16 %v2328, %v2320
    %v3001 = vpack.c.b16 %v2329, %v2321
    %v3002 = vpack.c.b16 %v2330, %v2322
    %v3003 = vpack.c.b16 %v2331, %v2323
    %v3004 = vpack.c.b16 %v2332, %v2324
    %v3005 = vpack.c.b16 %v2333, %v2325
    %v3006 = vpack.c.b16 %v2334, %v2326
    %v3007 = vpack.c.b16 %v2343, %v2335
    %v3008 = vpack.c.b16 %v2344, %v2336
    %v3009 = vpack.c.b16 %v2345, %v2337
    %v3010 = vpack.c.b16 %v2346, %v2338
    %v3011 = vpack.c.b16 %v2347, %v2339
    %v3012 = vpack.c.b16 %v2348, %v2340
    %v3013 = vpack.c.b16 %v2349, %v2341
    %v3014 = vpack.c.b16 %v2350, %v2342
    %v3015 = vpack.c.b16 %v2359, %v2351
    %v3016 = vpack.c.b16 %v2360, %v2352
    %v3017 = vpack.c.b16 %v2361, %v2353
    %v3018 = vpack.c.b16 %v2362, %v2354
    %v3019 = vpack.c.b16 %v2363, %v2355
    %v3020 = vpack.c.b16 %v2364, %v2356
    %v3021 = vpack.c.b16 %v2365, %v2357
    %v3022 = vpack.c.b16 %v2366, %v2358
    %v3023 = vpack.c.b16 %v2375, %v2367
    %v3024 = vpack.c.b16 %v2376, %v2368
    %v3025 = vpack.c.b16 %v2377, %v2369
    %v3026 = vpack.c.b16 %v2378, %v2370
    %v3027 = vpack.c.b16 %v2379, %v2371
    %v3028 = vpack.c.b16 %v2380, %v2372
    %v3029 = vpack.c.b16 %v2381, %v2373
    %v3030 = vpack.c.b16 %v2382, %v2374
    %v3031 = vpack.c.b16 %v2391, %v2383
    %v3032 = vpack.c.b16 %v2392, %v2384
    %v3033 = vpack.c.b16 %v2393, %v2385
    %v3034 = vpack.c.b16 %v2394, %v2386
    %v3035 = vpack.c.b16 %v2395, %v2387
    %v3036 = vpack.c.b16 %v2396, %v2388
    %v3037 = vpack.c.b16 %v2397, %v2389
    %v3038 = vpack.c.b16 %v2398, %v2390
    %v3039 = vpack.c.b16 %v2407, %v2399
    %v3040 = vpack.c.b16 %v2408, %v2400
    %v3041 = vpack.c.b16 %v2409, %v2401
    %v3042 = vpack.c.b16 %v2410, %v2402
    %v3043 = vpack.c.b16 %v2411, %v2403
    %v3044 = vpack.c.b16 %v2412, %v2404
    %v3045 = vpack.c.b16 %v2413, %v2405
    %v3046 = vpack.c.b16 %v2414, %v2406
    %v3047 = vpack.c.b16 %v2423, %v2415
    %v3048 = vpack.c.b16 %v2424, %v2416
    %v3049 = vpack.c.b16 %v2425, %v2417
    %v3050 = vpack.c.b16 %v2426, %v2418
    %v3051 = vpack.c.b16 %v2427, %v2419
    %v3052 = vpack.c.b16 %v2428, %v2420
    %v3053 = vpack.c.b16 %v2429, %v2421
    %v3054 = vpack.c.b16 %v2430, %v2422
    %v3055 = vpack.c.b16 %v2439, %v2431
    %v3056 = vpack.c.b16 %v2440, %v2432
    %v3057 = vpack.c.b16 %v2441, %v2433
    %v3058 = vpack.c.b16 %v2442, %v2434
    %v3059 = vpack.c.b16 %v2443, %v2435
    %v3060 = vpack.c.b16 %v2444, %v2436
    %v3061 = vpack.c.b16 %v2445, %v2437
    %v3062 = vpack.c.b16 %v2446, %v2438
    %v3063 = vpack.c.b16 %v2455, %v2447
    %v3064 = vpack.c.b16 %v2456, %v2448
    %v3065 = vpack.c.b16 %v2457, %v2449
    %v3066 = vpack.c.b16 %v2458, %v2450
    %v3067 = vpack.c.b16 %v2459, %v2451
    %v3068 = vpack.c.b16 %v2460, %v2452
    %v3069 = vpack.c.b16 %v2461, %v2453
    %v3070 = vpack.c.b16 %v2462, %v2454
    %v3071 = vpack.c.b16 %v2471, %v2463
    %v3072 = vpack.c.b16 %v2472, %v2464
    %v3073 = vpack.c.b16 %v2473, %v2465
    %v3074 = vpack.c.b16 %v2474, %v2466
    %v3075 = vpack.c.b16 %v2475, %v2467
    %v3076 = vpack.c.b16 %v2476, %v2468
    %v3077 = vpack.c.b16 %v2477, %v2469
    %v3078 = vpack.c.b16 %v2478, %v2470
    %v3079 = vpack.c.b16 %v2487, %v2479
    %v3080 = vpack.c.b16 %v2488, %v2480
    %v3081 = vpack.c.b16 %v2489, %v2481
    %v3082 = vpack.c.b16 %v2490, %v2482
    %v3083 = vpack.c.b16 %v2491, %v2483
    %v3084 = vpack.c.b16 %v2492, %v2484
    %v3085 = vpack.c.b16 %v2493, %v2485
    %v3086 = vpack.c.b16 %v2494, %v2486
    %v3087 = vpack.c.b16 %v2503, %v2495
    %v3088 = vpack.c.b16 %v2504, %v2496
    %v3089 = vpack.c.b16 %v2505, %v2497
    %v3090 = vpack.c.b16 %v2506, %v2498
    %v3091 = vpack.c.b16 %v2507, %v2499
    %v3092 = vpack.c.b16 %v2508, %v2500
    %v3093 = vpack.c.b16 %v2509, %v2501
    %v3094 = vpack.c.b16 %v2510, %v2502
    %v3095 = vpack.c.b16 %v2519, %v2511
    %v3096 = vpack.c.b16 %v2520, %v2512
    %v3097 = vpack.c.b16 %v2521, %v2513
    %v3098 = vpack.c.b16 %v2522, %v2514
    %v3099 = vpack.c.b16 %v2523, %v2515
    %v3100 = vpack.c.b16 %v2524, %v2516
    %v3101 = vpack.c.b16 %v2525, %v2517
    %v3102 = vpack.c.b16 %v2526, %v2518
    %3679 = vmatpush.bf16.msra.mxu0 %v2583
    %3680 = vmatpush.bf16.msra.mxu0 %v2575
    %3681 = vmatpush.bf16.msra.mxu0 %v2567
    %3682 = vmatpush.bf16.msra.mxu0 %v2559
    %3683 = vmatpush.bf16.msra.mxu0 %v2551
    %3684 = vmatpush.bf16.msra.mxu0 %v2543
    %3685 = vmatpush.bf16.msra.mxu0 %v2535
    %3686 = vmatpush.bf16.msra.mxu0 %v2527
    %3687 = vmatmul.bf16.gmra.mxu0 %v781
    %v3688 = vpop.f32.mrf.mxu0
    %v3689 = vadd.f32 %v737, %v3688
    %v3690 = vpop.f32.mrf.mxu0
    %v3691 = vadd.f32 %v737, %v3690
    %3692 = vdwg.mxu0
    %3693 = vmatpush.bf16.msra.mxu0 %v2647
    %3694 = vmatpush.bf16.msra.mxu0 %v2639
    %3695 = vmatpush.bf16.msra.mxu0 %v2631
    %3696 = vmatpush.bf16.msra.mxu0 %v2623
    %3697 = vmatpush.bf16.msra.mxu0 %v2615
    %3698 = vmatpush.bf16.msra.mxu0 %v2607
    %3699 = vmatpush.bf16.msra.mxu0 %v2599
    %3700 = vmatpush.bf16.msra.mxu0 %v2591
    %3701 = vmatmul.bf16.gmra.mxu0 %v782
    %v3702 = vpop.f32.mrf.mxu0
    %v3703 = vadd.f32 %v3689, %v3702
    %v3704 = vpop.f32.mrf.mxu0
    %v3705 = vadd.f32 %v3691, %v3704
    %3706 = vdwg.mxu0
    %3707 = vmatpush.bf16.msra.mxu0 %v2711
    %3708 = vmatpush.bf16.msra.mxu0 %v2703
    %3709 = vmatpush.bf16.msra.mxu0 %v2695
    %3710 = vmatpush.bf16.msra.mxu0 %v2687
    %3711 = vmatpush.bf16.msra.mxu0 %v2679
    %3712 = vmatpush.bf16.msra.mxu0 %v2671
    %3713 = vmatpush.bf16.msra.mxu0 %v2663
    %3714 = vmatpush.bf16.msra.mxu0 %v2655
    %3715 = vmatmul.bf16.gmra.mxu0 %v783
    %v3716 = vpop.f32.mrf.mxu0
    %v3717 = vadd.f32 %v3703, %v3716
    %v3718 = vpop.f32.mrf.mxu0
    %v3719 = vadd.f32 %v3705, %v3718
    %3720 = vdwg.mxu0
    %3721 = vmatpush.bf16.msra.mxu0 %v2775
    %3722 = vmatpush.bf16.msra.mxu0 %v2767
    %3723 = vmatpush.bf16.msra.mxu0 %v2759
    %3724 = vmatpush.bf16.msra.mxu0 %v2751
    %3725 = vmatpush.bf16.msra.mxu0 %v2743
    %3726 = vmatpush.bf16.msra.mxu0 %v2735
    %3727 = vmatpush.bf16.msra.mxu0 %v2727
    %3728 = vmatpush.bf16.msra.mxu0 %v2719
    %3729 = vmatmul.bf16.gmra.mxu0 %v784
    %v3730 = vpop.f32.mrf.mxu0
    %v3731 = vadd.f32 %v3717, %v3730
    %v3732 = vpop.f32.mrf.mxu0
    %v3733 = vadd.f32 %v3719, %v3732
    %3734 = vdwg.mxu0
    %3735 = vmatpush.bf16.msra.mxu0 %v2839
    %3736 = vmatpush.bf16.msra.mxu0 %v2831
    %3737 = vmatpush.bf16.msra.mxu0 %v2823
    %3738 = vmatpush.bf16.msra.mxu0 %v2815
    %3739 = vmatpush.bf16.msra.mxu0 %v2807
    %3740 = vmatpush.bf16.msra.mxu0 %v2799
    %3741 = vmatpush.bf16.msra.mxu0 %v2791
    %3742 = vmatpush.bf16.msra.mxu0 %v2783
    %3743 = vmatmul.bf16.gmra.mxu0 %v785
    %v3744 = vpop.f32.mrf.mxu0
    %v3745 = vadd.f32 %v3731, %v3744
    %v3746 = vpop.f32.mrf.mxu0
    %v3747 = vadd.f32 %v3733, %v3746
    %3748 = vdwg.mxu0
    %3749 = vmatpush.bf16.msra.mxu0 %v2903
    %3750 = vmatpush.bf16.msra.mxu0 %v2895
    %3751 = vmatpush.bf16.msra.mxu0 %v2887
    %3752 = vmatpush.bf16.msra.mxu0 %v2879
    %3753 = vmatpush.bf16.msra.mxu0 %v2871
    %3754 = vmatpush.bf16.msra.mxu0 %v2863
    %3755 = vmatpush.bf16.msra.mxu0 %v2855
    %3756 = vmatpush.bf16.msra.mxu0 %v2847
    %3757 = vmatmul.bf16.gmra.mxu0 %v786
    %v3758 = vpop.f32.mrf.mxu0
    %v3759 = vadd.f32 %v3745, %v3758
    %v3760 = vpop.f32.mrf.mxu0
    %v3761 = vadd.f32 %v3747, %v3760
    %3762 = vdwg.mxu0
    %3763 = vmatpush.bf16.msra.mxu0 %v2967
    %3764 = vmatpush.bf16.msra.mxu0 %v2959
    %3765 = vmatpush.bf16.msra.mxu0 %v2951
    %3766 = vmatpush.bf16.msra.mxu0 %v2943
    %3767 = vmatpush.bf16.msra.mxu0 %v2935
    %3768 = vmatpush.bf16.msra.mxu0 %v2927
    %3769 = vmatpush.bf16.msra.mxu0 %v2919
    %3770 = vmatpush.bf16.msra.mxu0 %v2911
    %3771 = vmatmul.bf16.gmra.mxu0 %v787
    %v3772 = vpop.f32.mrf.mxu0
    %v3773 = vadd.f32 %v3759, %v3772
    %v3774 = vpop.f32.mrf.mxu0
    %v3775 = vadd.f32 %v3761, %v3774
    %3776 = vdwg.mxu0
    %3777 = vmatpush.bf16.msra.mxu0 %v3031
    %3778 = vmatpush.bf16.msra.mxu0 %v3023
    %3779 = vmatpush.bf16.msra.mxu0 %v3015
    %3780 = vmatpush.bf16.msra.mxu0 %v3007
    %3781 = vmatpush.bf16.msra.mxu0 %v2999
    %3782 = vmatpush.bf16.msra.mxu0 %v2991
    %3783 = vmatpush.bf16.msra.mxu0 %v2983
    %3784 = vmatpush.bf16.msra.mxu0 %v2975
    %3785 = vmatmul.bf16.gmra.mxu0 %v788
    %v3786 = vpop.f32.mrf.mxu0
    %v3787 = vadd.f32 %v3773, %v3786
    %v3788 = vpop.f32.mrf.mxu0
    %v3789 = vadd.f32 %v3775, %v3788
    %3790 = vdwg.mxu0
    %3791 = vmatpush.bf16.msra.mxu0 %v3095
    %3792 = vmatpush.bf16.msra.mxu0 %v3087
    %3793 = vmatpush.bf16.msra.mxu0 %v3079
    %3794 = vmatpush.bf16.msra.mxu0 %v3071
    %3795 = vmatpush.bf16.msra.mxu0 %v3063
    %3796 = vmatpush.bf16.msra.mxu0 %v3055
    %3797 = vmatpush.bf16.msra.mxu0 %v3047
    %3798 = vmatpush.bf16.msra.mxu0 %v3039
    %3799 = vmatmul.bf16.gmra.mxu0 %v789
    %v3800 = vpop.f32.mrf.mxu0
    %v3801 = vadd.f32 %v3787, %v3800
    %v3802 = vpop.f32.mrf.mxu0
    %v3803 = vadd.f32 %v3789, %v3802
    %3804 = vdwg.mxu0
    %3805 = vmatpush.bf16.msra.mxu0 %v2584
    %3806 = vmatpush.bf16.msra.mxu0 %v2576
    %3807 = vmatpush.bf16.msra.mxu0 %v2568
    %3808 = vmatpush.bf16.msra.mxu0 %v2560
    %3809 = vmatpush.bf16.msra.mxu0 %v2552
    %3810 = vmatpush.bf16.msra.mxu0 %v2544
    %3811 = vmatpush.bf16.msra.mxu0 %v2536
    %3812 = vmatpush.bf16.msra.mxu0 %v2528
    %3813 = vmatmul.bf16.gmra.mxu0 %v781
    %v3814 = vpop.f32.mrf.mxu0
    %v3815 = vadd.f32 %v738, %v3814
    %v3816 = vpop.f32.mrf.mxu0
    %v3817 = vadd.f32 %v738, %v3816
    %3818 = vdwg.mxu0
    %3819 = vmatpush.bf16.msra.mxu0 %v2648
    %3820 = vmatpush.bf16.msra.mxu0 %v2640
    %3821 = vmatpush.bf16.msra.mxu0 %v2632
    %3822 = vmatpush.bf16.msra.mxu0 %v2624
    %3823 = vmatpush.bf16.msra.mxu0 %v2616
    %3824 = vmatpush.bf16.msra.mxu0 %v2608
    %3825 = vmatpush.bf16.msra.mxu0 %v2600
    %3826 = vmatpush.bf16.msra.mxu0 %v2592
    %3827 = vmatmul.bf16.gmra.mxu0 %v782
    %v3828 = vpop.f32.mrf.mxu0
    %v3829 = vadd.f32 %v3815, %v3828
    %v3830 = vpop.f32.mrf.mxu0
    %v3831 = vadd.f32 %v3817, %v3830
    %3832 = vdwg.mxu0
    %3833 = vmatpush.bf16.msra.mxu0 %v2712
    %3834 = vmatpush.bf16.msra.mxu0 %v2704
    %3835 = vmatpush.bf16.msra.mxu0 %v2696
    %3836 = vmatpush.bf16.msra.mxu0 %v2688
    %3837 = vmatpush.bf16.msra.mxu0 %v2680
    %3838 = vmatpush.bf16.msra.mxu0 %v2672
    %3839 = vmatpush.bf16.msra.mxu0 %v2664
    %3840 = vmatpush.bf16.msra.mxu0 %v2656
    %3841 = vmatmul.bf16.gmra.mxu0 %v783
    %v3842 = vpop.f32.mrf.mxu0
    %v3843 = vadd.f32 %v3829, %v3842
    %v3844 = vpop.f32.mrf.mxu0
    %v3845 = vadd.f32 %v3831, %v3844
    %3846 = vdwg.mxu0
    %3847 = vmatpush.bf16.msra.mxu0 %v2776
    %3848 = vmatpush.bf16.msra.mxu0 %v2768
    %3849 = vmatpush.bf16.msra.mxu0 %v2760
    %3850 = vmatpush.bf16.msra.mxu0 %v2752
    %3851 = vmatpush.bf16.msra.mxu0 %v2744
    %3852 = vmatpush.bf16.msra.mxu0 %v2736
    %3853 = vmatpush.bf16.msra.mxu0 %v2728
    %3854 = vmatpush.bf16.msra.mxu0 %v2720
    %3855 = vmatmul.bf16.gmra.mxu0 %v784
    %v3856 = vpop.f32.mrf.mxu0
    %v3857 = vadd.f32 %v3843, %v3856
    %v3858 = vpop.f32.mrf.mxu0
    %v3859 = vadd.f32 %v3845, %v3858
    %3860 = vdwg.mxu0
    %3861 = vmatpush.bf16.msra.mxu0 %v2840
    %3862 = vmatpush.bf16.msra.mxu0 %v2832
    %3863 = vmatpush.bf16.msra.mxu0 %v2824
    %3864 = vmatpush.bf16.msra.mxu0 %v2816
    %3865 = vmatpush.bf16.msra.mxu0 %v2808
    %3866 = vmatpush.bf16.msra.mxu0 %v2800
    %3867 = vmatpush.bf16.msra.mxu0 %v2792
    %3868 = vmatpush.bf16.msra.mxu0 %v2784
    %3869 = vmatmul.bf16.gmra.mxu0 %v785
    %v3870 = vpop.f32.mrf.mxu0
    %v3871 = vadd.f32 %v3857, %v3870
    %v3872 = vpop.f32.mrf.mxu0
    %v3873 = vadd.f32 %v3859, %v3872
    %3874 = vdwg.mxu0
    %3875 = vmatpush.bf16.msra.mxu0 %v2904
    %3876 = vmatpush.bf16.msra.mxu0 %v2896
    %3877 = vmatpush.bf16.msra.mxu0 %v2888
    %3878 = vmatpush.bf16.msra.mxu0 %v2880
    %3879 = vmatpush.bf16.msra.mxu0 %v2872
    %3880 = vmatpush.bf16.msra.mxu0 %v2864
    %3881 = vmatpush.bf16.msra.mxu0 %v2856
    %3882 = vmatpush.bf16.msra.mxu0 %v2848
    %3883 = vmatmul.bf16.gmra.mxu0 %v786
    %v3884 = vpop.f32.mrf.mxu0
    %v3885 = vadd.f32 %v3871, %v3884
    %v3886 = vpop.f32.mrf.mxu0
    %v3887 = vadd.f32 %v3873, %v3886
    %3888 = vdwg.mxu0
    %3889 = vmatpush.bf16.msra.mxu0 %v2968
    %3890 = vmatpush.bf16.msra.mxu0 %v2960
    %3891 = vmatpush.bf16.msra.mxu0 %v2952
    %3892 = vmatpush.bf16.msra.mxu0 %v2944
    %3893 = vmatpush.bf16.msra.mxu0 %v2936
    %3894 = vmatpush.bf16.msra.mxu0 %v2928
    %3895 = vmatpush.bf16.msra.mxu0 %v2920
    %3896 = vmatpush.bf16.msra.mxu0 %v2912
    %3897 = vmatmul.bf16.gmra.mxu0 %v787
    %v3898 = vpop.f32.mrf.mxu0
    %v3899 = vadd.f32 %v3885, %v3898
    %v3900 = vpop.f32.mrf.mxu0
    %v3901 = vadd.f32 %v3887, %v3900
    %3902 = vdwg.mxu0
    %3903 = vmatpush.bf16.msra.mxu0 %v3032
    %3904 = vmatpush.bf16.msra.mxu0 %v3024
    %3905 = vmatpush.bf16.msra.mxu0 %v3016
    %3906 = vmatpush.bf16.msra.mxu0 %v3008
    %3907 = vmatpush.bf16.msra.mxu0 %v3000
    %3908 = vmatpush.bf16.msra.mxu0 %v2992
    %3909 = vmatpush.bf16.msra.mxu0 %v2984
    %3910 = vmatpush.bf16.msra.mxu0 %v2976
    %3911 = vmatmul.bf16.gmra.mxu0 %v788
    %v3912 = vpop.f32.mrf.mxu0
    %v3913 = vadd.f32 %v3899, %v3912
    %v3914 = vpop.f32.mrf.mxu0
    %v3915 = vadd.f32 %v3901, %v3914
    %3916 = vdwg.mxu0
    %3917 = vmatpush.bf16.msra.mxu0 %v3096
    %3918 = vmatpush.bf16.msra.mxu0 %v3088
    %3919 = vmatpush.bf16.msra.mxu0 %v3080
    %3920 = vmatpush.bf16.msra.mxu0 %v3072
    %3921 = vmatpush.bf16.msra.mxu0 %v3064
    %3922 = vmatpush.bf16.msra.mxu0 %v3056
    %3923 = vmatpush.bf16.msra.mxu0 %v3048
    %3924 = vmatpush.bf16.msra.mxu0 %v3040
    %3925 = vmatmul.bf16.gmra.mxu0 %v789
    %v3926 = vpop.f32.mrf.mxu0
    %v3927 = vadd.f32 %v3913, %v3926
    %v3928 = vpop.f32.mrf.mxu0
    %v3929 = vadd.f32 %v3915, %v3928
    %3930 = vdwg.mxu0
    %3931 = vmatpush.bf16.msra.mxu0 %v2585
    %3932 = vmatpush.bf16.msra.mxu0 %v2577
    %3933 = vmatpush.bf16.msra.mxu0 %v2569
    %3934 = vmatpush.bf16.msra.mxu0 %v2561
    %3935 = vmatpush.bf16.msra.mxu0 %v2553
    %3936 = vmatpush.bf16.msra.mxu0 %v2545
    %3937 = vmatpush.bf16.msra.mxu0 %v2537
    %3938 = vmatpush.bf16.msra.mxu0 %v2529
    %3939 = vmatmul.bf16.gmra.mxu0 %v781
    %v3940 = vpop.f32.mrf.mxu0
    %v3941 = vadd.f32 %v739, %v3940
    %v3942 = vpop.f32.mrf.mxu0
    %v3943 = vadd.f32 %v739, %v3942
    %3944 = vdwg.mxu0
    %3945 = vmatpush.bf16.msra.mxu0 %v2649
    %3946 = vmatpush.bf16.msra.mxu0 %v2641
    %3947 = vmatpush.bf16.msra.mxu0 %v2633
    %3948 = vmatpush.bf16.msra.mxu0 %v2625
    %3949 = vmatpush.bf16.msra.mxu0 %v2617
    %3950 = vmatpush.bf16.msra.mxu0 %v2609
    %3951 = vmatpush.bf16.msra.mxu0 %v2601
    %3952 = vmatpush.bf16.msra.mxu0 %v2593
    %3953 = vmatmul.bf16.gmra.mxu0 %v782
    %v3954 = vpop.f32.mrf.mxu0
    %v3955 = vadd.f32 %v3941, %v3954
    %v3956 = vpop.f32.mrf.mxu0
    %v3957 = vadd.f32 %v3943, %v3956
    %3958 = vdwg.mxu0
    %3959 = vmatpush.bf16.msra.mxu0 %v2713
    %3960 = vmatpush.bf16.msra.mxu0 %v2705
    %3961 = vmatpush.bf16.msra.mxu0 %v2697
    %3962 = vmatpush.bf16.msra.mxu0 %v2689
    %3963 = vmatpush.bf16.msra.mxu0 %v2681
    %3964 = vmatpush.bf16.msra.mxu0 %v2673
    %3965 = vmatpush.bf16.msra.mxu0 %v2665
    %3966 = vmatpush.bf16.msra.mxu0 %v2657
    %3967 = vmatmul.bf16.gmra.mxu0 %v783
    %v3968 = vpop.f32.mrf.mxu0
    %v3969 = vadd.f32 %v3955, %v3968
    %v3970 = vpop.f32.mrf.mxu0
    %v3971 = vadd.f32 %v3957, %v3970
    %3972 = vdwg.mxu0
    %3973 = vmatpush.bf16.msra.mxu0 %v2777
    %3974 = vmatpush.bf16.msra.mxu0 %v2769
    %3975 = vmatpush.bf16.msra.mxu0 %v2761
    %3976 = vmatpush.bf16.msra.mxu0 %v2753
    %3977 = vmatpush.bf16.msra.mxu0 %v2745
    %3978 = vmatpush.bf16.msra.mxu0 %v2737
    %3979 = vmatpush.bf16.msra.mxu0 %v2729
    %3980 = vmatpush.bf16.msra.mxu0 %v2721
    %3981 = vmatmul.bf16.gmra.mxu0 %v784
    %v3982 = vpop.f32.mrf.mxu0
    %v3983 = vadd.f32 %v3969, %v3982
    %v3984 = vpop.f32.mrf.mxu0
    %v3985 = vadd.f32 %v3971, %v3984
    %3986 = vdwg.mxu0
    %3987 = vmatpush.bf16.msra.mxu0 %v2841
    %3988 = vmatpush.bf16.msra.mxu0 %v2833
    %3989 = vmatpush.bf16.msra.mxu0 %v2825
    %3990 = vmatpush.bf16.msra.mxu0 %v2817
    %3991 = vmatpush.bf16.msra.mxu0 %v2809
    %3992 = vmatpush.bf16.msra.mxu0 %v2801
    %3993 = vmatpush.bf16.msra.mxu0 %v2793
    %3994 = vmatpush.bf16.msra.mxu0 %v2785
    %3995 = vmatmul.bf16.gmra.mxu0 %v785
    %v3996 = vpop.f32.mrf.mxu0
    %v3997 = vadd.f32 %v3983, %v3996
    %v3998 = vpop.f32.mrf.mxu0
    %v3999 = vadd.f32 %v3985, %v3998
    %4000 = vdwg.mxu0
    %4001 = vmatpush.bf16.msra.mxu0 %v2905
    %4002 = vmatpush.bf16.msra.mxu0 %v2897
    %4003 = vmatpush.bf16.msra.mxu0 %v2889
    %4004 = vmatpush.bf16.msra.mxu0 %v2881
    %4005 = vmatpush.bf16.msra.mxu0 %v2873
    %4006 = vmatpush.bf16.msra.mxu0 %v2865
    %4007 = vmatpush.bf16.msra.mxu0 %v2857
    %4008 = vmatpush.bf16.msra.mxu0 %v2849
    %4009 = vmatmul.bf16.gmra.mxu0 %v786
    %v4010 = vpop.f32.mrf.mxu0
    %v4011 = vadd.f32 %v3997, %v4010
    %v4012 = vpop.f32.mrf.mxu0
    %v4013 = vadd.f32 %v3999, %v4012
    %4014 = vdwg.mxu0
    %4015 = vmatpush.bf16.msra.mxu0 %v2969
    %4016 = vmatpush.bf16.msra.mxu0 %v2961
    %4017 = vmatpush.bf16.msra.mxu0 %v2953
    %4018 = vmatpush.bf16.msra.mxu0 %v2945
    %4019 = vmatpush.bf16.msra.mxu0 %v2937
    %4020 = vmatpush.bf16.msra.mxu0 %v2929
    %4021 = vmatpush.bf16.msra.mxu0 %v2921
    %4022 = vmatpush.bf16.msra.mxu0 %v2913
    %4023 = vmatmul.bf16.gmra.mxu0 %v787
    %v4024 = vpop.f32.mrf.mxu0
    %v4025 = vadd.f32 %v4011, %v4024
    %v4026 = vpop.f32.mrf.mxu0
    %v4027 = vadd.f32 %v4013, %v4026
    %4028 = vdwg.mxu0
    %4029 = vmatpush.bf16.msra.mxu0 %v3033
    %4030 = vmatpush.bf16.msra.mxu0 %v3025
    %4031 = vmatpush.bf16.msra.mxu0 %v3017
    %4032 = vmatpush.bf16.msra.mxu0 %v3009
    %4033 = vmatpush.bf16.msra.mxu0 %v3001
    %4034 = vmatpush.bf16.msra.mxu0 %v2993
    %4035 = vmatpush.bf16.msra.mxu0 %v2985
    %4036 = vmatpush.bf16.msra.mxu0 %v2977
    %4037 = vmatmul.bf16.gmra.mxu0 %v788
    %v4038 = vpop.f32.mrf.mxu0
    %v4039 = vadd.f32 %v4025, %v4038
    %v4040 = vpop.f32.mrf.mxu0
    %v4041 = vadd.f32 %v4027, %v4040
    %4042 = vdwg.mxu0
    %4043 = vmatpush.bf16.msra.mxu0 %v3097
    %4044 = vmatpush.bf16.msra.mxu0 %v3089
    %4045 = vmatpush.bf16.msra.mxu0 %v3081
    %4046 = vmatpush.bf16.msra.mxu0 %v3073
    %4047 = vmatpush.bf16.msra.mxu0 %v3065
    %4048 = vmatpush.bf16.msra.mxu0 %v3057
    %4049 = vmatpush.bf16.msra.mxu0 %v3049
    %4050 = vmatpush.bf16.msra.mxu0 %v3041
    %4051 = vmatmul.bf16.gmra.mxu0 %v789
    %v4052 = vpop.f32.mrf.mxu0
    %v4053 = vadd.f32 %v4039, %v4052
    %v4054 = vpop.f32.mrf.mxu0
    %v4055 = vadd.f32 %v4041, %v4054
    %4056 = vdwg.mxu0
    %4057 = vmatpush.bf16.msra.mxu0 %v2586
    %4058 = vmatpush.bf16.msra.mxu0 %v2578
    %4059 = vmatpush.bf16.msra.mxu0 %v2570
    %4060 = vmatpush.bf16.msra.mxu0 %v2562
    %4061 = vmatpush.bf16.msra.mxu0 %v2554
    %4062 = vmatpush.bf16.msra.mxu0 %v2546
    %4063 = vmatpush.bf16.msra.mxu0 %v2538
    %4064 = vmatpush.bf16.msra.mxu0 %v2530
    %4065 = vmatmul.bf16.gmra.mxu0 %v781
    %v4066 = vpop.f32.mrf.mxu0
    %v4067 = vadd.f32 %v740, %v4066
    %v4068 = vpop.f32.mrf.mxu0
    %v4069 = vadd.f32 %v740, %v4068
    %4070 = vdwg.mxu0
    %4071 = vmatpush.bf16.msra.mxu0 %v2650
    %4072 = vmatpush.bf16.msra.mxu0 %v2642
    %4073 = vmatpush.bf16.msra.mxu0 %v2634
    %4074 = vmatpush.bf16.msra.mxu0 %v2626
    %4075 = vmatpush.bf16.msra.mxu0 %v2618
    %4076 = vmatpush.bf16.msra.mxu0 %v2610
    %4077 = vmatpush.bf16.msra.mxu0 %v2602
    %4078 = vmatpush.bf16.msra.mxu0 %v2594
    %4079 = vmatmul.bf16.gmra.mxu0 %v782
    %v4080 = vpop.f32.mrf.mxu0
    %v4081 = vadd.f32 %v4067, %v4080
    %v4082 = vpop.f32.mrf.mxu0
    %v4083 = vadd.f32 %v4069, %v4082
    %4084 = vdwg.mxu0
    %4085 = vmatpush.bf16.msra.mxu0 %v2714
    %4086 = vmatpush.bf16.msra.mxu0 %v2706
    %4087 = vmatpush.bf16.msra.mxu0 %v2698
    %4088 = vmatpush.bf16.msra.mxu0 %v2690
    %4089 = vmatpush.bf16.msra.mxu0 %v2682
    %4090 = vmatpush.bf16.msra.mxu0 %v2674
    %4091 = vmatpush.bf16.msra.mxu0 %v2666
    %4092 = vmatpush.bf16.msra.mxu0 %v2658
    %4093 = vmatmul.bf16.gmra.mxu0 %v783
    %v4094 = vpop.f32.mrf.mxu0
    %v4095 = vadd.f32 %v4081, %v4094
    %v4096 = vpop.f32.mrf.mxu0
    %v4097 = vadd.f32 %v4083, %v4096
    %4098 = vdwg.mxu0
    %4099 = vmatpush.bf16.msra.mxu0 %v2778
    %4100 = vmatpush.bf16.msra.mxu0 %v2770
    %4101 = vmatpush.bf16.msra.mxu0 %v2762
    %4102 = vmatpush.bf16.msra.mxu0 %v2754
    %4103 = vmatpush.bf16.msra.mxu0 %v2746
    %4104 = vmatpush.bf16.msra.mxu0 %v2738
    %4105 = vmatpush.bf16.msra.mxu0 %v2730
    %4106 = vmatpush.bf16.msra.mxu0 %v2722
    %4107 = vmatmul.bf16.gmra.mxu0 %v784
    %v4108 = vpop.f32.mrf.mxu0
    %v4109 = vadd.f32 %v4095, %v4108
    %v4110 = vpop.f32.mrf.mxu0
    %v4111 = vadd.f32 %v4097, %v4110
    %4112 = vdwg.mxu0
    %4113 = vmatpush.bf16.msra.mxu0 %v2842
    %4114 = vmatpush.bf16.msra.mxu0 %v2834
    %4115 = vmatpush.bf16.msra.mxu0 %v2826
    %4116 = vmatpush.bf16.msra.mxu0 %v2818
    %4117 = vmatpush.bf16.msra.mxu0 %v2810
    %4118 = vmatpush.bf16.msra.mxu0 %v2802
    %4119 = vmatpush.bf16.msra.mxu0 %v2794
    %4120 = vmatpush.bf16.msra.mxu0 %v2786
    %4121 = vmatmul.bf16.gmra.mxu0 %v785
    %v4122 = vpop.f32.mrf.mxu0
    %v4123 = vadd.f32 %v4109, %v4122
    %v4124 = vpop.f32.mrf.mxu0
    %v4125 = vadd.f32 %v4111, %v4124
    %4126 = vdwg.mxu0
    %4127 = vmatpush.bf16.msra.mxu0 %v2906
    %4128 = vmatpush.bf16.msra.mxu0 %v2898
    %4129 = vmatpush.bf16.msra.mxu0 %v2890
    %4130 = vmatpush.bf16.msra.mxu0 %v2882
    %4131 = vmatpush.bf16.msra.mxu0 %v2874
    %4132 = vmatpush.bf16.msra.mxu0 %v2866
    %4133 = vmatpush.bf16.msra.mxu0 %v2858
    %4134 = vmatpush.bf16.msra.mxu0 %v2850
    %4135 = vmatmul.bf16.gmra.mxu0 %v786
    %v4136 = vpop.f32.mrf.mxu0
    %v4137 = vadd.f32 %v4123, %v4136
    %v4138 = vpop.f32.mrf.mxu0
    %v4139 = vadd.f32 %v4125, %v4138
    %4140 = vdwg.mxu0
    %4141 = vmatpush.bf16.msra.mxu0 %v2970
    %4142 = vmatpush.bf16.msra.mxu0 %v2962
    %4143 = vmatpush.bf16.msra.mxu0 %v2954
    %4144 = vmatpush.bf16.msra.mxu0 %v2946
    %4145 = vmatpush.bf16.msra.mxu0 %v2938
    %4146 = vmatpush.bf16.msra.mxu0 %v2930
    %4147 = vmatpush.bf16.msra.mxu0 %v2922
    %4148 = vmatpush.bf16.msra.mxu0 %v2914
    %4149 = vmatmul.bf16.gmra.mxu0 %v787
    %v4150 = vpop.f32.mrf.mxu0
    %v4151 = vadd.f32 %v4137, %v4150
    %v4152 = vpop.f32.mrf.mxu0
    %v4153 = vadd.f32 %v4139, %v4152
    %4154 = vdwg.mxu0
    %4155 = vmatpush.bf16.msra.mxu0 %v3034
    %4156 = vmatpush.bf16.msra.mxu0 %v3026
    %4157 = vmatpush.bf16.msra.mxu0 %v3018
    %4158 = vmatpush.bf16.msra.mxu0 %v3010
    %4159 = vmatpush.bf16.msra.mxu0 %v3002
    %4160 = vmatpush.bf16.msra.mxu0 %v2994
    %4161 = vmatpush.bf16.msra.mxu0 %v2986
    %4162 = vmatpush.bf16.msra.mxu0 %v2978
    %4163 = vmatmul.bf16.gmra.mxu0 %v788
    %v4164 = vpop.f32.mrf.mxu0
    %v4165 = vadd.f32 %v4151, %v4164
    %v4166 = vpop.f32.mrf.mxu0
    %v4167 = vadd.f32 %v4153, %v4166
    %4168 = vdwg.mxu0
    %4169 = vmatpush.bf16.msra.mxu0 %v3098
    %4170 = vmatpush.bf16.msra.mxu0 %v3090
    %4171 = vmatpush.bf16.msra.mxu0 %v3082
    %4172 = vmatpush.bf16.msra.mxu0 %v3074
    %4173 = vmatpush.bf16.msra.mxu0 %v3066
    %4174 = vmatpush.bf16.msra.mxu0 %v3058
    %4175 = vmatpush.bf16.msra.mxu0 %v3050
    %4176 = vmatpush.bf16.msra.mxu0 %v3042
    %4177 = vmatmul.bf16.gmra.mxu0 %v789
    %v4178 = vpop.f32.mrf.mxu0
    %v4179 = vadd.f32 %v4165, %v4178
    %v4180 = vpop.f32.mrf.mxu0
    %v4181 = vadd.f32 %v4167, %v4180
    %4182 = vdwg.mxu0
    %4183 = vmatpush.bf16.msra.mxu0 %v2587
    %4184 = vmatpush.bf16.msra.mxu0 %v2579
    %4185 = vmatpush.bf16.msra.mxu0 %v2571
    %4186 = vmatpush.bf16.msra.mxu0 %v2563
    %4187 = vmatpush.bf16.msra.mxu0 %v2555
    %4188 = vmatpush.bf16.msra.mxu0 %v2547
    %4189 = vmatpush.bf16.msra.mxu0 %v2539
    %4190 = vmatpush.bf16.msra.mxu0 %v2531
    %4191 = vmatmul.bf16.gmra.mxu0 %v781
    %v4192 = vpop.f32.mrf.mxu0
    %v4193 = vadd.f32 %v741, %v4192
    %v4194 = vpop.f32.mrf.mxu0
    %v4195 = vadd.f32 %v741, %v4194
    %4196 = vdwg.mxu0
    %4197 = vmatpush.bf16.msra.mxu0 %v2651
    %4198 = vmatpush.bf16.msra.mxu0 %v2643
    %4199 = vmatpush.bf16.msra.mxu0 %v2635
    %4200 = vmatpush.bf16.msra.mxu0 %v2627
    %4201 = vmatpush.bf16.msra.mxu0 %v2619
    %4202 = vmatpush.bf16.msra.mxu0 %v2611
    %4203 = vmatpush.bf16.msra.mxu0 %v2603
    %4204 = vmatpush.bf16.msra.mxu0 %v2595
    %4205 = vmatmul.bf16.gmra.mxu0 %v782
    %v4206 = vpop.f32.mrf.mxu0
    %v4207 = vadd.f32 %v4193, %v4206
    %v4208 = vpop.f32.mrf.mxu0
    %v4209 = vadd.f32 %v4195, %v4208
    %4210 = vdwg.mxu0
    %4211 = vmatpush.bf16.msra.mxu0 %v2715
    %4212 = vmatpush.bf16.msra.mxu0 %v2707
    %4213 = vmatpush.bf16.msra.mxu0 %v2699
    %4214 = vmatpush.bf16.msra.mxu0 %v2691
    %4215 = vmatpush.bf16.msra.mxu0 %v2683
    %4216 = vmatpush.bf16.msra.mxu0 %v2675
    %4217 = vmatpush.bf16.msra.mxu0 %v2667
    %4218 = vmatpush.bf16.msra.mxu0 %v2659
    %4219 = vmatmul.bf16.gmra.mxu0 %v783
    %v4220 = vpop.f32.mrf.mxu0
    %v4221 = vadd.f32 %v4207, %v4220
    %v4222 = vpop.f32.mrf.mxu0
    %v4223 = vadd.f32 %v4209, %v4222
    %4224 = vdwg.mxu0
    %4225 = vmatpush.bf16.msra.mxu0 %v2779
    %4226 = vmatpush.bf16.msra.mxu0 %v2771
    %4227 = vmatpush.bf16.msra.mxu0 %v2763
    %4228 = vmatpush.bf16.msra.mxu0 %v2755
    %4229 = vmatpush.bf16.msra.mxu0 %v2747
    %4230 = vmatpush.bf16.msra.mxu0 %v2739
    %4231 = vmatpush.bf16.msra.mxu0 %v2731
    %4232 = vmatpush.bf16.msra.mxu0 %v2723
    %4233 = vmatmul.bf16.gmra.mxu0 %v784
    %v4234 = vpop.f32.mrf.mxu0
    %v4235 = vadd.f32 %v4221, %v4234
    %v4236 = vpop.f32.mrf.mxu0
    %v4237 = vadd.f32 %v4223, %v4236
    %4238 = vdwg.mxu0
    %4239 = vmatpush.bf16.msra.mxu0 %v2843
    %4240 = vmatpush.bf16.msra.mxu0 %v2835
    %4241 = vmatpush.bf16.msra.mxu0 %v2827
    %4242 = vmatpush.bf16.msra.mxu0 %v2819
    %4243 = vmatpush.bf16.msra.mxu0 %v2811
    %4244 = vmatpush.bf16.msra.mxu0 %v2803
    %4245 = vmatpush.bf16.msra.mxu0 %v2795
    %4246 = vmatpush.bf16.msra.mxu0 %v2787
    %4247 = vmatmul.bf16.gmra.mxu0 %v785
    %v4248 = vpop.f32.mrf.mxu0
    %v4249 = vadd.f32 %v4235, %v4248
    %v4250 = vpop.f32.mrf.mxu0
    %v4251 = vadd.f32 %v4237, %v4250
    %4252 = vdwg.mxu0
    %4253 = vmatpush.bf16.msra.mxu0 %v2907
    %4254 = vmatpush.bf16.msra.mxu0 %v2899
    %4255 = vmatpush.bf16.msra.mxu0 %v2891
    %4256 = vmatpush.bf16.msra.mxu0 %v2883
    %4257 = vmatpush.bf16.msra.mxu0 %v2875
    %4258 = vmatpush.bf16.msra.mxu0 %v2867
    %4259 = vmatpush.bf16.msra.mxu0 %v2859
    %4260 = vmatpush.bf16.msra.mxu0 %v2851
    %4261 = vmatmul.bf16.gmra.mxu0 %v786
    %v4262 = vpop.f32.mrf.mxu0
    %v4263 = vadd.f32 %v4249, %v4262
    %v4264 = vpop.f32.mrf.mxu0
    %v4265 = vadd.f32 %v4251, %v4264
    %4266 = vdwg.mxu0
    %4267 = vmatpush.bf16.msra.mxu0 %v2971
    %4268 = vmatpush.bf16.msra.mxu0 %v2963
    %4269 = vmatpush.bf16.msra.mxu0 %v2955
    %4270 = vmatpush.bf16.msra.mxu0 %v2947
    %4271 = vmatpush.bf16.msra.mxu0 %v2939
    %4272 = vmatpush.bf16.msra.mxu0 %v2931
    %4273 = vmatpush.bf16.msra.mxu0 %v2923
    %4274 = vmatpush.bf16.msra.mxu0 %v2915
    %4275 = vmatmul.bf16.gmra.mxu0 %v787
    %v4276 = vpop.f32.mrf.mxu0
    %v4277 = vadd.f32 %v4263, %v4276
    %v4278 = vpop.f32.mrf.mxu0
    %v4279 = vadd.f32 %v4265, %v4278
    %4280 = vdwg.mxu0
    %4281 = vmatpush.bf16.msra.mxu0 %v3035
    %4282 = vmatpush.bf16.msra.mxu0 %v3027
    %4283 = vmatpush.bf16.msra.mxu0 %v3019
    %4284 = vmatpush.bf16.msra.mxu0 %v3011
    %4285 = vmatpush.bf16.msra.mxu0 %v3003
    %4286 = vmatpush.bf16.msra.mxu0 %v2995
    %4287 = vmatpush.bf16.msra.mxu0 %v2987
    %4288 = vmatpush.bf16.msra.mxu0 %v2979
    %4289 = vmatmul.bf16.gmra.mxu0 %v788
    %v4290 = vpop.f32.mrf.mxu0
    %v4291 = vadd.f32 %v4277, %v4290
    %v4292 = vpop.f32.mrf.mxu0
    %v4293 = vadd.f32 %v4279, %v4292
    %4294 = vdwg.mxu0
    %4295 = vmatpush.bf16.msra.mxu0 %v3099
    %4296 = vmatpush.bf16.msra.mxu0 %v3091
    %4297 = vmatpush.bf16.msra.mxu0 %v3083
    %4298 = vmatpush.bf16.msra.mxu0 %v3075
    %4299 = vmatpush.bf16.msra.mxu0 %v3067
    %4300 = vmatpush.bf16.msra.mxu0 %v3059
    %4301 = vmatpush.bf16.msra.mxu0 %v3051
    %4302 = vmatpush.bf16.msra.mxu0 %v3043
    %4303 = vmatmul.bf16.gmra.mxu0 %v789
    %v4304 = vpop.f32.mrf.mxu0
    %v4305 = vadd.f32 %v4291, %v4304
    %v4306 = vpop.f32.mrf.mxu0
    %v4307 = vadd.f32 %v4293, %v4306
    %4308 = vdwg.mxu0
    %4309 = vmatpush.bf16.msra.mxu0 %v2588
    %4310 = vmatpush.bf16.msra.mxu0 %v2580
    %4311 = vmatpush.bf16.msra.mxu0 %v2572
    %4312 = vmatpush.bf16.msra.mxu0 %v2564
    %4313 = vmatpush.bf16.msra.mxu0 %v2556
    %4314 = vmatpush.bf16.msra.mxu0 %v2548
    %4315 = vmatpush.bf16.msra.mxu0 %v2540
    %4316 = vmatpush.bf16.msra.mxu0 %v2532
    %4317 = vmatmul.bf16.gmra.mxu0 %v781
    %v4318 = vpop.f32.mrf.mxu0
    %v4319 = vadd.f32 %v742, %v4318
    %v4320 = vpop.f32.mrf.mxu0
    %v4321 = vadd.f32 %v742, %v4320
    %4322 = vdwg.mxu0
    %4323 = vmatpush.bf16.msra.mxu0 %v2652
    %4324 = vmatpush.bf16.msra.mxu0 %v2644
    %4325 = vmatpush.bf16.msra.mxu0 %v2636
    %4326 = vmatpush.bf16.msra.mxu0 %v2628
    %4327 = vmatpush.bf16.msra.mxu0 %v2620
    %4328 = vmatpush.bf16.msra.mxu0 %v2612
    %4329 = vmatpush.bf16.msra.mxu0 %v2604
    %4330 = vmatpush.bf16.msra.mxu0 %v2596
    %4331 = vmatmul.bf16.gmra.mxu0 %v782
    %v4332 = vpop.f32.mrf.mxu0
    %v4333 = vadd.f32 %v4319, %v4332
    %v4334 = vpop.f32.mrf.mxu0
    %v4335 = vadd.f32 %v4321, %v4334
    %4336 = vdwg.mxu0
    %4337 = vmatpush.bf16.msra.mxu0 %v2716
    %4338 = vmatpush.bf16.msra.mxu0 %v2708
    %4339 = vmatpush.bf16.msra.mxu0 %v2700
    %4340 = vmatpush.bf16.msra.mxu0 %v2692
    %4341 = vmatpush.bf16.msra.mxu0 %v2684
    %4342 = vmatpush.bf16.msra.mxu0 %v2676
    %4343 = vmatpush.bf16.msra.mxu0 %v2668
    %4344 = vmatpush.bf16.msra.mxu0 %v2660
    %4345 = vmatmul.bf16.gmra.mxu0 %v783
    %v4346 = vpop.f32.mrf.mxu0
    %v4347 = vadd.f32 %v4333, %v4346
    %v4348 = vpop.f32.mrf.mxu0
    %v4349 = vadd.f32 %v4335, %v4348
    %4350 = vdwg.mxu0
    %4351 = vmatpush.bf16.msra.mxu0 %v2780
    %4352 = vmatpush.bf16.msra.mxu0 %v2772
    %4353 = vmatpush.bf16.msra.mxu0 %v2764
    %4354 = vmatpush.bf16.msra.mxu0 %v2756
    %4355 = vmatpush.bf16.msra.mxu0 %v2748
    %4356 = vmatpush.bf16.msra.mxu0 %v2740
    %4357 = vmatpush.bf16.msra.mxu0 %v2732
    %4358 = vmatpush.bf16.msra.mxu0 %v2724
    %4359 = vmatmul.bf16.gmra.mxu0 %v784
    %v4360 = vpop.f32.mrf.mxu0
    %v4361 = vadd.f32 %v4347, %v4360
    %v4362 = vpop.f32.mrf.mxu0
    %v4363 = vadd.f32 %v4349, %v4362
    %4364 = vdwg.mxu0
    %4365 = vmatpush.bf16.msra.mxu0 %v2844
    %4366 = vmatpush.bf16.msra.mxu0 %v2836
    %4367 = vmatpush.bf16.msra.mxu0 %v2828
    %4368 = vmatpush.bf16.msra.mxu0 %v2820
    %4369 = vmatpush.bf16.msra.mxu0 %v2812
    %4370 = vmatpush.bf16.msra.mxu0 %v2804
    %4371 = vmatpush.bf16.msra.mxu0 %v2796
    %4372 = vmatpush.bf16.msra.mxu0 %v2788
    %4373 = vmatmul.bf16.gmra.mxu0 %v785
    %v4374 = vpop.f32.mrf.mxu0
    %v4375 = vadd.f32 %v4361, %v4374
    %v4376 = vpop.f32.mrf.mxu0
    %v4377 = vadd.f32 %v4363, %v4376
    %4378 = vdwg.mxu0
    %4379 = vmatpush.bf16.msra.mxu0 %v2908
    %4380 = vmatpush.bf16.msra.mxu0 %v2900
    %4381 = vmatpush.bf16.msra.mxu0 %v2892
    %4382 = vmatpush.bf16.msra.mxu0 %v2884
    %4383 = vmatpush.bf16.msra.mxu0 %v2876
    %4384 = vmatpush.bf16.msra.mxu0 %v2868
    %4385 = vmatpush.bf16.msra.mxu0 %v2860
    %4386 = vmatpush.bf16.msra.mxu0 %v2852
    %4387 = vmatmul.bf16.gmra.mxu0 %v786
    %v4388 = vpop.f32.mrf.mxu0
    %v4389 = vadd.f32 %v4375, %v4388
    %v4390 = vpop.f32.mrf.mxu0
    %v4391 = vadd.f32 %v4377, %v4390
    %4392 = vdwg.mxu0
    %4393 = vmatpush.bf16.msra.mxu0 %v2972
    %4394 = vmatpush.bf16.msra.mxu0 %v2964
    %4395 = vmatpush.bf16.msra.mxu0 %v2956
    %4396 = vmatpush.bf16.msra.mxu0 %v2948
    %4397 = vmatpush.bf16.msra.mxu0 %v2940
    %4398 = vmatpush.bf16.msra.mxu0 %v2932
    %4399 = vmatpush.bf16.msra.mxu0 %v2924
    %4400 = vmatpush.bf16.msra.mxu0 %v2916
    %4401 = vmatmul.bf16.gmra.mxu0 %v787
    %v4402 = vpop.f32.mrf.mxu0
    %v4403 = vadd.f32 %v4389, %v4402
    %v4404 = vpop.f32.mrf.mxu0
    %v4405 = vadd.f32 %v4391, %v4404
    %4406 = vdwg.mxu0
    %4407 = vmatpush.bf16.msra.mxu0 %v3036
    %4408 = vmatpush.bf16.msra.mxu0 %v3028
    %4409 = vmatpush.bf16.msra.mxu0 %v3020
    %4410 = vmatpush.bf16.msra.mxu0 %v3012
    %4411 = vmatpush.bf16.msra.mxu0 %v3004
    %4412 = vmatpush.bf16.msra.mxu0 %v2996
    %4413 = vmatpush.bf16.msra.mxu0 %v2988
    %4414 = vmatpush.bf16.msra.mxu0 %v2980
    %4415 = vmatmul.bf16.gmra.mxu0 %v788
    %v4416 = vpop.f32.mrf.mxu0
    %v4417 = vadd.f32 %v4403, %v4416
    %v4418 = vpop.f32.mrf.mxu0
    %v4419 = vadd.f32 %v4405, %v4418
    %4420 = vdwg.mxu0
    %4421 = vmatpush.bf16.msra.mxu0 %v3100
    %4422 = vmatpush.bf16.msra.mxu0 %v3092
    %4423 = vmatpush.bf16.msra.mxu0 %v3084
    %4424 = vmatpush.bf16.msra.mxu0 %v3076
    %4425 = vmatpush.bf16.msra.mxu0 %v3068
    %4426 = vmatpush.bf16.msra.mxu0 %v3060
    %4427 = vmatpush.bf16.msra.mxu0 %v3052
    %4428 = vmatpush.bf16.msra.mxu0 %v3044
    %4429 = vmatmul.bf16.gmra.mxu0 %v789
    %v4430 = vpop.f32.mrf.mxu0
    %v4431 = vadd.f32 %v4417, %v4430
    %v4432 = vpop.f32.mrf.mxu0
    %v4433 = vadd.f32 %v4419, %v4432
    %4434 = vdwg.mxu0
    %4435 = vmatpush.bf16.msra.mxu0 %v2589
    %4436 = vmatpush.bf16.msra.mxu0 %v2581
    %4437 = vmatpush.bf16.msra.mxu0 %v2573
    %4438 = vmatpush.bf16.msra.mxu0 %v2565
    %4439 = vmatpush.bf16.msra.mxu0 %v2557
    %4440 = vmatpush.bf16.msra.mxu0 %v2549
    %4441 = vmatpush.bf16.msra.mxu0 %v2541
    %4442 = vmatpush.bf16.msra.mxu0 %v2533
    %4443 = vmatmul.bf16.gmra.mxu0 %v781
    %v4444 = vpop.f32.mrf.mxu0
    %v4445 = vadd.f32 %v743, %v4444
    %v4446 = vpop.f32.mrf.mxu0
    %v4447 = vadd.f32 %v743, %v4446
    %4448 = vdwg.mxu0
    %4449 = vmatpush.bf16.msra.mxu0 %v2653
    %4450 = vmatpush.bf16.msra.mxu0 %v2645
    %4451 = vmatpush.bf16.msra.mxu0 %v2637
    %4452 = vmatpush.bf16.msra.mxu0 %v2629
    %4453 = vmatpush.bf16.msra.mxu0 %v2621
    %4454 = vmatpush.bf16.msra.mxu0 %v2613
    %4455 = vmatpush.bf16.msra.mxu0 %v2605
    %4456 = vmatpush.bf16.msra.mxu0 %v2597
    %4457 = vmatmul.bf16.gmra.mxu0 %v782
    %v4458 = vpop.f32.mrf.mxu0
    %v4459 = vadd.f32 %v4445, %v4458
    %v4460 = vpop.f32.mrf.mxu0
    %v4461 = vadd.f32 %v4447, %v4460
    %4462 = vdwg.mxu0
    %4463 = vmatpush.bf16.msra.mxu0 %v2717
    %4464 = vmatpush.bf16.msra.mxu0 %v2709
    %4465 = vmatpush.bf16.msra.mxu0 %v2701
    %4466 = vmatpush.bf16.msra.mxu0 %v2693
    %4467 = vmatpush.bf16.msra.mxu0 %v2685
    %4468 = vmatpush.bf16.msra.mxu0 %v2677
    %4469 = vmatpush.bf16.msra.mxu0 %v2669
    %4470 = vmatpush.bf16.msra.mxu0 %v2661
    %4471 = vmatmul.bf16.gmra.mxu0 %v783
    %v4472 = vpop.f32.mrf.mxu0
    %v4473 = vadd.f32 %v4459, %v4472
    %v4474 = vpop.f32.mrf.mxu0
    %v4475 = vadd.f32 %v4461, %v4474
    %4476 = vdwg.mxu0
    %4477 = vmatpush.bf16.msra.mxu0 %v2781
    %4478 = vmatpush.bf16.msra.mxu0 %v2773
    %4479 = vmatpush.bf16.msra.mxu0 %v2765
    %4480 = vmatpush.bf16.msra.mxu0 %v2757
    %4481 = vmatpush.bf16.msra.mxu0 %v2749
    %4482 = vmatpush.bf16.msra.mxu0 %v2741
    %4483 = vmatpush.bf16.msra.mxu0 %v2733
    %4484 = vmatpush.bf16.msra.mxu0 %v2725
    %4485 = vmatmul.bf16.gmra.mxu0 %v784
    %v4486 = vpop.f32.mrf.mxu0
    %v4487 = vadd.f32 %v4473, %v4486
    %v4488 = vpop.f32.mrf.mxu0
    %v4489 = vadd.f32 %v4475, %v4488
    %4490 = vdwg.mxu0
    %4491 = vmatpush.bf16.msra.mxu0 %v2845
    %4492 = vmatpush.bf16.msra.mxu0 %v2837
    %4493 = vmatpush.bf16.msra.mxu0 %v2829
    %4494 = vmatpush.bf16.msra.mxu0 %v2821
    %4495 = vmatpush.bf16.msra.mxu0 %v2813
    %4496 = vmatpush.bf16.msra.mxu0 %v2805
    %4497 = vmatpush.bf16.msra.mxu0 %v2797
    %4498 = vmatpush.bf16.msra.mxu0 %v2789
    %4499 = vmatmul.bf16.gmra.mxu0 %v785
    %v4500 = vpop.f32.mrf.mxu0
    %v4501 = vadd.f32 %v4487, %v4500
    %v4502 = vpop.f32.mrf.mxu0
    %v4503 = vadd.f32 %v4489, %v4502
    %4504 = vdwg.mxu0
    %4505 = vmatpush.bf16.msra.mxu0 %v2909
    %4506 = vmatpush.bf16.msra.mxu0 %v2901
    %4507 = vmatpush.bf16.msra.mxu0 %v2893
    %4508 = vmatpush.bf16.msra.mxu0 %v2885
    %4509 = vmatpush.bf16.msra.mxu0 %v2877
    %4510 = vmatpush.bf16.msra.mxu0 %v2869
    %4511 = vmatpush.bf16.msra.mxu0 %v2861
    %4512 = vmatpush.bf16.msra.mxu0 %v2853
    %4513 = vmatmul.bf16.gmra.mxu0 %v786
    %v4514 = vpop.f32.mrf.mxu0
    %v4515 = vadd.f32 %v4501, %v4514
    %v4516 = vpop.f32.mrf.mxu0
    %v4517 = vadd.f32 %v4503, %v4516
    %4518 = vdwg.mxu0
    %4519 = vmatpush.bf16.msra.mxu0 %v2973
    %4520 = vmatpush.bf16.msra.mxu0 %v2965
    %4521 = vmatpush.bf16.msra.mxu0 %v2957
    %4522 = vmatpush.bf16.msra.mxu0 %v2949
    %4523 = vmatpush.bf16.msra.mxu0 %v2941
    %4524 = vmatpush.bf16.msra.mxu0 %v2933
    %4525 = vmatpush.bf16.msra.mxu0 %v2925
    %4526 = vmatpush.bf16.msra.mxu0 %v2917
    %4527 = vmatmul.bf16.gmra.mxu0 %v787
    %v4528 = vpop.f32.mrf.mxu0
    %v4529 = vadd.f32 %v4515, %v4528
    %v4530 = vpop.f32.mrf.mxu0
    %v4531 = vadd.f32 %v4517, %v4530
    %4532 = vdwg.mxu0
    %4533 = vmatpush.bf16.msra.mxu0 %v3037
    %4534 = vmatpush.bf16.msra.mxu0 %v3029
    %4535 = vmatpush.bf16.msra.mxu0 %v3021
    %4536 = vmatpush.bf16.msra.mxu0 %v3013
    %4537 = vmatpush.bf16.msra.mxu0 %v3005
    %4538 = vmatpush.bf16.msra.mxu0 %v2997
    %4539 = vmatpush.bf16.msra.mxu0 %v2989
    %4540 = vmatpush.bf16.msra.mxu0 %v2981
    %4541 = vmatmul.bf16.gmra.mxu0 %v788
    %v4542 = vpop.f32.mrf.mxu0
    %v4543 = vadd.f32 %v4529, %v4542
    %v4544 = vpop.f32.mrf.mxu0
    %v4545 = vadd.f32 %v4531, %v4544
    %4546 = vdwg.mxu0
    %4547 = vmatpush.bf16.msra.mxu0 %v3101
    %4548 = vmatpush.bf16.msra.mxu0 %v3093
    %4549 = vmatpush.bf16.msra.mxu0 %v3085
    %4550 = vmatpush.bf16.msra.mxu0 %v3077
    %4551 = vmatpush.bf16.msra.mxu0 %v3069
    %4552 = vmatpush.bf16.msra.mxu0 %v3061
    %4553 = vmatpush.bf16.msra.mxu0 %v3053
    %4554 = vmatpush.bf16.msra.mxu0 %v3045
    %4555 = vmatmul.bf16.gmra.mxu0 %v789
    %v4556 = vpop.f32.mrf.mxu0
    %v4557 = vadd.f32 %v4543, %v4556
    %v4558 = vpop.f32.mrf.mxu0
    %v4559 = vadd.f32 %v4545, %v4558
    %4560 = vdwg.mxu0
    %4561 = vmatpush.bf16.msra.mxu0 %v2590
    %4562 = vmatpush.bf16.msra.mxu0 %v2582
    %4563 = vmatpush.bf16.msra.mxu0 %v2574
    %4564 = vmatpush.bf16.msra.mxu0 %v2566
    %4565 = vmatpush.bf16.msra.mxu0 %v2558
    %4566 = vmatpush.bf16.msra.mxu0 %v2550
    %4567 = vmatpush.bf16.msra.mxu0 %v2542
    %4568 = vmatpush.bf16.msra.mxu0 %v2534
    %4569 = vmatmul.bf16.gmra.mxu0 %v781
    %v4570 = vpop.f32.mrf.mxu0
    %v4571 = vadd.f32 %v744, %v4570
    %v4572 = vpop.f32.mrf.mxu0
    %v4573 = vadd.f32 %v744, %v4572
    %4574 = vdwg.mxu0
    %4575 = vmatpush.bf16.msra.mxu0 %v2654
    %4576 = vmatpush.bf16.msra.mxu0 %v2646
    %4577 = vmatpush.bf16.msra.mxu0 %v2638
    %4578 = vmatpush.bf16.msra.mxu0 %v2630
    %4579 = vmatpush.bf16.msra.mxu0 %v2622
    %4580 = vmatpush.bf16.msra.mxu0 %v2614
    %4581 = vmatpush.bf16.msra.mxu0 %v2606
    %4582 = vmatpush.bf16.msra.mxu0 %v2598
    %4583 = vmatmul.bf16.gmra.mxu0 %v782
    %v4584 = vpop.f32.mrf.mxu0
    %v4585 = vadd.f32 %v4571, %v4584
    %v4586 = vpop.f32.mrf.mxu0
    %v4587 = vadd.f32 %v4573, %v4586
    %4588 = vdwg.mxu0
    %4589 = vmatpush.bf16.msra.mxu0 %v2718
    %4590 = vmatpush.bf16.msra.mxu0 %v2710
    %4591 = vmatpush.bf16.msra.mxu0 %v2702
    %4592 = vmatpush.bf16.msra.mxu0 %v2694
    %4593 = vmatpush.bf16.msra.mxu0 %v2686
    %4594 = vmatpush.bf16.msra.mxu0 %v2678
    %4595 = vmatpush.bf16.msra.mxu0 %v2670
    %4596 = vmatpush.bf16.msra.mxu0 %v2662
    %4597 = vmatmul.bf16.gmra.mxu0 %v783
    %v4598 = vpop.f32.mrf.mxu0
    %v4599 = vadd.f32 %v4585, %v4598
    %v4600 = vpop.f32.mrf.mxu0
    %v4601 = vadd.f32 %v4587, %v4600
    %4602 = vdwg.mxu0
    %4603 = vmatpush.bf16.msra.mxu0 %v2782
    %4604 = vmatpush.bf16.msra.mxu0 %v2774
    %4605 = vmatpush.bf16.msra.mxu0 %v2766
    %4606 = vmatpush.bf16.msra.mxu0 %v2758
    %4607 = vmatpush.bf16.msra.mxu0 %v2750
    %4608 = vmatpush.bf16.msra.mxu0 %v2742
    %4609 = vmatpush.bf16.msra.mxu0 %v2734
    %4610 = vmatpush.bf16.msra.mxu0 %v2726
    %4611 = vmatmul.bf16.gmra.mxu0 %v784
    %v4612 = vpop.f32.mrf.mxu0
    %v4613 = vadd.f32 %v4599, %v4612
    %v4614 = vpop.f32.mrf.mxu0
    %v4615 = vadd.f32 %v4601, %v4614
    %4616 = vdwg.mxu0
    %4617 = vmatpush.bf16.msra.mxu0 %v2846
    %4618 = vmatpush.bf16.msra.mxu0 %v2838
    %4619 = vmatpush.bf16.msra.mxu0 %v2830
    %4620 = vmatpush.bf16.msra.mxu0 %v2822
    %4621 = vmatpush.bf16.msra.mxu0 %v2814
    %4622 = vmatpush.bf16.msra.mxu0 %v2806
    %4623 = vmatpush.bf16.msra.mxu0 %v2798
    %4624 = vmatpush.bf16.msra.mxu0 %v2790
    %4625 = vmatmul.bf16.gmra.mxu0 %v785
    %v4626 = vpop.f32.mrf.mxu0
    %v4627 = vadd.f32 %v4613, %v4626
    %v4628 = vpop.f32.mrf.mxu0
    %v4629 = vadd.f32 %v4615, %v4628
    %4630 = vdwg.mxu0
    %4631 = vmatpush.bf16.msra.mxu0 %v2910
    %4632 = vmatpush.bf16.msra.mxu0 %v2902
    %4633 = vmatpush.bf16.msra.mxu0 %v2894
    %4634 = vmatpush.bf16.msra.mxu0 %v2886
    %4635 = vmatpush.bf16.msra.mxu0 %v2878
    %4636 = vmatpush.bf16.msra.mxu0 %v2870
    %4637 = vmatpush.bf16.msra.mxu0 %v2862
    %4638 = vmatpush.bf16.msra.mxu0 %v2854
    %4639 = vmatmul.bf16.gmra.mxu0 %v786
    %v4640 = vpop.f32.mrf.mxu0
    %v4641 = vadd.f32 %v4627, %v4640
    %v4642 = vpop.f32.mrf.mxu0
    %v4643 = vadd.f32 %v4629, %v4642
    %4644 = vdwg.mxu0
    %4645 = vmatpush.bf16.msra.mxu0 %v2974
    %4646 = vmatpush.bf16.msra.mxu0 %v2966
    %4647 = vmatpush.bf16.msra.mxu0 %v2958
    %4648 = vmatpush.bf16.msra.mxu0 %v2950
    %4649 = vmatpush.bf16.msra.mxu0 %v2942
    %4650 = vmatpush.bf16.msra.mxu0 %v2934
    %4651 = vmatpush.bf16.msra.mxu0 %v2926
    %4652 = vmatpush.bf16.msra.mxu0 %v2918
    %4653 = vmatmul.bf16.gmra.mxu0 %v787
    %v4654 = vpop.f32.mrf.mxu0
    %v4655 = vadd.f32 %v4641, %v4654
    %v4656 = vpop.f32.mrf.mxu0
    %v4657 = vadd.f32 %v4643, %v4656
    %4658 = vdwg.mxu0
    %4659 = vmatpush.bf16.msra.mxu0 %v3038
    %4660 = vmatpush.bf16.msra.mxu0 %v3030
    %4661 = vmatpush.bf16.msra.mxu0 %v3022
    %4662 = vmatpush.bf16.msra.mxu0 %v3014
    %4663 = vmatpush.bf16.msra.mxu0 %v3006
    %4664 = vmatpush.bf16.msra.mxu0 %v2998
    %4665 = vmatpush.bf16.msra.mxu0 %v2990
    %4666 = vmatpush.bf16.msra.mxu0 %v2982
    %4667 = vmatmul.bf16.gmra.mxu0 %v788
    %v4668 = vpop.f32.mrf.mxu0
    %v4669 = vadd.f32 %v4655, %v4668
    %v4670 = vpop.f32.mrf.mxu0
    %v4671 = vadd.f32 %v4657, %v4670
    %4672 = vdwg.mxu0
    %4673 = vmatpush.bf16.msra.mxu0 %v3102
    %4674 = vmatpush.bf16.msra.mxu0 %v3094
    %4675 = vmatpush.bf16.msra.mxu0 %v3086
    %4676 = vmatpush.bf16.msra.mxu0 %v3078
    %4677 = vmatpush.bf16.msra.mxu0 %v3070
    %4678 = vmatpush.bf16.msra.mxu0 %v3062
    %4679 = vmatpush.bf16.msra.mxu0 %v3054
    %4680 = vmatpush.bf16.msra.mxu0 %v3046
    %4681 = vmatmul.bf16.gmra.mxu0 %v789
    %v4682 = vpop.f32.mrf.mxu0
    %v4683 = vadd.f32 %v4669, %v4682
    %v4684 = vpop.f32.mrf.mxu0
    %v4685 = vadd.f32 %v4671, %v4684
    %4686 = vdwg.mxu0
    %v4687 = vmax.f32 %v3801, 0.0
    %v4688 = vmax.f32 %v3927, 0.0
    %v4689 = vmax.f32 %v4053, 0.0
    %v4690 = vmax.f32 %v4179, 0.0
    %v4691 = vmax.f32 %v4305, 0.0
    %v4692 = vmax.f32 %v4431, 0.0
    %v4693 = vmax.f32 %v4557, 0.0
    %v4694 = vmax.f32 %v4683, 0.0
    %v4695 = vmax.f32 %v3803, 0.0
    %v4696 = vmax.f32 %v3929, 0.0
    %v4697 = vmax.f32 %v4055, 0.0
    %v4698 = vmax.f32 %v4181, 0.0
    %v4699 = vmax.f32 %v4307, 0.0
    %v4700 = vmax.f32 %v4433, 0.0
    %v4701 = vmax.f32 %v4559, 0.0
    %v4702 = vmax.f32 %v4685, 0.0
    %v4703 = vpack.c.bf16 %v4695, %v4687
    %v4704 = vpack.c.bf16 %v4696, %v4688
    %v4705 = vpack.c.bf16 %v4697, %v4689
    %v4706 = vpack.c.bf16 %v4698, %v4690
    %v4707 = vpack.c.bf16 %v4699, %v4691
    %v4708 = vpack.c.bf16 %v4700, %v4692
    %v4709 = vpack.c.bf16 %v4701, %v4693
    %v4710 = vpack.c.bf16 %v4702, %v4694
    %v4711 = vld [vmem:[#allocation6] sm:$0xff]
    %v4712 = vld [vmem:[#allocation6 + $0x8] sm:$0xff]
    %v4713 = vld [vmem:[#allocation6 + $0x10] sm:$0xff]
    %v4714 = vld [vmem:[#allocation6 + $0x18] sm:$0xff]
    %v4715 = vld [vmem:[#allocation6 + $0x20] sm:$0xff]
    %v4716 = vld [vmem:[#allocation6 + $0x28] sm:$0xff]
    %v4717 = vld [vmem:[#allocation6 + $0x30] sm:$0xff]
    %v4718 = vld [vmem:[#allocation6 + $0x38] sm:$0xff]
    %v4719 = vld [vmem:[#allocation6 + $0x40] sm:$0xff]
    %v4720 = vld [vmem:[#allocation6 + $0x48] sm:$0xff]
    %v4721 = vld [vmem:[#allocation6 + $0x50] sm:$0xff]
    %v4722 = vld [vmem:[#allocation6 + $0x58] sm:$0xff]
    %v4723 = vld [vmem:[#allocation6 + $0x60] sm:$0xff]
    %v4724 = vld [vmem:[#allocation6 + $0x68] sm:$0xff]
    %v4725 = vld [vmem:[#allocation6 + $0x70] sm:$0xff]
    %v4726 = vld [vmem:[#allocation6 + $0x78] sm:$0xff]
    %v4727 = vld [vmem:[#allocation6 + $0x80] sm:$0xff]
    %v4728 = vld [vmem:[#allocation6 + $0x88] sm:$0xff]
    %v4729 = vld [vmem:[#allocation6 + $0x90] sm:$0xff]
    %v4730 = vld [vmem:[#allocation6 + $0x98] sm:$0xff]
    %v4731 = vld [vmem:[#allocation6 + $0xa0] sm:$0xff]
    %v4732 = vld [vmem:[#allocation6 + $0xa8] sm:$0xff]
    %v4733 = vld [vmem:[#allocation6 + $0xb0] sm:$0xff]
    %v4734 = vld [vmem:[#allocation6 + $0xb8] sm:$0xff]
    %v4735 = vld [vmem:[#allocation6 + $0xc0] sm:$0xff]
    %v4736 = vld [vmem:[#allocation6 + $0xc8] sm:$0xff]
    %v4737 = vld [vmem:[#allocation6 + $0xd0] sm:$0xff]
    %v4738 = vld [vmem:[#allocation6 + $0xd8] sm:$0xff]
    %v4739 = vld [vmem:[#allocation6 + $0xe0] sm:$0xff]
    %v4740 = vld [vmem:[#allocation6 + $0xe8] sm:$0xff]
    %v4741 = vld [vmem:[#allocation6 + $0xf0] sm:$0xff]
    %v4742 = vld [vmem:[#allocation6 + $0xf8] sm:$0xff]
    %v4743 = vld [vmem:[#allocation6 + $0x100] sm:$0xff]
    %v4744 = vld [vmem:[#allocation6 + $0x108] sm:$0xff]
    %v4745 = vld [vmem:[#allocation6 + $0x110] sm:$0xff]
    %v4746 = vld [vmem:[#allocation6 + $0x118] sm:$0xff]
    %v4747 = vld [vmem:[#allocation6 + $0x120] sm:$0xff]
    %v4748 = vld [vmem:[#allocation6 + $0x128] sm:$0xff]
    %v4749 = vld [vmem:[#allocation6 + $0x130] sm:$0xff]
    %v4750 = vld [vmem:[#allocation6 + $0x138] sm:$0xff]
    %v4751 = vld [vmem:[#allocation6 + $0x140] sm:$0xff]
    %v4752 = vld [vmem:[#allocation6 + $0x148] sm:$0xff]
    %v4753 = vld [vmem:[#allocation6 + $0x150] sm:$0xff]
    %v4754 = vld [vmem:[#allocation6 + $0x158] sm:$0xff]
    %v4755 = vld [vmem:[#allocation6 + $0x160] sm:$0xff]
    %v4756 = vld [vmem:[#allocation6 + $0x168] sm:$0xff]
    %v4757 = vld [vmem:[#allocation6 + $0x170] sm:$0xff]
    %v4758 = vld [vmem:[#allocation6 + $0x178] sm:$0xff]
    %v4759 = vld [vmem:[#allocation6 + $0x180] sm:$0xff]
    %v4760 = vld [vmem:[#allocation6 + $0x188] sm:$0xff]
    %v4761 = vld [vmem:[#allocation6 + $0x190] sm:$0xff]
    %v4762 = vld [vmem:[#allocation6 + $0x198] sm:$0xff]
    %v4763 = vld [vmem:[#allocation6 + $0x1a0] sm:$0xff]
    %v4764 = vld [vmem:[#allocation6 + $0x1a8] sm:$0xff]
    %v4765 = vld [vmem:[#allocation6 + $0x1b0] sm:$0xff]
    %v4766 = vld [vmem:[#allocation6 + $0x1b8] sm:$0xff]
    %v4767 = vld [vmem:[#allocation6 + $0x1c0] sm:$0xff]
    %v4768 = vld [vmem:[#allocation6 + $0x1c8] sm:$0xff]
    %v4769 = vld [vmem:[#allocation6 + $0x1d0] sm:$0xff]
    %v4770 = vld [vmem:[#allocation6 + $0x1d8] sm:$0xff]
    %v4771 = vld [vmem:[#allocation6 + $0x1e0] sm:$0xff]
    %v4772 = vld [vmem:[#allocation6 + $0x1e8] sm:$0xff]
    %v4773 = vld [vmem:[#allocation6 + $0x1f0] sm:$0xff]
    %v4774 = vld [vmem:[#allocation6 + $0x1f8] sm:$0xff]
    %v4775 = vld [vmem:[#allocation6 + $0x200] sm:$0xff]
    %v4776 = vld [vmem:[#allocation6 + $0x208] sm:$0xff]
    %v4777 = vld [vmem:[#allocation6 + $0x210] sm:$0xff]
    %v4778 = vld [vmem:[#allocation6 + $0x218] sm:$0xff]
    %v4779 = vld [vmem:[#allocation6 + $0x220] sm:$0xff]
    %v4780 = vld [vmem:[#allocation6 + $0x228] sm:$0xff]
    %v4781 = vld [vmem:[#allocation6 + $0x230] sm:$0xff]
    %v4782 = vld [vmem:[#allocation6 + $0x238] sm:$0xff]
    %v4783 = vld [vmem:[#allocation6 + $0x240] sm:$0xff]
    %v4784 = vld [vmem:[#allocation6 + $0x248] sm:$0xff]
    %v4785 = vld [vmem:[#allocation6 + $0x250] sm:$0xff]
    %v4786 = vld [vmem:[#allocation6 + $0x258] sm:$0xff]
    %v4787 = vld [vmem:[#allocation6 + $0x260] sm:$0xff]
    %v4788 = vld [vmem:[#allocation6 + $0x268] sm:$0xff]
    %v4789 = vld [vmem:[#allocation6 + $0x270] sm:$0xff]
    %v4790 = vld [vmem:[#allocation6 + $0x278] sm:$0xff]
    %v4791 = vld [vmem:[#allocation6 + $0x280] sm:$0xff]
    %v4792 = vld [vmem:[#allocation6 + $0x288] sm:$0xff]
    %v4793 = vld [vmem:[#allocation6 + $0x290] sm:$0xff]
    %v4794 = vld [vmem:[#allocation6 + $0x298] sm:$0xff]
    %v4795 = vld [vmem:[#allocation6 + $0x2a0] sm:$0xff]
    %v4796 = vld [vmem:[#allocation6 + $0x2a8] sm:$0xff]
    %v4797 = vld [vmem:[#allocation6 + $0x2b0] sm:$0xff]
    %v4798 = vld [vmem:[#allocation6 + $0x2b8] sm:$0xff]
    %v4799 = vld [vmem:[#allocation6 + $0x2c0] sm:$0xff]
    %v4800 = vld [vmem:[#allocation6 + $0x2c8] sm:$0xff]
    %v4801 = vld [vmem:[#allocation6 + $0x2d0] sm:$0xff]
    %v4802 = vld [vmem:[#allocation6 + $0x2d8] sm:$0xff]
    %v4803 = vld [vmem:[#allocation6 + $0x2e0] sm:$0xff]
    %v4804 = vld [vmem:[#allocation6 + $0x2e8] sm:$0xff]
    %v4805 = vld [vmem:[#allocation6 + $0x2f0] sm:$0xff]
    %v4806 = vld [vmem:[#allocation6 + $0x2f8] sm:$0xff]
    %v4807 = vld [vmem:[#allocation6 + $0x300] sm:$0xff]
    %v4808 = vld [vmem:[#allocation6 + $0x308] sm:$0xff]
    %v4809 = vld [vmem:[#allocation6 + $0x310] sm:$0xff]
    %v4810 = vld [vmem:[#allocation6 + $0x318] sm:$0xff]
    %v4811 = vld [vmem:[#allocation6 + $0x320] sm:$0xff]
    %v4812 = vld [vmem:[#allocation6 + $0x328] sm:$0xff]
    %v4813 = vld [vmem:[#allocation6 + $0x330] sm:$0xff]
    %v4814 = vld [vmem:[#allocation6 + $0x338] sm:$0xff]
    %v4815 = vld [vmem:[#allocation6 + $0x340] sm:$0xff]
    %v4816 = vld [vmem:[#allocation6 + $0x348] sm:$0xff]
    %v4817 = vld [vmem:[#allocation6 + $0x350] sm:$0xff]
    %v4818 = vld [vmem:[#allocation6 + $0x358] sm:$0xff]
    %v4819 = vld [vmem:[#allocation6 + $0x360] sm:$0xff]
    %v4820 = vld [vmem:[#allocation6 + $0x368] sm:$0xff]
    %v4821 = vld [vmem:[#allocation6 + $0x370] sm:$0xff]
    %v4822 = vld [vmem:[#allocation6 + $0x378] sm:$0xff]
    %v4823 = vld [vmem:[#allocation6 + $0x380] sm:$0xff]
    %v4824 = vld [vmem:[#allocation6 + $0x388] sm:$0xff]
    %v4825 = vld [vmem:[#allocation6 + $0x390] sm:$0xff]
    %v4826 = vld [vmem:[#allocation6 + $0x398] sm:$0xff]
    %v4827 = vld [vmem:[#allocation6 + $0x3a0] sm:$0xff]
    %v4828 = vld [vmem:[#allocation6 + $0x3a8] sm:$0xff]
    %v4829 = vld [vmem:[#allocation6 + $0x3b0] sm:$0xff]
    %v4830 = vld [vmem:[#allocation6 + $0x3b8] sm:$0xff]
    %v4831 = vld [vmem:[#allocation6 + $0x3c0] sm:$0xff]
    %v4832 = vld [vmem:[#allocation6 + $0x3c8] sm:$0xff]
    %v4833 = vld [vmem:[#allocation6 + $0x3d0] sm:$0xff]
    %v4834 = vld [vmem:[#allocation6 + $0x3d8] sm:$0xff]
    %v4835 = vld [vmem:[#allocation6 + $0x3e0] sm:$0xff]
    %v4836 = vld [vmem:[#allocation6 + $0x3e8] sm:$0xff]
    %v4837 = vld [vmem:[#allocation6 + $0x3f0] sm:$0xff]
    %v4838 = vld [vmem:[#allocation6 + $0x3f8] sm:$0xff]
    %v4839 = vld [vmem:[#allocation6 + $0x400] sm:$0xff]
    %v4840 = vld [vmem:[#allocation6 + $0x408] sm:$0xff]
    %v4841 = vld [vmem:[#allocation6 + $0x410] sm:$0xff]
    %v4842 = vld [vmem:[#allocation6 + $0x418] sm:$0xff]
    %v4843 = vld [vmem:[#allocation6 + $0x420] sm:$0xff]
    %v4844 = vld [vmem:[#allocation6 + $0x428] sm:$0xff]
    %v4845 = vld [vmem:[#allocation6 + $0x430] sm:$0xff]
    %v4846 = vld [vmem:[#allocation6 + $0x438] sm:$0xff]
    %v4847 = vld [vmem:[#allocation6 + $0x440] sm:$0xff]
    %v4848 = vld [vmem:[#allocation6 + $0x448] sm:$0xff]
    %v4849 = vld [vmem:[#allocation6 + $0x450] sm:$0xff]
    %v4850 = vld [vmem:[#allocation6 + $0x458] sm:$0xff]
    %v4851 = vld [vmem:[#allocation6 + $0x460] sm:$0xff]
    %v4852 = vld [vmem:[#allocation6 + $0x468] sm:$0xff]
    %v4853 = vld [vmem:[#allocation6 + $0x470] sm:$0xff]
    %v4854 = vld [vmem:[#allocation6 + $0x478] sm:$0xff]
    %v4855 = vld [vmem:[#allocation6 + $0x480] sm:$0xff]
    %v4856 = vld [vmem:[#allocation6 + $0x488] sm:$0xff]
    %v4857 = vld [vmem:[#allocation6 + $0x490] sm:$0xff]
    %v4858 = vld [vmem:[#allocation6 + $0x498] sm:$0xff]
    %v4859 = vld [vmem:[#allocation6 + $0x4a0] sm:$0xff]
    %v4860 = vld [vmem:[#allocation6 + $0x4a8] sm:$0xff]
    %v4861 = vld [vmem:[#allocation6 + $0x4b0] sm:$0xff]
    %v4862 = vld [vmem:[#allocation6 + $0x4b8] sm:$0xff]
    %v4863 = vld [vmem:[#allocation6 + $0x4c0] sm:$0xff]
    %v4864 = vld [vmem:[#allocation6 + $0x4c8] sm:$0xff]
    %v4865 = vld [vmem:[#allocation6 + $0x4d0] sm:$0xff]
    %v4866 = vld [vmem:[#allocation6 + $0x4d8] sm:$0xff]
    %v4867 = vld [vmem:[#allocation6 + $0x4e0] sm:$0xff]
    %v4868 = vld [vmem:[#allocation6 + $0x4e8] sm:$0xff]
    %v4869 = vld [vmem:[#allocation6 + $0x4f0] sm:$0xff]
    %v4870 = vld [vmem:[#allocation6 + $0x4f8] sm:$0xff]
    %v4871 = vld [vmem:[#allocation6 + $0x500] sm:$0xff]
    %v4872 = vld [vmem:[#allocation6 + $0x508] sm:$0xff]
    %v4873 = vld [vmem:[#allocation6 + $0x510] sm:$0xff]
    %v4874 = vld [vmem:[#allocation6 + $0x518] sm:$0xff]
    %v4875 = vld [vmem:[#allocation6 + $0x520] sm:$0xff]
    %v4876 = vld [vmem:[#allocation6 + $0x528] sm:$0xff]
    %v4877 = vld [vmem:[#allocation6 + $0x530] sm:$0xff]
    %v4878 = vld [vmem:[#allocation6 + $0x538] sm:$0xff]
    %v4879 = vld [vmem:[#allocation6 + $0x540] sm:$0xff]
    %v4880 = vld [vmem:[#allocation6 + $0x548] sm:$0xff]
    %v4881 = vld [vmem:[#allocation6 + $0x550] sm:$0xff]
    %v4882 = vld [vmem:[#allocation6 + $0x558] sm:$0xff]
    %v4883 = vld [vmem:[#allocation6 + $0x560] sm:$0xff]
    %v4884 = vld [vmem:[#allocation6 + $0x568] sm:$0xff]
    %v4885 = vld [vmem:[#allocation6 + $0x570] sm:$0xff]
    %v4886 = vld [vmem:[#allocation6 + $0x578] sm:$0xff]
    %v4887 = vld [vmem:[#allocation6 + $0x580] sm:$0xff]
    %v4888 = vld [vmem:[#allocation6 + $0x588] sm:$0xff]
    %v4889 = vld [vmem:[#allocation6 + $0x590] sm:$0xff]
    %v4890 = vld [vmem:[#allocation6 + $0x598] sm:$0xff]
    %v4891 = vld [vmem:[#allocation6 + $0x5a0] sm:$0xff]
    %v4892 = vld [vmem:[#allocation6 + $0x5a8] sm:$0xff]
    %v4893 = vld [vmem:[#allocation6 + $0x5b0] sm:$0xff]
    %v4894 = vld [vmem:[#allocation6 + $0x5b8] sm:$0xff]
    %v4895 = vld [vmem:[#allocation6 + $0x5c0] sm:$0xff]
    %v4896 = vld [vmem:[#allocation6 + $0x5c8] sm:$0xff]
    %v4897 = vld [vmem:[#allocation6 + $0x5d0] sm:$0xff]
    %v4898 = vld [vmem:[#allocation6 + $0x5d8] sm:$0xff]
    %v4899 = vld [vmem:[#allocation6 + $0x5e0] sm:$0xff]
    %v4900 = vld [vmem:[#allocation6 + $0x5e8] sm:$0xff]
    %v4901 = vld [vmem:[#allocation6 + $0x5f0] sm:$0xff]
    %v4902 = vld [vmem:[#allocation6 + $0x5f8] sm:$0xff]
    %v4903 = vld [vmem:[#allocation6 + $0x600] sm:$0xff]
    %v4904 = vld [vmem:[#allocation6 + $0x608] sm:$0xff]
    %v4905 = vld [vmem:[#allocation6 + $0x610] sm:$0xff]
    %v4906 = vld [vmem:[#allocation6 + $0x618] sm:$0xff]
    %v4907 = vld [vmem:[#allocation6 + $0x620] sm:$0xff]
    %v4908 = vld [vmem:[#allocation6 + $0x628] sm:$0xff]
    %v4909 = vld [vmem:[#allocation6 + $0x630] sm:$0xff]
    %v4910 = vld [vmem:[#allocation6 + $0x638] sm:$0xff]
    %v4911 = vld [vmem:[#allocation6 + $0x640] sm:$0xff]
    %v4912 = vld [vmem:[#allocation6 + $0x648] sm:$0xff]
    %v4913 = vld [vmem:[#allocation6 + $0x650] sm:$0xff]
    %v4914 = vld [vmem:[#allocation6 + $0x658] sm:$0xff]
    %v4915 = vld [vmem:[#allocation6 + $0x660] sm:$0xff]
    %v4916 = vld [vmem:[#allocation6 + $0x668] sm:$0xff]
    %v4917 = vld [vmem:[#allocation6 + $0x670] sm:$0xff]
    %v4918 = vld [vmem:[#allocation6 + $0x678] sm:$0xff]
    %v4919 = vld [vmem:[#allocation6 + $0x680] sm:$0xff]
    %v4920 = vld [vmem:[#allocation6 + $0x688] sm:$0xff]
    %v4921 = vld [vmem:[#allocation6 + $0x690] sm:$0xff]
    %v4922 = vld [vmem:[#allocation6 + $0x698] sm:$0xff]
    %v4923 = vld [vmem:[#allocation6 + $0x6a0] sm:$0xff]
    %v4924 = vld [vmem:[#allocation6 + $0x6a8] sm:$0xff]
    %v4925 = vld [vmem:[#allocation6 + $0x6b0] sm:$0xff]
    %v4926 = vld [vmem:[#allocation6 + $0x6b8] sm:$0xff]
    %v4927 = vld [vmem:[#allocation6 + $0x6c0] sm:$0xff]
    %v4928 = vld [vmem:[#allocation6 + $0x6c8] sm:$0xff]
    %v4929 = vld [vmem:[#allocation6 + $0x6d0] sm:$0xff]
    %v4930 = vld [vmem:[#allocation6 + $0x6d8] sm:$0xff]
    %v4931 = vld [vmem:[#allocation6 + $0x6e0] sm:$0xff]
    %v4932 = vld [vmem:[#allocation6 + $0x6e8] sm:$0xff]
    %v4933 = vld [vmem:[#allocation6 + $0x6f0] sm:$0xff]
    %v4934 = vld [vmem:[#allocation6 + $0x6f8] sm:$0xff]
    %v4935 = vld [vmem:[#allocation6 + $0x700] sm:$0xff]
    %v4936 = vld [vmem:[#allocation6 + $0x708] sm:$0xff]
    %v4937 = vld [vmem:[#allocation6 + $0x710] sm:$0xff]
    %v4938 = vld [vmem:[#allocation6 + $0x718] sm:$0xff]
    %v4939 = vld [vmem:[#allocation6 + $0x720] sm:$0xff]
    %v4940 = vld [vmem:[#allocation6 + $0x728] sm:$0xff]
    %v4941 = vld [vmem:[#allocation6 + $0x730] sm:$0xff]
    %v4942 = vld [vmem:[#allocation6 + $0x738] sm:$0xff]
    %v4943 = vld [vmem:[#allocation6 + $0x740] sm:$0xff]
    %v4944 = vld [vmem:[#allocation6 + $0x748] sm:$0xff]
    %v4945 = vld [vmem:[#allocation6 + $0x750] sm:$0xff]
    %v4946 = vld [vmem:[#allocation6 + $0x758] sm:$0xff]
    %v4947 = vld [vmem:[#allocation6 + $0x760] sm:$0xff]
    %v4948 = vld [vmem:[#allocation6 + $0x768] sm:$0xff]
    %v4949 = vld [vmem:[#allocation6 + $0x770] sm:$0xff]
    %v4950 = vld [vmem:[#allocation6 + $0x778] sm:$0xff]
    %v4951 = vld [vmem:[#allocation6 + $0x780] sm:$0xff]
    %v4952 = vld [vmem:[#allocation6 + $0x788] sm:$0xff]
    %v4953 = vld [vmem:[#allocation6 + $0x790] sm:$0xff]
    %v4954 = vld [vmem:[#allocation6 + $0x798] sm:$0xff]
    %v4955 = vld [vmem:[#allocation6 + $0x7a0] sm:$0xff]
    %v4956 = vld [vmem:[#allocation6 + $0x7a8] sm:$0xff]
    %v4957 = vld [vmem:[#allocation6 + $0x7b0] sm:$0xff]
    %v4958 = vld [vmem:[#allocation6 + $0x7b8] sm:$0xff]
    %v4959 = vld [vmem:[#allocation6 + $0x7c0] sm:$0xff]
    %v4960 = vld [vmem:[#allocation6 + $0x7c8] sm:$0xff]
    %v4961 = vld [vmem:[#allocation6 + $0x7d0] sm:$0xff]
    %v4962 = vld [vmem:[#allocation6 + $0x7d8] sm:$0xff]
    %v4963 = vld [vmem:[#allocation6 + $0x7e0] sm:$0xff]
    %v4964 = vld [vmem:[#allocation6 + $0x7e8] sm:$0xff]
    %v4965 = vld [vmem:[#allocation6 + $0x7f0] sm:$0xff]
    %v4966 = vld [vmem:[#allocation6 + $0x7f8] sm:$0xff]
    %v4967 = vld [vmem:[#allocation7] sm:$0xf]
    %v4969 = vperm.slane %v4967, 0
    %v4970 = vperm.slane %v4967, 1
    %v4971 = vperm.slane %v4967, 2
    %v4972 = vperm.slane %v4967, 3
    %v5233 = vunpack.c.l.b16 %v4711
    %v5234 = vunpack.c.h.b16 %v4711
    %v5235 = vunpack.c.l.b16 %v4712
    %v5236 = vunpack.c.h.b16 %v4712
    %v5237 = vunpack.c.l.b16 %v4713
    %v5238 = vunpack.c.h.b16 %v4713
    %v5239 = vunpack.c.l.b16 %v4714
    %v5240 = vunpack.c.h.b16 %v4714
    %v5241 = vunpack.c.l.b16 %v4715
    %v5242 = vunpack.c.h.b16 %v4715
    %v5243 = vunpack.c.l.b16 %v4716
    %v5244 = vunpack.c.h.b16 %v4716
    %v5245 = vunpack.c.l.b16 %v4717
    %v5246 = vunpack.c.h.b16 %v4717
    %v5247 = vunpack.c.l.b16 %v4718
    %v5248 = vunpack.c.h.b16 %v4718
    %v5249 = vunpack.c.l.b16 %v4719
    %v5250 = vunpack.c.h.b16 %v4719
    %v5251 = vunpack.c.l.b16 %v4720
    %v5252 = vunpack.c.h.b16 %v4720
    %v5253 = vunpack.c.l.b16 %v4721
    %v5254 = vunpack.c.h.b16 %v4721
    %v5255 = vunpack.c.l.b16 %v4722
    %v5256 = vunpack.c.h.b16 %v4722
    %v5257 = vunpack.c.l.b16 %v4723
    %v5258 = vunpack.c.h.b16 %v4723
    %v5259 = vunpack.c.l.b16 %v4724
    %v5260 = vunpack.c.h.b16 %v4724
    %v5261 = vunpack.c.l.b16 %v4725
    %v5262 = vunpack.c.h.b16 %v4725
    %v5263 = vunpack.c.l.b16 %v4726
    %v5264 = vunpack.c.h.b16 %v4726
    %v5265 = vunpack.c.l.b16 %v4727
    %v5266 = vunpack.c.h.b16 %v4727
    %v5267 = vunpack.c.l.b16 %v4728
    %v5268 = vunpack.c.h.b16 %v4728
    %v5269 = vunpack.c.l.b16 %v4729
    %v5270 = vunpack.c.h.b16 %v4729
    %v5271 = vunpack.c.l.b16 %v4730
    %v5272 = vunpack.c.h.b16 %v4730
    %v5273 = vunpack.c.l.b16 %v4731
    %v5274 = vunpack.c.h.b16 %v4731
    %v5275 = vunpack.c.l.b16 %v4732
    %v5276 = vunpack.c.h.b16 %v4732
    %v5277 = vunpack.c.l.b16 %v4733
    %v5278 = vunpack.c.h.b16 %v4733
    %v5279 = vunpack.c.l.b16 %v4734
    %v5280 = vunpack.c.h.b16 %v4734
    %v5281 = vunpack.c.l.b16 %v4735
    %v5282 = vunpack.c.h.b16 %v4735
    %v5283 = vunpack.c.l.b16 %v4736
    %v5284 = vunpack.c.h.b16 %v4736
    %v5285 = vunpack.c.l.b16 %v4737
    %v5286 = vunpack.c.h.b16 %v4737
    %v5287 = vunpack.c.l.b16 %v4738
    %v5288 = vunpack.c.h.b16 %v4738
    %v5289 = vunpack.c.l.b16 %v4739
    %v5290 = vunpack.c.h.b16 %v4739
    %v5291 = vunpack.c.l.b16 %v4740
    %v5292 = vunpack.c.h.b16 %v4740
    %v5293 = vunpack.c.l.b16 %v4741
    %v5294 = vunpack.c.h.b16 %v4741
    %v5295 = vunpack.c.l.b16 %v4742
    %v5296 = vunpack.c.h.b16 %v4742
    %v5297 = vunpack.c.l.b16 %v4743
    %v5298 = vunpack.c.h.b16 %v4743
    %v5299 = vunpack.c.l.b16 %v4744
    %v5300 = vunpack.c.h.b16 %v4744
    %v5301 = vunpack.c.l.b16 %v4745
    %v5302 = vunpack.c.h.b16 %v4745
    %v5303 = vunpack.c.l.b16 %v4746
    %v5304 = vunpack.c.h.b16 %v4746
    %v5305 = vunpack.c.l.b16 %v4747
    %v5306 = vunpack.c.h.b16 %v4747
    %v5307 = vunpack.c.l.b16 %v4748
    %v5308 = vunpack.c.h.b16 %v4748
    %v5309 = vunpack.c.l.b16 %v4749
    %v5310 = vunpack.c.h.b16 %v4749
    %v5311 = vunpack.c.l.b16 %v4750
    %v5312 = vunpack.c.h.b16 %v4750
    %v5313 = vunpack.c.l.b16 %v4751
    %v5314 = vunpack.c.h.b16 %v4751
    %v5315 = vunpack.c.l.b16 %v4752
    %v5316 = vunpack.c.h.b16 %v4752
    %v5317 = vunpack.c.l.b16 %v4753
    %v5318 = vunpack.c.h.b16 %v4753
    %v5319 = vunpack.c.l.b16 %v4754
    %v5320 = vunpack.c.h.b16 %v4754
    %v5321 = vunpack.c.l.b16 %v4755
    %v5322 = vunpack.c.h.b16 %v4755
    %v5323 = vunpack.c.l.b16 %v4756
    %v5324 = vunpack.c.h.b16 %v4756
    %v5325 = vunpack.c.l.b16 %v4757
    %v5326 = vunpack.c.h.b16 %v4757
    %v5327 = vunpack.c.l.b16 %v4758
    %v5328 = vunpack.c.h.b16 %v4758
    %v5329 = vunpack.c.l.b16 %v4759
    %v5330 = vunpack.c.h.b16 %v4759
    %v5331 = vunpack.c.l.b16 %v4760
    %v5332 = vunpack.c.h.b16 %v4760
    %v5333 = vunpack.c.l.b16 %v4761
    %v5334 = vunpack.c.h.b16 %v4761
    %v5335 = vunpack.c.l.b16 %v4762
    %v5336 = vunpack.c.h.b16 %v4762
    %v5337 = vunpack.c.l.b16 %v4763
    %v5338 = vunpack.c.h.b16 %v4763
    %v5339 = vunpack.c.l.b16 %v4764
    %v5340 = vunpack.c.h.b16 %v4764
    %v5341 = vunpack.c.l.b16 %v4765
    %v5342 = vunpack.c.h.b16 %v4765
    %v5343 = vunpack.c.l.b16 %v4766
    %v5344 = vunpack.c.h.b16 %v4766
    %v5345 = vunpack.c.l.b16 %v4767
    %v5346 = vunpack.c.h.b16 %v4767
    %v5347 = vunpack.c.l.b16 %v4768
    %v5348 = vunpack.c.h.b16 %v4768
    %v5349 = vunpack.c.l.b16 %v4769
    %v5350 = vunpack.c.h.b16 %v4769
    %v5351 = vunpack.c.l.b16 %v4770
    %v5352 = vunpack.c.h.b16 %v4770
    %v5353 = vunpack.c.l.b16 %v4771
    %v5354 = vunpack.c.h.b16 %v4771
    %v5355 = vunpack.c.l.b16 %v4772
    %v5356 = vunpack.c.h.b16 %v4772
    %v5357 = vunpack.c.l.b16 %v4773
    %v5358 = vunpack.c.h.b16 %v4773
    %v5359 = vunpack.c.l.b16 %v4774
    %v5360 = vunpack.c.h.b16 %v4774
    %v5361 = vunpack.c.l.b16 %v4775
    %v5362 = vunpack.c.h.b16 %v4775
    %v5363 = vunpack.c.l.b16 %v4776
    %v5364 = vunpack.c.h.b16 %v4776
    %v5365 = vunpack.c.l.b16 %v4777
    %v5366 = vunpack.c.h.b16 %v4777
    %v5367 = vunpack.c.l.b16 %v4778
    %v5368 = vunpack.c.h.b16 %v4778
    %v5369 = vunpack.c.l.b16 %v4779
    %v5370 = vunpack.c.h.b16 %v4779
    %v5371 = vunpack.c.l.b16 %v4780
    %v5372 = vunpack.c.h.b16 %v4780
    %v5373 = vunpack.c.l.b16 %v4781
    %v5374 = vunpack.c.h.b16 %v4781
    %v5375 = vunpack.c.l.b16 %v4782
    %v5376 = vunpack.c.h.b16 %v4782
    %v5377 = vunpack.c.l.b16 %v4783
    %v5378 = vunpack.c.h.b16 %v4783
    %v5379 = vunpack.c.l.b16 %v4784
    %v5380 = vunpack.c.h.b16 %v4784
    %v5381 = vunpack.c.l.b16 %v4785
    %v5382 = vunpack.c.h.b16 %v4785
    %v5383 = vunpack.c.l.b16 %v4786
    %v5384 = vunpack.c.h.b16 %v4786
    %v5385 = vunpack.c.l.b16 %v4787
    %v5386 = vunpack.c.h.b16 %v4787
    %v5387 = vunpack.c.l.b16 %v4788
    %v5388 = vunpack.c.h.b16 %v4788
    %v5389 = vunpack.c.l.b16 %v4789
    %v5390 = vunpack.c.h.b16 %v4789
    %v5391 = vunpack.c.l.b16 %v4790
    %v5392 = vunpack.c.h.b16 %v4790
    %v5393 = vunpack.c.l.b16 %v4791
    %v5394 = vunpack.c.h.b16 %v4791
    %v5395 = vunpack.c.l.b16 %v4792
    %v5396 = vunpack.c.h.b16 %v4792
    %v5397 = vunpack.c.l.b16 %v4793
    %v5398 = vunpack.c.h.b16 %v4793
    %v5399 = vunpack.c.l.b16 %v4794
    %v5400 = vunpack.c.h.b16 %v4794
    %v5401 = vunpack.c.l.b16 %v4795
    %v5402 = vunpack.c.h.b16 %v4795
    %v5403 = vunpack.c.l.b16 %v4796
    %v5404 = vunpack.c.h.b16 %v4796
    %v5405 = vunpack.c.l.b16 %v4797
    %v5406 = vunpack.c.h.b16 %v4797
    %v5407 = vunpack.c.l.b16 %v4798
    %v5408 = vunpack.c.h.b16 %v4798
    %v5409 = vunpack.c.l.b16 %v4799
    %v5410 = vunpack.c.h.b16 %v4799
    %v5411 = vunpack.c.l.b16 %v4800
    %v5412 = vunpack.c.h.b16 %v4800
    %v5413 = vunpack.c.l.b16 %v4801
    %v5414 = vunpack.c.h.b16 %v4801
    %v5415 = vunpack.c.l.b16 %v4802
    %v5416 = vunpack.c.h.b16 %v4802
    %v5417 = vunpack.c.l.b16 %v4803
    %v5418 = vunpack.c.h.b16 %v4803
    %v5419 = vunpack.c.l.b16 %v4804
    %v5420 = vunpack.c.h.b16 %v4804
    %v5421 = vunpack.c.l.b16 %v4805
    %v5422 = vunpack.c.h.b16 %v4805
    %v5423 = vunpack.c.l.b16 %v4806
    %v5424 = vunpack.c.h.b16 %v4806
    %v5425 = vunpack.c.l.b16 %v4807
    %v5426 = vunpack.c.h.b16 %v4807
    %v5427 = vunpack.c.l.b16 %v4808
    %v5428 = vunpack.c.h.b16 %v4808
    %v5429 = vunpack.c.l.b16 %v4809
    %v5430 = vunpack.c.h.b16 %v4809
    %v5431 = vunpack.c.l.b16 %v4810
    %v5432 = vunpack.c.h.b16 %v4810
    %v5433 = vunpack.c.l.b16 %v4811
    %v5434 = vunpack.c.h.b16 %v4811
    %v5435 = vunpack.c.l.b16 %v4812
    %v5436 = vunpack.c.h.b16 %v4812
    %v5437 = vunpack.c.l.b16 %v4813
    %v5438 = vunpack.c.h.b16 %v4813
    %v5439 = vunpack.c.l.b16 %v4814
    %v5440 = vunpack.c.h.b16 %v4814
    %v5441 = vunpack.c.l.b16 %v4815
    %v5442 = vunpack.c.h.b16 %v4815
    %v5443 = vunpack.c.l.b16 %v4816
    %v5444 = vunpack.c.h.b16 %v4816
    %v5445 = vunpack.c.l.b16 %v4817
    %v5446 = vunpack.c.h.b16 %v4817
    %v5447 = vunpack.c.l.b16 %v4818
    %v5448 = vunpack.c.h.b16 %v4818
    %v5449 = vunpack.c.l.b16 %v4819
    %v5450 = vunpack.c.h.b16 %v4819
    %v5451 = vunpack.c.l.b16 %v4820
    %v5452 = vunpack.c.h.b16 %v4820
    %v5453 = vunpack.c.l.b16 %v4821
    %v5454 = vunpack.c.h.b16 %v4821
    %v5455 = vunpack.c.l.b16 %v4822
    %v5456 = vunpack.c.h.b16 %v4822
    %v5457 = vunpack.c.l.b16 %v4823
    %v5458 = vunpack.c.h.b16 %v4823
    %v5459 = vunpack.c.l.b16 %v4824
    %v5460 = vunpack.c.h.b16 %v4824
    %v5461 = vunpack.c.l.b16 %v4825
    %v5462 = vunpack.c.h.b16 %v4825
    %v5463 = vunpack.c.l.b16 %v4826
    %v5464 = vunpack.c.h.b16 %v4826
    %v5465 = vunpack.c.l.b16 %v4827
    %v5466 = vunpack.c.h.b16 %v4827
    %v5467 = vunpack.c.l.b16 %v4828
    %v5468 = vunpack.c.h.b16 %v4828
    %v5469 = vunpack.c.l.b16 %v4829
    %v5470 = vunpack.c.h.b16 %v4829
    %v5471 = vunpack.c.l.b16 %v4830
    %v5472 = vunpack.c.h.b16 %v4830
    %v5473 = vunpack.c.l.b16 %v4831
    %v5474 = vunpack.c.h.b16 %v4831
    %v5475 = vunpack.c.l.b16 %v4832
    %v5476 = vunpack.c.h.b16 %v4832
    %v5477 = vunpack.c.l.b16 %v4833
    %v5478 = vunpack.c.h.b16 %v4833
    %v5479 = vunpack.c.l.b16 %v4834
    %v5480 = vunpack.c.h.b16 %v4834
    %v5481 = vunpack.c.l.b16 %v4835
    %v5482 = vunpack.c.h.b16 %v4835
    %v5483 = vunpack.c.l.b16 %v4836
    %v5484 = vunpack.c.h.b16 %v4836
    %v5485 = vunpack.c.l.b16 %v4837
    %v5486 = vunpack.c.h.b16 %v4837
    %v5487 = vunpack.c.l.b16 %v4838
    %v5488 = vunpack.c.h.b16 %v4838
    %v5489 = vunpack.c.l.b16 %v4839
    %v5490 = vunpack.c.h.b16 %v4839
    %v5491 = vunpack.c.l.b16 %v4840
    %v5492 = vunpack.c.h.b16 %v4840
    %v5493 = vunpack.c.l.b16 %v4841
    %v5494 = vunpack.c.h.b16 %v4841
    %v5495 = vunpack.c.l.b16 %v4842
    %v5496 = vunpack.c.h.b16 %v4842
    %v5497 = vunpack.c.l.b16 %v4843
    %v5498 = vunpack.c.h.b16 %v4843
    %v5499 = vunpack.c.l.b16 %v4844
    %v5500 = vunpack.c.h.b16 %v4844
    %v5501 = vunpack.c.l.b16 %v4845
    %v5502 = vunpack.c.h.b16 %v4845
    %v5503 = vunpack.c.l.b16 %v4846
    %v5504 = vunpack.c.h.b16 %v4846
    %v5505 = vunpack.c.l.b16 %v4847
    %v5506 = vunpack.c.h.b16 %v4847
    %v5507 = vunpack.c.l.b16 %v4848
    %v5508 = vunpack.c.h.b16 %v4848
    %v5509 = vunpack.c.l.b16 %v4849
    %v5510 = vunpack.c.h.b16 %v4849
    %v5511 = vunpack.c.l.b16 %v4850
    %v5512 = vunpack.c.h.b16 %v4850
    %v5513 = vunpack.c.l.b16 %v4851
    %v5514 = vunpack.c.h.b16 %v4851
    %v5515 = vunpack.c.l.b16 %v4852
    %v5516 = vunpack.c.h.b16 %v4852
    %v5517 = vunpack.c.l.b16 %v4853
    %v5518 = vunpack.c.h.b16 %v4853
    %v5519 = vunpack.c.l.b16 %v4854
    %v5520 = vunpack.c.h.b16 %v4854
    %v5521 = vunpack.c.l.b16 %v4855
    %v5522 = vunpack.c.h.b16 %v4855
    %v5523 = vunpack.c.l.b16 %v4856
    %v5524 = vunpack.c.h.b16 %v4856
    %v5525 = vunpack.c.l.b16 %v4857
    %v5526 = vunpack.c.h.b16 %v4857
    %v5527 = vunpack.c.l.b16 %v4858
    %v5528 = vunpack.c.h.b16 %v4858
    %v5529 = vunpack.c.l.b16 %v4859
    %v5530 = vunpack.c.h.b16 %v4859
    %v5531 = vunpack.c.l.b16 %v4860
    %v5532 = vunpack.c.h.b16 %v4860
    %v5533 = vunpack.c.l.b16 %v4861
    %v5534 = vunpack.c.h.b16 %v4861
    %v5535 = vunpack.c.l.b16 %v4862
    %v5536 = vunpack.c.h.b16 %v4862
    %v5537 = vunpack.c.l.b16 %v4863
    %v5538 = vunpack.c.h.b16 %v4863
    %v5539 = vunpack.c.l.b16 %v4864
    %v5540 = vunpack.c.h.b16 %v4864
    %v5541 = vunpack.c.l.b16 %v4865
    %v5542 = vunpack.c.h.b16 %v4865
    %v5543 = vunpack.c.l.b16 %v4866
    %v5544 = vunpack.c.h.b16 %v4866
    %v5545 = vunpack.c.l.b16 %v4867
    %v5546 = vunpack.c.h.b16 %v4867
    %v5547 = vunpack.c.l.b16 %v4868
    %v5548 = vunpack.c.h.b16 %v4868
    %v5549 = vunpack.c.l.b16 %v4869
    %v5550 = vunpack.c.h.b16 %v4869
    %v5551 = vunpack.c.l.b16 %v4870
    %v5552 = vunpack.c.h.b16 %v4870
    %v5553 = vunpack.c.l.b16 %v4871
    %v5554 = vunpack.c.h.b16 %v4871
    %v5555 = vunpack.c.l.b16 %v4872
    %v5556 = vunpack.c.h.b16 %v4872
    %v5557 = vunpack.c.l.b16 %v4873
    %v5558 = vunpack.c.h.b16 %v4873
    %v5559 = vunpack.c.l.b16 %v4874
    %v5560 = vunpack.c.h.b16 %v4874
    %v5561 = vunpack.c.l.b16 %v4875
    %v5562 = vunpack.c.h.b16 %v4875
    %v5563 = vunpack.c.l.b16 %v4876
    %v5564 = vunpack.c.h.b16 %v4876
    %v5565 = vunpack.c.l.b16 %v4877
    %v5566 = vunpack.c.h.b16 %v4877
    %v5567 = vunpack.c.l.b16 %v4878
    %v5568 = vunpack.c.h.b16 %v4878
    %v5569 = vunpack.c.l.b16 %v4879
    %v5570 = vunpack.c.h.b16 %v4879
    %v5571 = vunpack.c.l.b16 %v4880
    %v5572 = vunpack.c.h.b16 %v4880
    %v5573 = vunpack.c.l.b16 %v4881
    %v5574 = vunpack.c.h.b16 %v4881
    %v5575 = vunpack.c.l.b16 %v4882
    %v5576 = vunpack.c.h.b16 %v4882
    %v5577 = vunpack.c.l.b16 %v4883
    %v5578 = vunpack.c.h.b16 %v4883
    %v5579 = vunpack.c.l.b16 %v4884
    %v5580 = vunpack.c.h.b16 %v4884
    %v5581 = vunpack.c.l.b16 %v4885
    %v5582 = vunpack.c.h.b16 %v4885
    %v5583 = vunpack.c.l.b16 %v4886
    %v5584 = vunpack.c.h.b16 %v4886
    %v5585 = vunpack.c.l.b16 %v4887
    %v5586 = vunpack.c.h.b16 %v4887
    %v5587 = vunpack.c.l.b16 %v4888
    %v5588 = vunpack.c.h.b16 %v4888
    %v5589 = vunpack.c.l.b16 %v4889
    %v5590 = vunpack.c.h.b16 %v4889
    %v5591 = vunpack.c.l.b16 %v4890
    %v5592 = vunpack.c.h.b16 %v4890
    %v5593 = vunpack.c.l.b16 %v4891
    %v5594 = vunpack.c.h.b16 %v4891
    %v5595 = vunpack.c.l.b16 %v4892
    %v5596 = vunpack.c.h.b16 %v4892
    %v5597 = vunpack.c.l.b16 %v4893
    %v5598 = vunpack.c.h.b16 %v4893
    %v5599 = vunpack.c.l.b16 %v4894
    %v5600 = vunpack.c.h.b16 %v4894
    %v5601 = vunpack.c.l.b16 %v4895
    %v5602 = vunpack.c.h.b16 %v4895
    %v5603 = vunpack.c.l.b16 %v4896
    %v5604 = vunpack.c.h.b16 %v4896
    %v5605 = vunpack.c.l.b16 %v4897
    %v5606 = vunpack.c.h.b16 %v4897
    %v5607 = vunpack.c.l.b16 %v4898
    %v5608 = vunpack.c.h.b16 %v4898
    %v5609 = vunpack.c.l.b16 %v4899
    %v5610 = vunpack.c.h.b16 %v4899
    %v5611 = vunpack.c.l.b16 %v4900
    %v5612 = vunpack.c.h.b16 %v4900
    %v5613 = vunpack.c.l.b16 %v4901
    %v5614 = vunpack.c.h.b16 %v4901
    %v5615 = vunpack.c.l.b16 %v4902
    %v5616 = vunpack.c.h.b16 %v4902
    %v5617 = vunpack.c.l.b16 %v4903
    %v5618 = vunpack.c.h.b16 %v4903
    %v5619 = vunpack.c.l.b16 %v4904
    %v5620 = vunpack.c.h.b16 %v4904
    %v5621 = vunpack.c.l.b16 %v4905
    %v5622 = vunpack.c.h.b16 %v4905
    %v5623 = vunpack.c.l.b16 %v4906
    %v5624 = vunpack.c.h.b16 %v4906
    %v5625 = vunpack.c.l.b16 %v4907
    %v5626 = vunpack.c.h.b16 %v4907
    %v5627 = vunpack.c.l.b16 %v4908
    %v5628 = vunpack.c.h.b16 %v4908
    %v5629 = vunpack.c.l.b16 %v4909
    %v5630 = vunpack.c.h.b16 %v4909
    %v5631 = vunpack.c.l.b16 %v4910
    %v5632 = vunpack.c.h.b16 %v4910
    %v5633 = vunpack.c.l.b16 %v4911
    %v5634 = vunpack.c.h.b16 %v4911
    %v5635 = vunpack.c.l.b16 %v4912
    %v5636 = vunpack.c.h.b16 %v4912
    %v5637 = vunpack.c.l.b16 %v4913
    %v5638 = vunpack.c.h.b16 %v4913
    %v5639 = vunpack.c.l.b16 %v4914
    %v5640 = vunpack.c.h.b16 %v4914
    %v5641 = vunpack.c.l.b16 %v4915
    %v5642 = vunpack.c.h.b16 %v4915
    %v5643 = vunpack.c.l.b16 %v4916
    %v5644 = vunpack.c.h.b16 %v4916
    %v5645 = vunpack.c.l.b16 %v4917
    %v5646 = vunpack.c.h.b16 %v4917
    %v5647 = vunpack.c.l.b16 %v4918
    %v5648 = vunpack.c.h.b16 %v4918
    %v5649 = vunpack.c.l.b16 %v4919
    %v5650 = vunpack.c.h.b16 %v4919
    %v5651 = vunpack.c.l.b16 %v4920
    %v5652 = vunpack.c.h.b16 %v4920
    %v5653 = vunpack.c.l.b16 %v4921
    %v5654 = vunpack.c.h.b16 %v4921
    %v5655 = vunpack.c.l.b16 %v4922
    %v5656 = vunpack.c.h.b16 %v4922
    %v5657 = vunpack.c.l.b16 %v4923
    %v5658 = vunpack.c.h.b16 %v4923
    %v5659 = vunpack.c.l.b16 %v4924
    %v5660 = vunpack.c.h.b16 %v4924
    %v5661 = vunpack.c.l.b16 %v4925
    %v5662 = vunpack.c.h.b16 %v4925
    %v5663 = vunpack.c.l.b16 %v4926
    %v5664 = vunpack.c.h.b16 %v4926
    %v5665 = vunpack.c.l.b16 %v4927
    %v5666 = vunpack.c.h.b16 %v4927
    %v5667 = vunpack.c.l.b16 %v4928
    %v5668 = vunpack.c.h.b16 %v4928
    %v5669 = vunpack.c.l.b16 %v4929
    %v5670 = vunpack.c.h.b16 %v4929
    %v5671 = vunpack.c.l.b16 %v4930
    %v5672 = vunpack.c.h.b16 %v4930
    %v5673 = vunpack.c.l.b16 %v4931
    %v5674 = vunpack.c.h.b16 %v4931
    %v5675 = vunpack.c.l.b16 %v4932
    %v5676 = vunpack.c.h.b16 %v4932
    %v5677 = vunpack.c.l.b16 %v4933
    %v5678 = vunpack.c.h.b16 %v4933
    %v5679 = vunpack.c.l.b16 %v4934
    %v5680 = vunpack.c.h.b16 %v4934
    %v5681 = vunpack.c.l.b16 %v4935
    %v5682 = vunpack.c.h.b16 %v4935
    %v5683 = vunpack.c.l.b16 %v4936
    %v5684 = vunpack.c.h.b16 %v4936
    %v5685 = vunpack.c.l.b16 %v4937
    %v5686 = vunpack.c.h.b16 %v4937
    %v5687 = vunpack.c.l.b16 %v4938
    %v5688 = vunpack.c.h.b16 %v4938
    %v5689 = vunpack.c.l.b16 %v4939
    %v5690 = vunpack.c.h.b16 %v4939
    %v5691 = vunpack.c.l.b16 %v4940
    %v5692 = vunpack.c.h.b16 %v4940
    %v5693 = vunpack.c.l.b16 %v4941
    %v5694 = vunpack.c.h.b16 %v4941
    %v5695 = vunpack.c.l.b16 %v4942
    %v5696 = vunpack.c.h.b16 %v4942
    %v5697 = vunpack.c.l.b16 %v4943
    %v5698 = vunpack.c.h.b16 %v4943
    %v5699 = vunpack.c.l.b16 %v4944
    %v5700 = vunpack.c.h.b16 %v4944
    %v5701 = vunpack.c.l.b16 %v4945
    %v5702 = vunpack.c.h.b16 %v4945
    %v5703 = vunpack.c.l.b16 %v4946
    %v5704 = vunpack.c.h.b16 %v4946
    %v5705 = vunpack.c.l.b16 %v4947
    %v5706 = vunpack.c.h.b16 %v4947
    %v5707 = vunpack.c.l.b16 %v4948
    %v5708 = vunpack.c.h.b16 %v4948
    %v5709 = vunpack.c.l.b16 %v4949
    %v5710 = vunpack.c.h.b16 %v4949
    %v5711 = vunpack.c.l.b16 %v4950
    %v5712 = vunpack.c.h.b16 %v4950
    %v5713 = vunpack.c.l.b16 %v4951
    %v5714 = vunpack.c.h.b16 %v4951
    %v5715 = vunpack.c.l.b16 %v4952
    %v5716 = vunpack.c.h.b16 %v4952
    %v5717 = vunpack.c.l.b16 %v4953
    %v5718 = vunpack.c.h.b16 %v4953
    %v5719 = vunpack.c.l.b16 %v4954
    %v5720 = vunpack.c.h.b16 %v4954
    %v5721 = vunpack.c.l.b16 %v4955
    %v5722 = vunpack.c.h.b16 %v4955
    %v5723 = vunpack.c.l.b16 %v4956
    %v5724 = vunpack.c.h.b16 %v4956
    %v5725 = vunpack.c.l.b16 %v4957
    %v5726 = vunpack.c.h.b16 %v4957
    %v5727 = vunpack.c.l.b16 %v4958
    %v5728 = vunpack.c.h.b16 %v4958
    %v5729 = vunpack.c.l.b16 %v4959
    %v5730 = vunpack.c.h.b16 %v4959
    %v5731 = vunpack.c.l.b16 %v4960
    %v5732 = vunpack.c.h.b16 %v4960
    %v5733 = vunpack.c.l.b16 %v4961
    %v5734 = vunpack.c.h.b16 %v4961
    %v5735 = vunpack.c.l.b16 %v4962
    %v5736 = vunpack.c.h.b16 %v4962
    %v5737 = vunpack.c.l.b16 %v4963
    %v5738 = vunpack.c.h.b16 %v4963
    %v5739 = vunpack.c.l.b16 %v4964
    %v5740 = vunpack.c.h.b16 %v4964
    %v5741 = vunpack.c.l.b16 %v4965
    %v5742 = vunpack.c.h.b16 %v4965
    %v5743 = vunpack.c.l.b16 %v4966
    %v5744 = vunpack.c.h.b16 %v4966
    %v5745 = vpack.c.b16 %v5237, %v5233
    %v5746 = vpack.c.b16 %v5238, %v5234
    %v5747 = vpack.c.b16 %v5239, %v5235
    %v5748 = vpack.c.b16 %v5240, %v5236
    %v5749 = vpack.c.b16 %v5245, %v5241
    %v5750 = vpack.c.b16 %v5246, %v5242
    %v5751 = vpack.c.b16 %v5247, %v5243
    %v5752 = vpack.c.b16 %v5248, %v5244
    %v5753 = vpack.c.b16 %v5253, %v5249
    %v5754 = vpack.c.b16 %v5254, %v5250
    %v5755 = vpack.c.b16 %v5255, %v5251
    %v5756 = vpack.c.b16 %v5256, %v5252
    %v5757 = vpack.c.b16 %v5261, %v5257
    %v5758 = vpack.c.b16 %v5262, %v5258
    %v5759 = vpack.c.b16 %v5263, %v5259
    %v5760 = vpack.c.b16 %v5264, %v5260
    %v5761 = vpack.c.b16 %v5269, %v5265
    %v5762 = vpack.c.b16 %v5270, %v5266
    %v5763 = vpack.c.b16 %v5271, %v5267
    %v5764 = vpack.c.b16 %v5272, %v5268
    %v5765 = vpack.c.b16 %v5277, %v5273
    %v5766 = vpack.c.b16 %v5278, %v5274
    %v5767 = vpack.c.b16 %v5279, %v5275
    %v5768 = vpack.c.b16 %v5280, %v5276
    %v5769 = vpack.c.b16 %v5285, %v5281
    %v5770 = vpack.c.b16 %v5286, %v5282
    %v5771 = vpack.c.b16 %v5287, %v5283
    %v5772 = vpack.c.b16 %v5288, %v5284
    %v5773 = vpack.c.b16 %v5293, %v5289
    %v5774 = vpack.c.b16 %v5294, %v5290
    %v5775 = vpack.c.b16 %v5295, %v5291
    %v5776 = vpack.c.b16 %v5296, %v5292
    %v5777 = vpack.c.b16 %v5301, %v5297
    %v5778 = vpack.c.b16 %v5302, %v5298
    %v5779 = vpack.c.b16 %v5303, %v5299
    %v5780 = vpack.c.b16 %v5304, %v5300
    %v5781 = vpack.c.b16 %v5309, %v5305
    %v5782 = vpack.c.b16 %v5310, %v5306
    %v5783 = vpack.c.b16 %v5311, %v5307
    %v5784 = vpack.c.b16 %v5312, %v5308
    %v5785 = vpack.c.b16 %v5317, %v5313
    %v5786 = vpack.c.b16 %v5318, %v5314
    %v5787 = vpack.c.b16 %v5319, %v5315
    %v5788 = vpack.c.b16 %v5320, %v5316
    %v5789 = vpack.c.b16 %v5325, %v5321
    %v5790 = vpack.c.b16 %v5326, %v5322
    %v5791 = vpack.c.b16 %v5327, %v5323
    %v5792 = vpack.c.b16 %v5328, %v5324
    %v5793 = vpack.c.b16 %v5333, %v5329
    %v5794 = vpack.c.b16 %v5334, %v5330
    %v5795 = vpack.c.b16 %v5335, %v5331
    %v5796 = vpack.c.b16 %v5336, %v5332
    %v5797 = vpack.c.b16 %v5341, %v5337
    %v5798 = vpack.c.b16 %v5342, %v5338
    %v5799 = vpack.c.b16 %v5343, %v5339
    %v5800 = vpack.c.b16 %v5344, %v5340
    %v5801 = vpack.c.b16 %v5349, %v5345
    %v5802 = vpack.c.b16 %v5350, %v5346
    %v5803 = vpack.c.b16 %v5351, %v5347
    %v5804 = vpack.c.b16 %v5352, %v5348
    %v5805 = vpack.c.b16 %v5357, %v5353
    %v5806 = vpack.c.b16 %v5358, %v5354
    %v5807 = vpack.c.b16 %v5359, %v5355
    %v5808 = vpack.c.b16 %v5360, %v5356
    %v5809 = vpack.c.b16 %v5365, %v5361
    %v5810 = vpack.c.b16 %v5366, %v5362
    %v5811 = vpack.c.b16 %v5367, %v5363
    %v5812 = vpack.c.b16 %v5368, %v5364
    %v5813 = vpack.c.b16 %v5373, %v5369
    %v5814 = vpack.c.b16 %v5374, %v5370
    %v5815 = vpack.c.b16 %v5375, %v5371
    %v5816 = vpack.c.b16 %v5376, %v5372
    %v5817 = vpack.c.b16 %v5381, %v5377
    %v5818 = vpack.c.b16 %v5382, %v5378
    %v5819 = vpack.c.b16 %v5383, %v5379
    %v5820 = vpack.c.b16 %v5384, %v5380
    %v5821 = vpack.c.b16 %v5389, %v5385
    %v5822 = vpack.c.b16 %v5390, %v5386
    %v5823 = vpack.c.b16 %v5391, %v5387
    %v5824 = vpack.c.b16 %v5392, %v5388
    %v5825 = vpack.c.b16 %v5397, %v5393
    %v5826 = vpack.c.b16 %v5398, %v5394
    %v5827 = vpack.c.b16 %v5399, %v5395
    %v5828 = vpack.c.b16 %v5400, %v5396
    %v5829 = vpack.c.b16 %v5405, %v5401
    %v5830 = vpack.c.b16 %v5406, %v5402
    %v5831 = vpack.c.b16 %v5407, %v5403
    %v5832 = vpack.c.b16 %v5408, %v5404
    %v5833 = vpack.c.b16 %v5413, %v5409
    %v5834 = vpack.c.b16 %v5414, %v5410
    %v5835 = vpack.c.b16 %v5415, %v5411
    %v5836 = vpack.c.b16 %v5416, %v5412
    %v5837 = vpack.c.b16 %v5421, %v5417
    %v5838 = vpack.c.b16 %v5422, %v5418
    %v5839 = vpack.c.b16 %v5423, %v5419
    %v5840 = vpack.c.b16 %v5424, %v5420
    %v5841 = vpack.c.b16 %v5429, %v5425
    %v5842 = vpack.c.b16 %v5430, %v5426
    %v5843 = vpack.c.b16 %v5431, %v5427
    %v5844 = vpack.c.b16 %v5432, %v5428
    %v5845 = vpack.c.b16 %v5437, %v5433
    %v5846 = vpack.c.b16 %v5438, %v5434
    %v5847 = vpack.c.b16 %v5439, %v5435
    %v5848 = vpack.c.b16 %v5440, %v5436
    %v5849 = vpack.c.b16 %v5445, %v5441
    %v5850 = vpack.c.b16 %v5446, %v5442
    %v5851 = vpack.c.b16 %v5447, %v5443
    %v5852 = vpack.c.b16 %v5448, %v5444
    %v5853 = vpack.c.b16 %v5453, %v5449
    %v5854 = vpack.c.b16 %v5454, %v5450
    %v5855 = vpack.c.b16 %v5455, %v5451
    %v5856 = vpack.c.b16 %v5456, %v5452
    %v5857 = vpack.c.b16 %v5461, %v5457
    %v5858 = vpack.c.b16 %v5462, %v5458
    %v5859 = vpack.c.b16 %v5463, %v5459
    %v5860 = vpack.c.b16 %v5464, %v5460
    %v5861 = vpack.c.b16 %v5469, %v5465
    %v5862 = vpack.c.b16 %v5470, %v5466
    %v5863 = vpack.c.b16 %v5471, %v5467
    %v5864 = vpack.c.b16 %v5472, %v5468
    %v5865 = vpack.c.b16 %v5477, %v5473
    %v5866 = vpack.c.b16 %v5478, %v5474
    %v5867 = vpack.c.b16 %v5479, %v5475
    %v5868 = vpack.c.b16 %v5480, %v5476
    %v5869 = vpack.c.b16 %v5485, %v5481
    %v5870 = vpack.c.b16 %v5486, %v5482
    %v5871 = vpack.c.b16 %v5487, %v5483
    %v5872 = vpack.c.b16 %v5488, %v5484
    %v5873 = vpack.c.b16 %v5493, %v5489
    %v5874 = vpack.c.b16 %v5494, %v5490
    %v5875 = vpack.c.b16 %v5495, %v5491
    %v5876 = vpack.c.b16 %v5496, %v5492
    %v5877 = vpack.c.b16 %v5501, %v5497
    %v5878 = vpack.c.b16 %v5502, %v5498
    %v5879 = vpack.c.b16 %v5503, %v5499
    %v5880 = vpack.c.b16 %v5504, %v5500
    %v5881 = vpack.c.b16 %v5509, %v5505
    %v5882 = vpack.c.b16 %v5510, %v5506
    %v5883 = vpack.c.b16 %v5511, %v5507
    %v5884 = vpack.c.b16 %v5512, %v5508
    %v5885 = vpack.c.b16 %v5517, %v5513
    %v5886 = vpack.c.b16 %v5518, %v5514
    %v5887 = vpack.c.b16 %v5519, %v5515
    %v5888 = vpack.c.b16 %v5520, %v5516
    %v5889 = vpack.c.b16 %v5525, %v5521
    %v5890 = vpack.c.b16 %v5526, %v5522
    %v5891 = vpack.c.b16 %v5527, %v5523
    %v5892 = vpack.c.b16 %v5528, %v5524
    %v5893 = vpack.c.b16 %v5533, %v5529
    %v5894 = vpack.c.b16 %v5534, %v5530
    %v5895 = vpack.c.b16 %v5535, %v5531
    %v5896 = vpack.c.b16 %v5536, %v5532
    %v5897 = vpack.c.b16 %v5541, %v5537
    %v5898 = vpack.c.b16 %v5542, %v5538
    %v5899 = vpack.c.b16 %v5543, %v5539
    %v5900 = vpack.c.b16 %v5544, %v5540
    %v5901 = vpack.c.b16 %v5549, %v5545
    %v5902 = vpack.c.b16 %v5550, %v5546
    %v5903 = vpack.c.b16 %v5551, %v5547
    %v5904 = vpack.c.b16 %v5552, %v5548
    %v5905 = vpack.c.b16 %v5557, %v5553
    %v5906 = vpack.c.b16 %v5558, %v5554
    %v5907 = vpack.c.b16 %v5559, %v5555
    %v5908 = vpack.c.b16 %v5560, %v5556
    %v5909 = vpack.c.b16 %v5565, %v5561
    %v5910 = vpack.c.b16 %v5566, %v5562
    %v5911 = vpack.c.b16 %v5567, %v5563
    %v5912 = vpack.c.b16 %v5568, %v5564
    %v5913 = vpack.c.b16 %v5573, %v5569
    %v5914 = vpack.c.b16 %v5574, %v5570
    %v5915 = vpack.c.b16 %v5575, %v5571
    %v5916 = vpack.c.b16 %v5576, %v5572
    %v5917 = vpack.c.b16 %v5581, %v5577
    %v5918 = vpack.c.b16 %v5582, %v5578
    %v5919 = vpack.c.b16 %v5583, %v5579
    %v5920 = vpack.c.b16 %v5584, %v5580
    %v5921 = vpack.c.b16 %v5589, %v5585
    %v5922 = vpack.c.b16 %v5590, %v5586
    %v5923 = vpack.c.b16 %v5591, %v5587
    %v5924 = vpack.c.b16 %v5592, %v5588
    %v5925 = vpack.c.b16 %v5597, %v5593
    %v5926 = vpack.c.b16 %v5598, %v5594
    %v5927 = vpack.c.b16 %v5599, %v5595
    %v5928 = vpack.c.b16 %v5600, %v5596
    %v5929 = vpack.c.b16 %v5605, %v5601
    %v5930 = vpack.c.b16 %v5606, %v5602
    %v5931 = vpack.c.b16 %v5607, %v5603
    %v5932 = vpack.c.b16 %v5608, %v5604
    %v5933 = vpack.c.b16 %v5613, %v5609
    %v5934 = vpack.c.b16 %v5614, %v5610
    %v5935 = vpack.c.b16 %v5615, %v5611
    %v5936 = vpack.c.b16 %v5616, %v5612
    %v5937 = vpack.c.b16 %v5621, %v5617
    %v5938 = vpack.c.b16 %v5622, %v5618
    %v5939 = vpack.c.b16 %v5623, %v5619
    %v5940 = vpack.c.b16 %v5624, %v5620
    %v5941 = vpack.c.b16 %v5629, %v5625
    %v5942 = vpack.c.b16 %v5630, %v5626
    %v5943 = vpack.c.b16 %v5631, %v5627
    %v5944 = vpack.c.b16 %v5632, %v5628
    %v5945 = vpack.c.b16 %v5637, %v5633
    %v5946 = vpack.c.b16 %v5638, %v5634
    %v5947 = vpack.c.b16 %v5639, %v5635
    %v5948 = vpack.c.b16 %v5640, %v5636
    %v5949 = vpack.c.b16 %v5645, %v5641
    %v5950 = vpack.c.b16 %v5646, %v5642
    %v5951 = vpack.c.b16 %v5647, %v5643
    %v5952 = vpack.c.b16 %v5648, %v5644
    %v5953 = vpack.c.b16 %v5653, %v5649
    %v5954 = vpack.c.b16 %v5654, %v5650
    %v5955 = vpack.c.b16 %v5655, %v5651
    %v5956 = vpack.c.b16 %v5656, %v5652
    %v5957 = vpack.c.b16 %v5661, %v5657
    %v5958 = vpack.c.b16 %v5662, %v5658
    %v5959 = vpack.c.b16 %v5663, %v5659
    %v5960 = vpack.c.b16 %v5664, %v5660
    %v5961 = vpack.c.b16 %v5669, %v5665
    %v5962 = vpack.c.b16 %v5670, %v5666
    %v5963 = vpack.c.b16 %v5671, %v5667
    %v5964 = vpack.c.b16 %v5672, %v5668
    %v5965 = vpack.c.b16 %v5677, %v5673
    %v5966 = vpack.c.b16 %v5678, %v5674
    %v5967 = vpack.c.b16 %v5679, %v5675
    %v5968 = vpack.c.b16 %v5680, %v5676
    %v5969 = vpack.c.b16 %v5685, %v5681
    %v5970 = vpack.c.b16 %v5686, %v5682
    %v5971 = vpack.c.b16 %v5687, %v5683
    %v5972 = vpack.c.b16 %v5688, %v5684
    %v5973 = vpack.c.b16 %v5693, %v5689
    %v5974 = vpack.c.b16 %v5694, %v5690
    %v5975 = vpack.c.b16 %v5695, %v5691
    %v5976 = vpack.c.b16 %v5696, %v5692
    %v5977 = vpack.c.b16 %v5701, %v5697
    %v5978 = vpack.c.b16 %v5702, %v5698
    %v5979 = vpack.c.b16 %v5703, %v5699
    %v5980 = vpack.c.b16 %v5704, %v5700
    %v5981 = vpack.c.b16 %v5709, %v5705
    %v5982 = vpack.c.b16 %v5710, %v5706
    %v5983 = vpack.c.b16 %v5711, %v5707
    %v5984 = vpack.c.b16 %v5712, %v5708
    %v5985 = vpack.c.b16 %v5717, %v5713
    %v5986 = vpack.c.b16 %v5718, %v5714
    %v5987 = vpack.c.b16 %v5719, %v5715
    %v5988 = vpack.c.b16 %v5720, %v5716
    %v5989 = vpack.c.b16 %v5725, %v5721
    %v5990 = vpack.c.b16 %v5726, %v5722
    %v5991 = vpack.c.b16 %v5727, %v5723
    %v5992 = vpack.c.b16 %v5728, %v5724
    %v5993 = vpack.c.b16 %v5733, %v5729
    %v5994 = vpack.c.b16 %v5734, %v5730
    %v5995 = vpack.c.b16 %v5735, %v5731
    %v5996 = vpack.c.b16 %v5736, %v5732
    %v5997 = vpack.c.b16 %v5741, %v5737
    %v5998 = vpack.c.b16 %v5742, %v5738
    %v5999 = vpack.c.b16 %v5743, %v5739
    %v6000 = vpack.c.b16 %v5744, %v5740
    %6257 = vmatpush.bf16.msra.mxu0 %v5773
    %6258 = vmatpush.bf16.msra.mxu0 %v5769
    %6259 = vmatpush.bf16.msra.mxu0 %v5765
    %6260 = vmatpush.bf16.msra.mxu0 %v5761
    %6261 = vmatpush.bf16.msra.mxu0 %v5757
    %6262 = vmatpush.bf16.msra.mxu0 %v5753
    %6263 = vmatpush.bf16.msra.mxu0 %v5749
    %6264 = vmatpush.bf16.msra.mxu0 %v5745
    %6265 = vmatmul.bf16.gmra.mxu0 %v4703
    %v6266 = vpop.f32.mrf.mxu0
    %v6267 = vadd.f32 %v4969, %v6266
    %v6268 = vpop.f32.mrf.mxu0
    %v6269 = vadd.f32 %v4969, %v6268
    %6270 = vdwg.mxu0
    %6271 = vmatpush.bf16.msra.mxu0 %v5805
    %6272 = vmatpush.bf16.msra.mxu0 %v5801
    %6273 = vmatpush.bf16.msra.mxu0 %v5797
    %6274 = vmatpush.bf16.msra.mxu0 %v5793
    %6275 = vmatpush.bf16.msra.mxu0 %v5789
    %6276 = vmatpush.bf16.msra.mxu0 %v5785
    %6277 = vmatpush.bf16.msra.mxu0 %v5781
    %6278 = vmatpush.bf16.msra.mxu0 %v5777
    %6279 = vmatmul.bf16.gmra.mxu0 %v4704
    %v6280 = vpop.f32.mrf.mxu0
    %v6281 = vadd.f32 %v6267, %v6280
    %v6282 = vpop.f32.mrf.mxu0
    %v6283 = vadd.f32 %v6269, %v6282
    %6284 = vdwg.mxu0
    %6285 = vmatpush.bf16.msra.mxu0 %v5837
    %6286 = vmatpush.bf16.msra.mxu0 %v5833
    %6287 = vmatpush.bf16.msra.mxu0 %v5829
    %6288 = vmatpush.bf16.msra.mxu0 %v5825
    %6289 = vmatpush.bf16.msra.mxu0 %v5821
    %6290 = vmatpush.bf16.msra.mxu0 %v5817
    %6291 = vmatpush.bf16.msra.mxu0 %v5813
    %6292 = vmatpush.bf16.msra.mxu0 %v5809
    %6293 = vmatmul.bf16.gmra.mxu0 %v4705
    %v6294 = vpop.f32.mrf.mxu0
    %v6295 = vadd.f32 %v6281, %v6294
    %v6296 = vpop.f32.mrf.mxu0
    %v6297 = vadd.f32 %v6283, %v6296
    %6298 = vdwg.mxu0
    %6299 = vmatpush.bf16.msra.mxu0 %v5869
    %6300 = vmatpush.bf16.msra.mxu0 %v5865
    %6301 = vmatpush.bf16.msra.mxu0 %v5861
    %6302 = vmatpush.bf16.msra.mxu0 %v5857
    %6303 = vmatpush.bf16.msra.mxu0 %v5853
    %6304 = vmatpush.bf16.msra.mxu0 %v5849
    %6305 = vmatpush.bf16.msra.mxu0 %v5845
    %6306 = vmatpush.bf16.msra.mxu0 %v5841
    %6307 = vmatmul.bf16.gmra.mxu0 %v4706
    %v6308 = vpop.f32.mrf.mxu0
    %v6309 = vadd.f32 %v6295, %v6308
    %v6310 = vpop.f32.mrf.mxu0
    %v6311 = vadd.f32 %v6297, %v6310
    %6312 = vdwg.mxu0
    %6313 = vmatpush.bf16.msra.mxu0 %v5901
    %6314 = vmatpush.bf16.msra.mxu0 %v5897
    %6315 = vmatpush.bf16.msra.mxu0 %v5893
    %6316 = vmatpush.bf16.msra.mxu0 %v5889
    %6317 = vmatpush.bf16.msra.mxu0 %v5885
    %6318 = vmatpush.bf16.msra.mxu0 %v5881
    %6319 = vmatpush.bf16.msra.mxu0 %v5877
    %6320 = vmatpush.bf16.msra.mxu0 %v5873
    %6321 = vmatmul.bf16.gmra.mxu0 %v4707
    %v6322 = vpop.f32.mrf.mxu0
    %v6323 = vadd.f32 %v6309, %v6322
    %v6324 = vpop.f32.mrf.mxu0
    %v6325 = vadd.f32 %v6311, %v6324
    %6326 = vdwg.mxu0
    %6327 = vmatpush.bf16.msra.mxu0 %v5933
    %6328 = vmatpush.bf16.msra.mxu0 %v5929
    %6329 = vmatpush.bf16.msra.mxu0 %v5925
    %6330 = vmatpush.bf16.msra.mxu0 %v5921
    %6331 = vmatpush.bf16.msra.mxu0 %v5917
    %6332 = vmatpush.bf16.msra.mxu0 %v5913
    %6333 = vmatpush.bf16.msra.mxu0 %v5909
    %6334 = vmatpush.bf16.msra.mxu0 %v5905
    %6335 = vmatmul.bf16.gmra.mxu0 %v4708
    %v6336 = vpop.f32.mrf.mxu0
    %v6337 = vadd.f32 %v6323, %v6336
    %v6338 = vpop.f32.mrf.mxu0
    %v6339 = vadd.f32 %v6325, %v6338
    %6340 = vdwg.mxu0
    %6341 = vmatpush.bf16.msra.mxu0 %v5965
    %6342 = vmatpush.bf16.msra.mxu0 %v5961
    %6343 = vmatpush.bf16.msra.mxu0 %v5957
    %6344 = vmatpush.bf16.msra.mxu0 %v5953
    %6345 = vmatpush.bf16.msra.mxu0 %v5949
    %6346 = vmatpush.bf16.msra.mxu0 %v5945
    %6347 = vmatpush.bf16.msra.mxu0 %v5941
    %6348 = vmatpush.bf16.msra.mxu0 %v5937
    %6349 = vmatmul.bf16.gmra.mxu0 %v4709
    %v6350 = vpop.f32.mrf.mxu0
    %v6351 = vadd.f32 %v6337, %v6350
    %v6352 = vpop.f32.mrf.mxu0
    %v6353 = vadd.f32 %v6339, %v6352
    %6354 = vdwg.mxu0
    %6355 = vmatpush.bf16.msra.mxu0 %v5997
    %6356 = vmatpush.bf16.msra.mxu0 %v5993
    %6357 = vmatpush.bf16.msra.mxu0 %v5989
    %6358 = vmatpush.bf16.msra.mxu0 %v5985
    %6359 = vmatpush.bf16.msra.mxu0 %v5981
    %6360 = vmatpush.bf16.msra.mxu0 %v5977
    %6361 = vmatpush.bf16.msra.mxu0 %v5973
    %6362 = vmatpush.bf16.msra.mxu0 %v5969
    %6363 = vmatmul.bf16.gmra.mxu0 %v4710
    %v6364 = vpop.f32.mrf.mxu0
    %v6365 = vadd.f32 %v6351, %v6364
    %v6366 = vpop.f32.mrf.mxu0
    %v6367 = vadd.f32 %v6353, %v6366
    %6368 = vdwg.mxu0
    %6369 = vmatpush.bf16.msra.mxu0 %v5774
    %6370 = vmatpush.bf16.msra.mxu0 %v5770
    %6371 = vmatpush.bf16.msra.mxu0 %v5766
    %6372 = vmatpush.bf16.msra.mxu0 %v5762
    %6373 = vmatpush.bf16.msra.mxu0 %v5758
    %6374 = vmatpush.bf16.msra.mxu0 %v5754
    %6375 = vmatpush.bf16.msra.mxu0 %v5750
    %6376 = vmatpush.bf16.msra.mxu0 %v5746
    %6377 = vmatmul.bf16.gmra.mxu0 %v4703
    %v6378 = vpop.f32.mrf.mxu0
    %v6379 = vadd.f32 %v4970, %v6378
    %v6380 = vpop.f32.mrf.mxu0
    %v6381 = vadd.f32 %v4970, %v6380
    %6382 = vdwg.mxu0
    %6383 = vmatpush.bf16.msra.mxu0 %v5806
    %6384 = vmatpush.bf16.msra.mxu0 %v5802
    %6385 = vmatpush.bf16.msra.mxu0 %v5798
    %6386 = vmatpush.bf16.msra.mxu0 %v5794
    %6387 = vmatpush.bf16.msra.mxu0 %v5790
    %6388 = vmatpush.bf16.msra.mxu0 %v5786
    %6389 = vmatpush.bf16.msra.mxu0 %v5782
    %6390 = vmatpush.bf16.msra.mxu0 %v5778
    %6391 = vmatmul.bf16.gmra.mxu0 %v4704
    %v6392 = vpop.f32.mrf.mxu0
    %v6393 = vadd.f32 %v6379, %v6392
    %v6394 = vpop.f32.mrf.mxu0
    %v6395 = vadd.f32 %v6381, %v6394
    %6396 = vdwg.mxu0
    %6397 = vmatpush.bf16.msra.mxu0 %v5838
    %6398 = vmatpush.bf16.msra.mxu0 %v5834
    %6399 = vmatpush.bf16.msra.mxu0 %v5830
    %6400 = vmatpush.bf16.msra.mxu0 %v5826
    %6401 = vmatpush.bf16.msra.mxu0 %v5822
    %6402 = vmatpush.bf16.msra.mxu0 %v5818
    %6403 = vmatpush.bf16.msra.mxu0 %v5814
    %6404 = vmatpush.bf16.msra.mxu0 %v5810
    %6405 = vmatmul.bf16.gmra.mxu0 %v4705
    %v6406 = vpop.f32.mrf.mxu0
    %v6407 = vadd.f32 %v6393, %v6406
    %v6408 = vpop.f32.mrf.mxu0
    %v6409 = vadd.f32 %v6395, %v6408
    %6410 = vdwg.mxu0
    %6411 = vmatpush.bf16.msra.mxu0 %v5870
    %6412 = vmatpush.bf16.msra.mxu0 %v5866
    %6413 = vmatpush.bf16.msra.mxu0 %v5862
    %6414 = vmatpush.bf16.msra.mxu0 %v5858
    %6415 = vmatpush.bf16.msra.mxu0 %v5854
    %6416 = vmatpush.bf16.msra.mxu0 %v5850
    %6417 = vmatpush.bf16.msra.mxu0 %v5846
    %6418 = vmatpush.bf16.msra.mxu0 %v5842
    %6419 = vmatmul.bf16.gmra.mxu0 %v4706
    %v6420 = vpop.f32.mrf.mxu0
    %v6421 = vadd.f32 %v6407, %v6420
    %v6422 = vpop.f32.mrf.mxu0
    %v6423 = vadd.f32 %v6409, %v6422
    %6424 = vdwg.mxu0
    %6425 = vmatpush.bf16.msra.mxu0 %v5902
    %6426 = vmatpush.bf16.msra.mxu0 %v5898
    %6427 = vmatpush.bf16.msra.mxu0 %v5894
    %6428 = vmatpush.bf16.msra.mxu0 %v5890
    %6429 = vmatpush.bf16.msra.mxu0 %v5886
    %6430 = vmatpush.bf16.msra.mxu0 %v5882
    %6431 = vmatpush.bf16.msra.mxu0 %v5878
    %6432 = vmatpush.bf16.msra.mxu0 %v5874
    %6433 = vmatmul.bf16.gmra.mxu0 %v4707
    %v6434 = vpop.f32.mrf.mxu0
    %v6435 = vadd.f32 %v6421, %v6434
    %v6436 = vpop.f32.mrf.mxu0
    %v6437 = vadd.f32 %v6423, %v6436
    %6438 = vdwg.mxu0
    %6439 = vmatpush.bf16.msra.mxu0 %v5934
    %6440 = vmatpush.bf16.msra.mxu0 %v5930
    %6441 = vmatpush.bf16.msra.mxu0 %v5926
    %6442 = vmatpush.bf16.msra.mxu0 %v5922
    %6443 = vmatpush.bf16.msra.mxu0 %v5918
    %6444 = vmatpush.bf16.msra.mxu0 %v5914
    %6445 = vmatpush.bf16.msra.mxu0 %v5910
    %6446 = vmatpush.bf16.msra.mxu0 %v5906
    %6447 = vmatmul.bf16.gmra.mxu0 %v4708
    %v6448 = vpop.f32.mrf.mxu0
    %v6449 = vadd.f32 %v6435, %v6448
    %v6450 = vpop.f32.mrf.mxu0
    %v6451 = vadd.f32 %v6437, %v6450
    %6452 = vdwg.mxu0
    %6453 = vmatpush.bf16.msra.mxu0 %v5966
    %6454 = vmatpush.bf16.msra.mxu0 %v5962
    %6455 = vmatpush.bf16.msra.mxu0 %v5958
    %6456 = vmatpush.bf16.msra.mxu0 %v5954
    %6457 = vmatpush.bf16.msra.mxu0 %v5950
    %6458 = vmatpush.bf16.msra.mxu0 %v5946
    %6459 = vmatpush.bf16.msra.mxu0 %v5942
    %6460 = vmatpush.bf16.msra.mxu0 %v5938
    %6461 = vmatmul.bf16.gmra.mxu0 %v4709
    %v6462 = vpop.f32.mrf.mxu0
    %v6463 = vadd.f32 %v6449, %v6462
    %v6464 = vpop.f32.mrf.mxu0
    %v6465 = vadd.f32 %v6451, %v6464
    %6466 = vdwg.mxu0
    %6467 = vmatpush.bf16.msra.mxu0 %v5998
    %6468 = vmatpush.bf16.msra.mxu0 %v5994
    %6469 = vmatpush.bf16.msra.mxu0 %v5990
    %6470 = vmatpush.bf16.msra.mxu0 %v5986
    %6471 = vmatpush.bf16.msra.mxu0 %v5982
    %6472 = vmatpush.bf16.msra.mxu0 %v5978
    %6473 = vmatpush.bf16.msra.mxu0 %v5974
    %6474 = vmatpush.bf16.msra.mxu0 %v5970
    %6475 = vmatmul.bf16.gmra.mxu0 %v4710
    %v6476 = vpop.f32.mrf.mxu0
    %v6477 = vadd.f32 %v6463, %v6476
    %v6478 = vpop.f32.mrf.mxu0
    %v6479 = vadd.f32 %v6465, %v6478
    %6480 = vdwg.mxu0
    %6481 = vmatpush.bf16.msra.mxu0 %v5775
    %6482 = vmatpush.bf16.msra.mxu0 %v5771
    %6483 = vmatpush.bf16.msra.mxu0 %v5767
    %6484 = vmatpush.bf16.msra.mxu0 %v5763
    %6485 = vmatpush.bf16.msra.mxu0 %v5759
    %6486 = vmatpush.bf16.msra.mxu0 %v5755
    %6487 = vmatpush.bf16.msra.mxu0 %v5751
    %6488 = vmatpush.bf16.msra.mxu0 %v5747
    %6489 = vmatmul.bf16.gmra.mxu0 %v4703
    %v6490 = vpop.f32.mrf.mxu0
    %v6491 = vadd.f32 %v4971, %v6490
    %v6492 = vpop.f32.mrf.mxu0
    %v6493 = vadd.f32 %v4971, %v6492
    %6494 = vdwg.mxu0
    %6495 = vmatpush.bf16.msra.mxu0 %v5807
    %6496 = vmatpush.bf16.msra.mxu0 %v5803
    %6497 = vmatpush.bf16.msra.mxu0 %v5799
    %6498 = vmatpush.bf16.msra.mxu0 %v5795
    %6499 = vmatpush.bf16.msra.mxu0 %v5791
    %6500 = vmatpush.bf16.msra.mxu0 %v5787
    %6501 = vmatpush.bf16.msra.mxu0 %v5783
    %6502 = vmatpush.bf16.msra.mxu0 %v5779
    %6503 = vmatmul.bf16.gmra.mxu0 %v4704
    %v6504 = vpop.f32.mrf.mxu0
    %v6505 = vadd.f32 %v6491, %v6504
    %v6506 = vpop.f32.mrf.mxu0
    %v6507 = vadd.f32 %v6493, %v6506
    %6508 = vdwg.mxu0
    %6509 = vmatpush.bf16.msra.mxu0 %v5839
    %6510 = vmatpush.bf16.msra.mxu0 %v5835
    %6511 = vmatpush.bf16.msra.mxu0 %v5831
    %6512 = vmatpush.bf16.msra.mxu0 %v5827
    %6513 = vmatpush.bf16.msra.mxu0 %v5823
    %6514 = vmatpush.bf16.msra.mxu0 %v5819
    %6515 = vmatpush.bf16.msra.mxu0 %v5815
    %6516 = vmatpush.bf16.msra.mxu0 %v5811
    %6517 = vmatmul.bf16.gmra.mxu0 %v4705
    %v6518 = vpop.f32.mrf.mxu0
    %v6519 = vadd.f32 %v6505, %v6518
    %v6520 = vpop.f32.mrf.mxu0
    %v6521 = vadd.f32 %v6507, %v6520
    %6522 = vdwg.mxu0
    %6523 = vmatpush.bf16.msra.mxu0 %v5871
    %6524 = vmatpush.bf16.msra.mxu0 %v5867
    %6525 = vmatpush.bf16.msra.mxu0 %v5863
    %6526 = vmatpush.bf16.msra.mxu0 %v5859
    %6527 = vmatpush.bf16.msra.mxu0 %v5855
    %6528 = vmatpush.bf16.msra.mxu0 %v5851
    %6529 = vmatpush.bf16.msra.mxu0 %v5847
    %6530 = vmatpush.bf16.msra.mxu0 %v5843
    %6531 = vmatmul.bf16.gmra.mxu0 %v4706
    %v6532 = vpop.f32.mrf.mxu0
    %v6533 = vadd.f32 %v6519, %v6532
    %v6534 = vpop.f32.mrf.mxu0
    %v6535 = vadd.f32 %v6521, %v6534
    %6536 = vdwg.mxu0
    %6537 = vmatpush.bf16.msra.mxu0 %v5903
    %6538 = vmatpush.bf16.msra.mxu0 %v5899
    %6539 = vmatpush.bf16.msra.mxu0 %v5895
    %6540 = vmatpush.bf16.msra.mxu0 %v5891
    %6541 = vmatpush.bf16.msra.mxu0 %v5887
    %6542 = vmatpush.bf16.msra.mxu0 %v5883
    %6543 = vmatpush.bf16.msra.mxu0 %v5879
    %6544 = vmatpush.bf16.msra.mxu0 %v5875
    %6545 = vmatmul.bf16.gmra.mxu0 %v4707
    %v6546 = vpop.f32.mrf.mxu0
    %v6547 = vadd.f32 %v6533, %v6546
    %v6548 = vpop.f32.mrf.mxu0
    %v6549 = vadd.f32 %v6535, %v6548
    %6550 = vdwg.mxu0
    %6551 = vmatpush.bf16.msra.mxu0 %v5935
    %6552 = vmatpush.bf16.msra.mxu0 %v5931
    %6553 = vmatpush.bf16.msra.mxu0 %v5927
    %6554 = vmatpush.bf16.msra.mxu0 %v5923
    %6555 = vmatpush.bf16.msra.mxu0 %v5919
    %6556 = vmatpush.bf16.msra.mxu0 %v5915
    %6557 = vmatpush.bf16.msra.mxu0 %v5911
    %6558 = vmatpush.bf16.msra.mxu0 %v5907
    %6559 = vmatmul.bf16.gmra.mxu0 %v4708
    %v6560 = vpop.f32.mrf.mxu0
    %v6561 = vadd.f32 %v6547, %v6560
    %v6562 = vpop.f32.mrf.mxu0
    %v6563 = vadd.f32 %v6549, %v6562
    %6564 = vdwg.mxu0
    %6565 = vmatpush.bf16.msra.mxu0 %v5967
    %6566 = vmatpush.bf16.msra.mxu0 %v5963
    %6567 = vmatpush.bf16.msra.mxu0 %v5959
    %6568 = vmatpush.bf16.msra.mxu0 %v5955
    %6569 = vmatpush.bf16.msra.mxu0 %v5951
    %6570 = vmatpush.bf16.msra.mxu0 %v5947
    %6571 = vmatpush.bf16.msra.mxu0 %v5943
    %6572 = vmatpush.bf16.msra.mxu0 %v5939
    %6573 = vmatmul.bf16.gmra.mxu0 %v4709
    %v6574 = vpop.f32.mrf.mxu0
    %v6575 = vadd.f32 %v6561, %v6574
    %v6576 = vpop.f32.mrf.mxu0
    %v6577 = vadd.f32 %v6563, %v6576
    %6578 = vdwg.mxu0
    %6579 = vmatpush.bf16.msra.mxu0 %v5999
    %6580 = vmatpush.bf16.msra.mxu0 %v5995
    %6581 = vmatpush.bf16.msra.mxu0 %v5991
    %6582 = vmatpush.bf16.msra.mxu0 %v5987
    %6583 = vmatpush.bf16.msra.mxu0 %v5983
    %6584 = vmatpush.bf16.msra.mxu0 %v5979
    %6585 = vmatpush.bf16.msra.mxu0 %v5975
    %6586 = vmatpush.bf16.msra.mxu0 %v5971
    %6587 = vmatmul.bf16.gmra.mxu0 %v4710
    %v6588 = vpop.f32.mrf.mxu0
    %v6589 = vadd.f32 %v6575, %v6588
    %v6590 = vpop.f32.mrf.mxu0
    %v6591 = vadd.f32 %v6577, %v6590
    %6592 = vdwg.mxu0
    %6593 = vmatpush.bf16.msra.mxu0 %v5776
    %6594 = vmatpush.bf16.msra.mxu0 %v5772
    %6595 = vmatpush.bf16.msra.mxu0 %v5768
    %6596 = vmatpush.bf16.msra.mxu0 %v5764
    %6597 = vmatpush.bf16.msra.mxu0 %v5760
    %6598 = vmatpush.bf16.msra.mxu0 %v5756
    %6599 = vmatpush.bf16.msra.mxu0 %v5752
    %6600 = vmatpush.bf16.msra.mxu0 %v5748
    %6601 = vmatmul.bf16.gmra.mxu0 %v4703
    %v6602 = vpop.f32.mrf.mxu0
    %v6603 = vadd.f32 %v4972, %v6602
    %v6604 = vpop.f32.mrf.mxu0
    %v6605 = vadd.f32 %v4972, %v6604
    %6606 = vdwg.mxu0
    %6607 = vmatpush.bf16.msra.mxu0 %v5808
    %6608 = vmatpush.bf16.msra.mxu0 %v5804
    %6609 = vmatpush.bf16.msra.mxu0 %v5800
    %6610 = vmatpush.bf16.msra.mxu0 %v5796
    %6611 = vmatpush.bf16.msra.mxu0 %v5792
    %6612 = vmatpush.bf16.msra.mxu0 %v5788
    %6613 = vmatpush.bf16.msra.mxu0 %v5784
    %6614 = vmatpush.bf16.msra.mxu0 %v5780
    %6615 = vmatmul.bf16.gmra.mxu0 %v4704
    %v6616 = vpop.f32.mrf.mxu0
    %v6617 = vadd.f32 %v6603, %v6616
    %v6618 = vpop.f32.mrf.mxu0
    %v6619 = vadd.f32 %v6605, %v6618
    %6620 = vdwg.mxu0
    %6621 = vmatpush.bf16.msra.mxu0 %v5840
    %6622 = vmatpush.bf16.msra.mxu0 %v5836
    %6623 = vmatpush.bf16.msra.mxu0 %v5832
    %6624 = vmatpush.bf16.msra.mxu0 %v5828
    %6625 = vmatpush.bf16.msra.mxu0 %v5824
    %6626 = vmatpush.bf16.msra.mxu0 %v5820
    %6627 = vmatpush.bf16.msra.mxu0 %v5816
    %6628 = vmatpush.bf16.msra.mxu0 %v5812
    %6629 = vmatmul.bf16.gmra.mxu0 %v4705
    %v6630 = vpop.f32.mrf.mxu0
    %v6631 = vadd.f32 %v6617, %v6630
    %v6632 = vpop.f32.mrf.mxu0
    %v6633 = vadd.f32 %v6619, %v6632
    %6634 = vdwg.mxu0
    %6635 = vmatpush.bf16.msra.mxu0 %v5872
    %6636 = vmatpush.bf16.msra.mxu0 %v5868
    %6637 = vmatpush.bf16.msra.mxu0 %v5864
    %6638 = vmatpush.bf16.msra.mxu0 %v5860
    %6639 = vmatpush.bf16.msra.mxu0 %v5856
    %6640 = vmatpush.bf16.msra.mxu0 %v5852
    %6641 = vmatpush.bf16.msra.mxu0 %v5848
    %6642 = vmatpush.bf16.msra.mxu0 %v5844
    %6643 = vmatmul.bf16.gmra.mxu0 %v4706
    %v6644 = vpop.f32.mrf.mxu0
    %v6645 = vadd.f32 %v6631, %v6644
    %v6646 = vpop.f32.mrf.mxu0
    %v6647 = vadd.f32 %v6633, %v6646
    %6648 = vdwg.mxu0
    %6649 = vmatpush.bf16.msra.mxu0 %v5904
    %6650 = vmatpush.bf16.msra.mxu0 %v5900
    %6651 = vmatpush.bf16.msra.mxu0 %v5896
    %6652 = vmatpush.bf16.msra.mxu0 %v5892
    %6653 = vmatpush.bf16.msra.mxu0 %v5888
    %6654 = vmatpush.bf16.msra.mxu0 %v5884
    %6655 = vmatpush.bf16.msra.mxu0 %v5880
    %6656 = vmatpush.bf16.msra.mxu0 %v5876
    %6657 = vmatmul.bf16.gmra.mxu0 %v4707
    %v6658 = vpop.f32.mrf.mxu0
    %v6659 = vadd.f32 %v6645, %v6658
    %v6660 = vpop.f32.mrf.mxu0
    %v6661 = vadd.f32 %v6647, %v6660
    %6662 = vdwg.mxu0
    %6663 = vmatpush.bf16.msra.mxu0 %v5936
    %6664 = vmatpush.bf16.msra.mxu0 %v5932
    %6665 = vmatpush.bf16.msra.mxu0 %v5928
    %6666 = vmatpush.bf16.msra.mxu0 %v5924
    %6667 = vmatpush.bf16.msra.mxu0 %v5920
    %6668 = vmatpush.bf16.msra.mxu0 %v5916
    %6669 = vmatpush.bf16.msra.mxu0 %v5912
    %6670 = vmatpush.bf16.msra.mxu0 %v5908
    %6671 = vmatmul.bf16.gmra.mxu0 %v4708
    %v6672 = vpop.f32.mrf.mxu0
    %v6673 = vadd.f32 %v6659, %v6672
    %v6674 = vpop.f32.mrf.mxu0
    %v6675 = vadd.f32 %v6661, %v6674
    %6676 = vdwg.mxu0
    %6677 = vmatpush.bf16.msra.mxu0 %v5968
    %6678 = vmatpush.bf16.msra.mxu0 %v5964
    %6679 = vmatpush.bf16.msra.mxu0 %v5960
    %6680 = vmatpush.bf16.msra.mxu0 %v5956
    %6681 = vmatpush.bf16.msra.mxu0 %v5952
    %6682 = vmatpush.bf16.msra.mxu0 %v5948
    %6683 = vmatpush.bf16.msra.mxu0 %v5944
    %6684 = vmatpush.bf16.msra.mxu0 %v5940
    %6685 = vmatmul.bf16.gmra.mxu0 %v4709
    %v6686 = vpop.f32.mrf.mxu0
    %v6687 = vadd.f32 %v6673, %v6686
    %v6688 = vpop.f32.mrf.mxu0
    %v6689 = vadd.f32 %v6675, %v6688
    %6690 = vdwg.mxu0
    %6691 = vmatpush.bf16.msra.mxu0 %v6000
    %6692 = vmatpush.bf16.msra.mxu0 %v5996
    %6693 = vmatpush.bf16.msra.mxu0 %v5992
    %6694 = vmatpush.bf16.msra.mxu0 %v5988
    %6695 = vmatpush.bf16.msra.mxu0 %v5984
    %6696 = vmatpush.bf16.msra.mxu0 %v5980
    %6697 = vmatpush.bf16.msra.mxu0 %v5976
    %6698 = vmatpush.bf16.msra.mxu0 %v5972
    %6699 = vmatmul.bf16.gmra.mxu0 %v4710
    %v6700 = vpop.f32.mrf.mxu0
    %v6701 = vadd.f32 %v6687, %v6700
    %v6702 = vpop.f32.mrf.mxu0
    %v6703 = vadd.f32 %v6689, %v6702
    %6704 = vdwg.mxu0
    %v6705 = vmax.f32 %v6365, 0.0
    %v6706 = vmax.f32 %v6477, 0.0
    %v6707 = vmax.f32 %v6589, 0.0
    %v6708 = vmax.f32 %v6701, 0.0
    %v6709 = vmax.f32 %v6367, 0.0
    %v6710 = vmax.f32 %v6479, 0.0
    %v6711 = vmax.f32 %v6591, 0.0
    %v6712 = vmax.f32 %v6703, 0.0
    %v6713 = vpack.c.bf16 %v6709, %v6705
    %v6714 = vpack.c.bf16 %v6710, %v6706
    %v6715 = vpack.c.bf16 %v6711, %v6707
    %v6716 = vpack.c.bf16 %v6712, %v6708
    %v6717 = vld [vmem:[#allocation9] sm:$0xff]
    %v6718 = vld [vmem:[#allocation9 + $0x8] sm:$0xff]
    %v6719 = vld [vmem:[#allocation9 + $0x10] sm:$0xff]
    %v6720 = vld [vmem:[#allocation9 + $0x18] sm:$0xff]
    %v6721 = vld [vmem:[#allocation9 + $0x20] sm:$0xff]
    %v6722 = vld [vmem:[#allocation9 + $0x28] sm:$0xff]
    %v6723 = vld [vmem:[#allocation9 + $0x30] sm:$0xff]
    %v6724 = vld [vmem:[#allocation9 + $0x38] sm:$0xff]
    %v6725 = vld [vmem:[#allocation9 + $0x40] sm:$0xff]
    %v6726 = vld [vmem:[#allocation9 + $0x48] sm:$0xff]
    %v6727 = vld [vmem:[#allocation9 + $0x50] sm:$0xff]
    %v6728 = vld [vmem:[#allocation9 + $0x58] sm:$0xff]
    %v6729 = vld [vmem:[#allocation9 + $0x60] sm:$0xff]
    %v6730 = vld [vmem:[#allocation9 + $0x68] sm:$0xff]
    %v6731 = vld [vmem:[#allocation9 + $0x70] sm:$0xff]
    %v6732 = vld [vmem:[#allocation9 + $0x78] sm:$0xff]
    %v6733 = vld [vmem:[#allocation9 + $0x80] sm:$0xff]
    %v6734 = vld [vmem:[#allocation9 + $0x88] sm:$0xff]
    %v6735 = vld [vmem:[#allocation9 + $0x90] sm:$0xff]
    %v6736 = vld [vmem:[#allocation9 + $0x98] sm:$0xff]
    %v6737 = vld [vmem:[#allocation9 + $0xa0] sm:$0xff]
    %v6738 = vld [vmem:[#allocation9 + $0xa8] sm:$0xff]
    %v6739 = vld [vmem:[#allocation9 + $0xb0] sm:$0xff]
    %v6740 = vld [vmem:[#allocation9 + $0xb8] sm:$0xff]
    %v6741 = vld [vmem:[#allocation9 + $0xc0] sm:$0xff]
    %v6742 = vld [vmem:[#allocation9 + $0xc8] sm:$0xff]
    %v6743 = vld [vmem:[#allocation9 + $0xd0] sm:$0xff]
    %v6744 = vld [vmem:[#allocation9 + $0xd8] sm:$0xff]
    %v6745 = vld [vmem:[#allocation9 + $0xe0] sm:$0xff]
    %v6746 = vld [vmem:[#allocation9 + $0xe8] sm:$0xff]
    %v6747 = vld [vmem:[#allocation9 + $0xf0] sm:$0xff]
    %v6748 = vld [vmem:[#allocation9 + $0xf8] sm:$0xff]
    %v6749 = vld [vmem:[#allocation9 + $0x100] sm:$0xff]
    %v6750 = vld [vmem:[#allocation9 + $0x108] sm:$0xff]
    %v6751 = vld [vmem:[#allocation9 + $0x110] sm:$0xff]
    %v6752 = vld [vmem:[#allocation9 + $0x118] sm:$0xff]
    %v6753 = vld [vmem:[#allocation9 + $0x120] sm:$0xff]
    %v6754 = vld [vmem:[#allocation9 + $0x128] sm:$0xff]
    %v6755 = vld [vmem:[#allocation9 + $0x130] sm:$0xff]
    %v6756 = vld [vmem:[#allocation9 + $0x138] sm:$0xff]
    %v6757 = vld [vmem:[#allocation9 + $0x140] sm:$0xff]
    %v6758 = vld [vmem:[#allocation9 + $0x148] sm:$0xff]
    %v6759 = vld [vmem:[#allocation9 + $0x150] sm:$0xff]
    %v6760 = vld [vmem:[#allocation9 + $0x158] sm:$0xff]
    %v6761 = vld [vmem:[#allocation9 + $0x160] sm:$0xff]
    %v6762 = vld [vmem:[#allocation9 + $0x168] sm:$0xff]
    %v6763 = vld [vmem:[#allocation9 + $0x170] sm:$0xff]
    %v6764 = vld [vmem:[#allocation9 + $0x178] sm:$0xff]
    %v6765 = vld [vmem:[#allocation9 + $0x180] sm:$0xff]
    %v6766 = vld [vmem:[#allocation9 + $0x188] sm:$0xff]
    %v6767 = vld [vmem:[#allocation9 + $0x190] sm:$0xff]
    %v6768 = vld [vmem:[#allocation9 + $0x198] sm:$0xff]
    %v6769 = vld [vmem:[#allocation9 + $0x1a0] sm:$0xff]
    %v6770 = vld [vmem:[#allocation9 + $0x1a8] sm:$0xff]
    %v6771 = vld [vmem:[#allocation9 + $0x1b0] sm:$0xff]
    %v6772 = vld [vmem:[#allocation9 + $0x1b8] sm:$0xff]
    %v6773 = vld [vmem:[#allocation9 + $0x1c0] sm:$0xff]
    %v6774 = vld [vmem:[#allocation9 + $0x1c8] sm:$0xff]
    %v6775 = vld [vmem:[#allocation9 + $0x1d0] sm:$0xff]
    %v6776 = vld [vmem:[#allocation9 + $0x1d8] sm:$0xff]
    %v6777 = vld [vmem:[#allocation9 + $0x1e0] sm:$0xff]
    %v6778 = vld [vmem:[#allocation9 + $0x1e8] sm:$0xff]
    %v6779 = vld [vmem:[#allocation9 + $0x1f0] sm:$0xff]
    %v6780 = vld [vmem:[#allocation9 + $0x1f8] sm:$0xff]
    %v6781 = vld [vmem:[#allocation10] sm:$0x3]
    %v6783 = vperm.slane %v6781, 0
    %v6784 = vperm.slane %v6781, 1
    %v6851 = vunpack.c.l.b16 %v6717
    %v6852 = vunpack.c.h.b16 %v6717
    %v6853 = vunpack.c.l.b16 %v6718
    %v6854 = vunpack.c.h.b16 %v6718
    %v6855 = vunpack.c.l.b16 %v6719
    %v6856 = vunpack.c.h.b16 %v6719
    %v6857 = vunpack.c.l.b16 %v6720
    %v6858 = vunpack.c.h.b16 %v6720
    %v6859 = vunpack.c.l.b16 %v6721
    %v6860 = vunpack.c.h.b16 %v6721
    %v6861 = vunpack.c.l.b16 %v6722
    %v6862 = vunpack.c.h.b16 %v6722
    %v6863 = vunpack.c.l.b16 %v6723
    %v6864 = vunpack.c.h.b16 %v6723
    %v6865 = vunpack.c.l.b16 %v6724
    %v6866 = vunpack.c.h.b16 %v6724
    %v6867 = vunpack.c.l.b16 %v6725
    %v6868 = vunpack.c.h.b16 %v6725
    %v6869 = vunpack.c.l.b16 %v6726
    %v6870 = vunpack.c.h.b16 %v6726
    %v6871 = vunpack.c.l.b16 %v6727
    %v6872 = vunpack.c.h.b16 %v6727
    %v6873 = vunpack.c.l.b16 %v6728
    %v6874 = vunpack.c.h.b16 %v6728
    %v6875 = vunpack.c.l.b16 %v6729
    %v6876 = vunpack.c.h.b16 %v6729
    %v6877 = vunpack.c.l.b16 %v6730
    %v6878 = vunpack.c.h.b16 %v6730
    %v6879 = vunpack.c.l.b16 %v6731
    %v6880 = vunpack.c.h.b16 %v6731
    %v6881 = vunpack.c.l.b16 %v6732
    %v6882 = vunpack.c.h.b16 %v6732
    %v6883 = vunpack.c.l.b16 %v6733
    %v6884 = vunpack.c.h.b16 %v6733
    %v6885 = vunpack.c.l.b16 %v6734
    %v6886 = vunpack.c.h.b16 %v6734
    %v6887 = vunpack.c.l.b16 %v6735
    %v6888 = vunpack.c.h.b16 %v6735
    %v6889 = vunpack.c.l.b16 %v6736
    %v6890 = vunpack.c.h.b16 %v6736
    %v6891 = vunpack.c.l.b16 %v6737
    %v6892 = vunpack.c.h.b16 %v6737
    %v6893 = vunpack.c.l.b16 %v6738
    %v6894 = vunpack.c.h.b16 %v6738
    %v6895 = vunpack.c.l.b16 %v6739
    %v6896 = vunpack.c.h.b16 %v6739
    %v6897 = vunpack.c.l.b16 %v6740
    %v6898 = vunpack.c.h.b16 %v6740
    %v6899 = vunpack.c.l.b16 %v6741
    %v6900 = vunpack.c.h.b16 %v6741
    %v6901 = vunpack.c.l.b16 %v6742
    %v6902 = vunpack.c.h.b16 %v6742
    %v6903 = vunpack.c.l.b16 %v6743
    %v6904 = vunpack.c.h.b16 %v6743
    %v6905 = vunpack.c.l.b16 %v6744
    %v6906 = vunpack.c.h.b16 %v6744
    %v6907 = vunpack.c.l.b16 %v6745
    %v6908 = vunpack.c.h.b16 %v6745
    %v6909 = vunpack.c.l.b16 %v6746
    %v6910 = vunpack.c.h.b16 %v6746
    %v6911 = vunpack.c.l.b16 %v6747
    %v6912 = vunpack.c.h.b16 %v6747
    %v6913 = vunpack.c.l.b16 %v6748
    %v6914 = vunpack.c.h.b16 %v6748
    %v6915 = vunpack.c.l.b16 %v6749
    %v6916 = vunpack.c.h.b16 %v6749
    %v6917 = vunpack.c.l.b16 %v6750
    %v6918 = vunpack.c.h.b16 %v6750
    %v6919 = vunpack.c.l.b16 %v6751
    %v6920 = vunpack.c.h.b16 %v6751
    %v6921 = vunpack.c.l.b16 %v6752
    %v6922 = vunpack.c.h.b16 %v6752
    %v6923 = vunpack.c.l.b16 %v6753
    %v6924 = vunpack.c.h.b16 %v6753
    %v6925 = vunpack.c.l.b16 %v6754
    %v6926 = vunpack.c.h.b16 %v6754
    %v6927 = vunpack.c.l.b16 %v6755
    %v6928 = vunpack.c.h.b16 %v6755
    %v6929 = vunpack.c.l.b16 %v6756
    %v6930 = vunpack.c.h.b16 %v6756
    %v6931 = vunpack.c.l.b16 %v6757
    %v6932 = vunpack.c.h.b16 %v6757
    %v6933 = vunpack.c.l.b16 %v6758
    %v6934 = vunpack.c.h.b16 %v6758
    %v6935 = vunpack.c.l.b16 %v6759
    %v6936 = vunpack.c.h.b16 %v6759
    %v6937 = vunpack.c.l.b16 %v6760
    %v6938 = vunpack.c.h.b16 %v6760
    %v6939 = vunpack.c.l.b16 %v6761
    %v6940 = vunpack.c.h.b16 %v6761
    %v6941 = vunpack.c.l.b16 %v6762
    %v6942 = vunpack.c.h.b16 %v6762
    %v6943 = vunpack.c.l.b16 %v6763
    %v6944 = vunpack.c.h.b16 %v6763
    %v6945 = vunpack.c.l.b16 %v6764
    %v6946 = vunpack.c.h.b16 %v6764
    %v6947 = vunpack.c.l.b16 %v6765
    %v6948 = vunpack.c.h.b16 %v6765
    %v6949 = vunpack.c.l.b16 %v6766
    %v6950 = vunpack.c.h.b16 %v6766
    %v6951 = vunpack.c.l.b16 %v6767
    %v6952 = vunpack.c.h.b16 %v6767
    %v6953 = vunpack.c.l.b16 %v6768
    %v6954 = vunpack.c.h.b16 %v6768
    %v6955 = vunpack.c.l.b16 %v6769
    %v6956 = vunpack.c.h.b16 %v6769
    %v6957 = vunpack.c.l.b16 %v6770
    %v6958 = vunpack.c.h.b16 %v6770
    %v6959 = vunpack.c.l.b16 %v6771
    %v6960 = vunpack.c.h.b16 %v6771
    %v6961 = vunpack.c.l.b16 %v6772
    %v6962 = vunpack.c.h.b16 %v6772
    %v6963 = vunpack.c.l.b16 %v6773
    %v6964 = vunpack.c.h.b16 %v6773
    %v6965 = vunpack.c.l.b16 %v6774
    %v6966 = vunpack.c.h.b16 %v6774
    %v6967 = vunpack.c.l.b16 %v6775
    %v6968 = vunpack.c.h.b16 %v6775
    %v6969 = vunpack.c.l.b16 %v6776
    %v6970 = vunpack.c.h.b16 %v6776
    %v6971 = vunpack.c.l.b16 %v6777
    %v6972 = vunpack.c.h.b16 %v6777
    %v6973 = vunpack.c.l.b16 %v6778
    %v6974 = vunpack.c.h.b16 %v6778
    %v6975 = vunpack.c.l.b16 %v6779
    %v6976 = vunpack.c.h.b16 %v6779
    %v6977 = vunpack.c.l.b16 %v6780
    %v6978 = vunpack.c.h.b16 %v6780
    %v6979 = vpack.c.b16 %v6853, %v6851
    %v6980 = vpack.c.b16 %v6854, %v6852
    %v6981 = vpack.c.b16 %v6857, %v6855
    %v6982 = vpack.c.b16 %v6858, %v6856
    %v6983 = vpack.c.b16 %v6861, %v6859
    %v6984 = vpack.c.b16 %v6862, %v6860
    %v6985 = vpack.c.b16 %v6865, %v6863
    %v6986 = vpack.c.b16 %v6866, %v6864
    %v6987 = vpack.c.b16 %v6869, %v6867
    %v6988 = vpack.c.b16 %v6870, %v6868
    %v6989 = vpack.c.b16 %v6873, %v6871
    %v6990 = vpack.c.b16 %v6874, %v6872
    %v6991 = vpack.c.b16 %v6877, %v6875
    %v6992 = vpack.c.b16 %v6878, %v6876
    %v6993 = vpack.c.b16 %v6881, %v6879
    %v6994 = vpack.c.b16 %v6882, %v6880
    %v6995 = vpack.c.b16 %v6885, %v6883
    %v6996 = vpack.c.b16 %v6886, %v6884
    %v6997 = vpack.c.b16 %v6889, %v6887
    %v6998 = vpack.c.b16 %v6890, %v6888
    %v6999 = vpack.c.b16 %v6893, %v6891
    %v7000 = vpack.c.b16 %v6894, %v6892
    %v7001 = vpack.c.b16 %v6897, %v6895
    %v7002 = vpack.c.b16 %v6898, %v6896
    %v7003 = vpack.c.b16 %v6901, %v6899
    %v7004 = vpack.c.b16 %v6902, %v6900
    %v7005 = vpack.c.b16 %v6905, %v6903
    %v7006 = vpack.c.b16 %v6906, %v6904
    %v7007 = vpack.c.b16 %v6909, %v6907
    %v7008 = vpack.c.b16 %v6910, %v6908
    %v7009 = vpack.c.b16 %v6913, %v6911
    %v7010 = vpack.c.b16 %v6914, %v6912
    %v7011 = vpack.c.b16 %v6917, %v6915
    %v7012 = vpack.c.b16 %v6918, %v6916
    %v7013 = vpack.c.b16 %v6921, %v6919
    %v7014 = vpack.c.b16 %v6922, %v6920
    %v7015 = vpack.c.b16 %v6925, %v6923
    %v7016 = vpack.c.b16 %v6926, %v6924
    %v7017 = vpack.c.b16 %v6929, %v6927
    %v7018 = vpack.c.b16 %v6930, %v6928
    %v7019 = vpack.c.b16 %v6933, %v6931
    %v7020 = vpack.c.b16 %v6934, %v6932
    %v7021 = vpack.c.b16 %v6937, %v6935
    %v7022 = vpack.c.b16 %v6938, %v6936
    %v7023 = vpack.c.b16 %v6941, %v6939
    %v7024 = vpack.c.b16 %v6942, %v6940
    %v7025 = vpack.c.b16 %v6945, %v6943
    %v7026 = vpack.c.b16 %v6946, %v6944
    %v7027 = vpack.c.b16 %v6949, %v6947
    %v7028 = vpack.c.b16 %v6950, %v6948
    %v7029 = vpack.c.b16 %v6953, %v6951
    %v7030 = vpack.c.b16 %v6954, %v6952
    %v7031 = vpack.c.b16 %v6957, %v6955
    %v7032 = vpack.c.b16 %v6958, %v6956
    %v7033 = vpack.c.b16 %v6961, %v6959
    %v7034 = vpack.c.b16 %v6962, %v6960
    %v7035 = vpack.c.b16 %v6965, %v6963
    %v7036 = vpack.c.b16 %v6966, %v6964
    %v7037 = vpack.c.b16 %v6969, %v6967
    %v7038 = vpack.c.b16 %v6970, %v6968
    %v7039 = vpack.c.b16 %v6973, %v6971
    %v7040 = vpack.c.b16 %v6974, %v6972
    %v7041 = vpack.c.b16 %v6977, %v6975
    %v7042 = vpack.c.b16 %v6978, %v6976
    %7107 = vmatpush.bf16.msra.mxu0 %v6993
    %7108 = vmatpush.bf16.msra.mxu0 %v6991
    %7109 = vmatpush.bf16.msra.mxu0 %v6989
    %7110 = vmatpush.bf16.msra.mxu0 %v6987
    %7111 = vmatpush.bf16.msra.mxu0 %v6985
    %7112 = vmatpush.bf16.msra.mxu0 %v6983
    %7113 = vmatpush.bf16.msra.mxu0 %v6981
    %7114 = vmatpush.bf16.msra.mxu0 %v6979
    %7115 = vmatmul.bf16.gmra.mxu0 %v6713
    %v7116 = vpop.f32.mrf.mxu0
    %v7117 = vadd.f32 %v6783, %v7116
    %v7118 = vpop.f32.mrf.mxu0
    %v7119 = vadd.f32 %v6783, %v7118
    %7120 = vdwg.mxu0
    %7121 = vmatpush.bf16.msra.mxu0 %v7009
    %7122 = vmatpush.bf16.msra.mxu0 %v7007
    %7123 = vmatpush.bf16.msra.mxu0 %v7005
    %7124 = vmatpush.bf16.msra.mxu0 %v7003
    %7125 = vmatpush.bf16.msra.mxu0 %v7001
    %7126 = vmatpush.bf16.msra.mxu0 %v6999
    %7127 = vmatpush.bf16.msra.mxu0 %v6997
    %7128 = vmatpush.bf16.msra.mxu0 %v6995
    %7129 = vmatmul.bf16.gmra.mxu0 %v6714
    %v7130 = vpop.f32.mrf.mxu0
    %v7131 = vadd.f32 %v7117, %v7130
    %v7132 = vpop.f32.mrf.mxu0
    %v7133 = vadd.f32 %v7119, %v7132
    %7134 = vdwg.mxu0
    %7135 = vmatpush.bf16.msra.mxu0 %v7025
    %7136 = vmatpush.bf16.msra.mxu0 %v7023
    %7137 = vmatpush.bf16.msra.mxu0 %v7021
    %7138 = vmatpush.bf16.msra.mxu0 %v7019
    %7139 = vmatpush.bf16.msra.mxu0 %v7017
    %7140 = vmatpush.bf16.msra.mxu0 %v7015
    %7141 = vmatpush.bf16.msra.mxu0 %v7013
    %7142 = vmatpush.bf16.msra.mxu0 %v7011
    %7143 = vmatmul.bf16.gmra.mxu0 %v6715
    %v7144 = vpop.f32.mrf.mxu0
    %v7145 = vadd.f32 %v7131, %v7144
    %v7146 = vpop.f32.mrf.mxu0
    %v7147 = vadd.f32 %v7133, %v7146
    %7148 = vdwg.mxu0
    %7149 = vmatpush.bf16.msra.mxu0 %v7041
    %7150 = vmatpush.bf16.msra.mxu0 %v7039
    %7151 = vmatpush.bf16.msra.mxu0 %v7037
    %7152 = vmatpush.bf16.msra.mxu0 %v7035
    %7153 = vmatpush.bf16.msra.mxu0 %v7033
    %7154 = vmatpush.bf16.msra.mxu0 %v7031
    %7155 = vmatpush.bf16.msra.mxu0 %v7029
    %7156 = vmatpush.bf16.msra.mxu0 %v7027
    %7157 = vmatmul.bf16.gmra.mxu0 %v6716
    %v7158 = vpop.f32.mrf.mxu0
    %v7159 = vadd.f32 %v7145, %v7158
    %v7160 = vpop.f32.mrf.mxu0
    %v7161 = vadd.f32 %v7147, %v7160
    %7162 = vdwg.mxu0
    %7163 = vmatpush.bf16.msra.mxu0 %v6994
    %7164 = vmatpush.bf16.msra.mxu0 %v6992
    %7165 = vmatpush.bf16.msra.mxu0 %v6990
    %7166 = vmatpush.bf16.msra.mxu0 %v6988
    %7167 = vmatpush.bf16.msra.mxu0 %v6986
    %7168 = vmatpush.bf16.msra.mxu0 %v6984
    %7169 = vmatpush.bf16.msra.mxu0 %v6982
    %7170 = vmatpush.bf16.msra.mxu0 %v6980
    %7171 = vmatmul.bf16.gmra.mxu0 %v6713
    %v7172 = vpop.f32.mrf.mxu0
    %v7173 = vadd.f32 %v6784, %v7172
    %v7174 = vpop.f32.mrf.mxu0
    %v7175 = vadd.f32 %v6784, %v7174
    %7176 = vdwg.mxu0
    %7177 = vmatpush.bf16.msra.mxu0 %v7010
    %7178 = vmatpush.bf16.msra.mxu0 %v7008
    %7179 = vmatpush.bf16.msra.mxu0 %v7006
    %7180 = vmatpush.bf16.msra.mxu0 %v7004
    %7181 = vmatpush.bf16.msra.mxu0 %v7002
    %7182 = vmatpush.bf16.msra.mxu0 %v7000
    %7183 = vmatpush.bf16.msra.mxu0 %v6998
    %7184 = vmatpush.bf16.msra.mxu0 %v6996
    %7185 = vmatmul.bf16.gmra.mxu0 %v6714
    %v7186 = vpop.f32.mrf.mxu0
    %v7187 = vadd.f32 %v7173, %v7186
    %v7188 = vpop.f32.mrf.mxu0
    %v7189 = vadd.f32 %v7175, %v7188
    %7190 = vdwg.mxu0
    %7191 = vmatpush.bf16.msra.mxu0 %v7026
    %7192 = vmatpush.bf16.msra.mxu0 %v7024
    %7193 = vmatpush.bf16.msra.mxu0 %v7022
    %7194 = vmatpush.bf16.msra.mxu0 %v7020
    %7195 = vmatpush.bf16.msra.mxu0 %v7018
    %7196 = vmatpush.bf16.msra.mxu0 %v7016
    %7197 = vmatpush.bf16.msra.mxu0 %v7014
    %7198 = vmatpush.bf16.msra.mxu0 %v7012
    %7199 = vmatmul.bf16.gmra.mxu0 %v6715
    %v7200 = vpop.f32.mrf.mxu0
    %v7201 = vadd.f32 %v7187, %v7200
    %v7202 = vpop.f32.mrf.mxu0
    %v7203 = vadd.f32 %v7189, %v7202
    %7204 = vdwg.mxu0
    %7205 = vmatpush.bf16.msra.mxu0 %v7042
    %7206 = vmatpush.bf16.msra.mxu0 %v7040
    %7207 = vmatpush.bf16.msra.mxu0 %v7038
    %7208 = vmatpush.bf16.msra.mxu0 %v7036
    %7209 = vmatpush.bf16.msra.mxu0 %v7034
    %7210 = vmatpush.bf16.msra.mxu0 %v7032
    %7211 = vmatpush.bf16.msra.mxu0 %v7030
    %7212 = vmatpush.bf16.msra.mxu0 %v7028
    %7213 = vmatmul.bf16.gmra.mxu0 %v6716
    %v7214 = vpop.f32.mrf.mxu0
    %v7215 = vadd.f32 %v7201, %v7214
    %v7216 = vpop.f32.mrf.mxu0
    %v7217 = vadd.f32 %v7203, %v7216
    %7218 = vdwg.mxu0
    %v7219 = vmax.f32 %v7159, 0.0
    %v7220 = vmax.f32 %v7215, 0.0
    %v7221 = vmax.f32 %v7161, 0.0
    %v7222 = vmax.f32 %v7217, 0.0
    %v7223 = vld [vmem:[#allocation12] sm:$0xff]
    %v7224 = vld [vmem:[#allocation12 + $0x8] sm:$0xff]
    %v7225 = vld [vmem:[#allocation12 + $0x10] sm:$0xff]
    %v7226 = vld [vmem:[#allocation12 + $0x18] sm:$0xff]
    %v7227 = vld [vmem:[#allocation12 + $0x20] sm:$0xff]
    %v7228 = vld [vmem:[#allocation12 + $0x28] sm:$0xff]
    %v7229 = vld [vmem:[#allocation12 + $0x30] sm:$0xff]
    %v7230 = vld [vmem:[#allocation12 + $0x38] sm:$0xff]
    %v7231 = vld [vmem:[#allocation12 + $0x40] sm:$0xff]
    %v7232 = vld [vmem:[#allocation12 + $0x48] sm:$0xff]
    %v7233 = vld [vmem:[#allocation12 + $0x50] sm:$0xff]
    %v7234 = vld [vmem:[#allocation12 + $0x58] sm:$0xff]
    %v7235 = vld [vmem:[#allocation12 + $0x60] sm:$0xff]
    %v7236 = vld [vmem:[#allocation12 + $0x68] sm:$0xff]
    %v7237 = vld [vmem:[#allocation12 + $0x70] sm:$0xff]
    %v7238 = vld [vmem:[#allocation12 + $0x78] sm:$0xff]
    %v7239 = vld [vmem:[#allocation12 + $0x80] sm:$0xff]
    %v7240 = vld [vmem:[#allocation12 + $0x88] sm:$0xff]
    %v7241 = vld [vmem:[#allocation12 + $0x90] sm:$0xff]
    %v7242 = vld [vmem:[#allocation12 + $0x98] sm:$0xff]
    %v7243 = vld [vmem:[#allocation12 + $0xa0] sm:$0xff]
    %v7244 = vld [vmem:[#allocation12 + $0xa8] sm:$0xff]
    %v7245 = vld [vmem:[#allocation12 + $0xb0] sm:$0xff]
    %v7246 = vld [vmem:[#allocation12 + $0xb8] sm:$0xff]
    %v7247 = vld [vmem:[#allocation12 + $0xc0] sm:$0xff]
    %v7248 = vld [vmem:[#allocation12 + $0xc8] sm:$0xff]
    %v7249 = vld [vmem:[#allocation12 + $0xd0] sm:$0xff]
    %v7250 = vld [vmem:[#allocation12 + $0xd8] sm:$0xff]
    %v7251 = vld [vmem:[#allocation12 + $0xe0] sm:$0xff]
    %v7252 = vld [vmem:[#allocation12 + $0xe8] sm:$0xff]
    %v7253 = vld [vmem:[#allocation12 + $0xf0] sm:$0xff]
    %v7254 = vld [vmem:[#allocation12 + $0xf8] sm:$0xff]
    %v7255 = vld [vmem:[#allocation13] sm:$0x1]
    %v7257 = vperm.slane %v7255, 0
    %7259 = vmatpush.msra.mxu0 %v7238
    %7260 = vmatpush.msra.mxu0 %v7237
    %7261 = vmatpush.msra.mxu0 %v7236
    %7262 = vmatpush.msra.mxu0 %v7235
    %7263 = vmatpush.msra.mxu0 %v7234
    %7264 = vmatpush.msra.mxu0 %v7233
    %7265 = vmatpush.msra.mxu0 %v7232
    %7266 = vmatpush.msra.mxu0 %v7231
    %7267 = vmatpush.msra.mxu0 %v7230
    %7268 = vmatpush.msra.mxu0 %v7229
    %7269 = vmatpush.msra.mxu0 %v7228
    %7270 = vmatpush.msra.mxu0 %v7227
    %7271 = vmatpush.msra.mxu0 %v7226
    %7272 = vmatpush.msra.mxu0 %v7225
    %7273 = vmatpush.msra.mxu0 %v7224
    %7274 = vmatpush.msra.mxu0 %v7223
    %7275 = vmatmul.f32.gmra.mxu0 %v7219
    %v7276 = vpop.f32.mrf.mxu0
    %v7277 = vadd.f32 %v7257, %v7276
    %7278 = vmatmul.f32.gmra.mxu0 %v7221
    %v7279 = vpop.f32.mrf.mxu0
    %v7280 = vadd.f32 %v7257, %v7279
    %7281 = vdwg.mxu0
    %7282 = vmatpush.msra.mxu0 %v7254
    %7283 = vmatpush.msra.mxu0 %v7253
    %7284 = vmatpush.msra.mxu0 %v7252
    %7285 = vmatpush.msra.mxu0 %v7251
    %7286 = vmatpush.msra.mxu0 %v7250
    %7287 = vmatpush.msra.mxu0 %v7249
    %7288 = vmatpush.msra.mxu0 %v7248
    %7289 = vmatpush.msra.mxu0 %v7247
    %7290 = vmatpush.msra.mxu0 %v7246
    %7291 = vmatpush.msra.mxu0 %v7245
    %7292 = vmatpush.msra.mxu0 %v7244
    %7293 = vmatpush.msra.mxu0 %v7243
    %7294 = vmatpush.msra.mxu0 %v7242
    %7295 = vmatpush.msra.mxu0 %v7241
    %7296 = vmatpush.msra.mxu0 %v7240
    %7297 = vmatpush.msra.mxu0 %v7239
    %7298 = vmatmul.f32.gmra.mxu0 %v7220
    %v7299 = vpop.f32.mrf.mxu0
    %v7300 = vadd.f32 %v7277, %v7299
    %7301 = vmatmul.f32.gmra.mxu0 %v7222
    %v7302 = vpop.f32.mrf.mxu0
    %v7303 = vadd.f32 %v7280, %v7302
    %7304 = vdwg.mxu0
    %v7305 = vtanh.pop %v7300
    %v7306 = vtanh.pop %v7303
    %7307 = vst [vmem:[%s9] sm:$0xff] %v7305
    %7308 = vst [vmem:[%s9 + $0x8] sm:$0xff] %v7306
    // Predicated region
    $region70: #{_lambda_.1} parent=1 // pred_check
      _
    $region71: #{_lambda_.1} parent=1 // pred_check_branch
      %7310 = sbr.rel (0) target = $region73
    $region72: #{_lambda_.1} parent=1 // pred_region
      _
    $region73: #{_lambda_.1} parent=1 // pred_fallthru
      _
    // Predicated region
    $region74: #{_lambda_.1} parent=1 // pred_check
      _
    $region75: #{_lambda_.1} parent=1 // pred_check_branch
      %7312 = sbr.rel (0) target = $region77
    $region76: #{_lambda_.1} parent=1 // pred_region
      _
    $region77: #{_lambda_.1} parent=1 // pred_fallthru
      _
    %7313 = vsyncpa [#allocation3], 1
    %7314 = vsyncpa [#allocation5], 1
    %7315 = vsyncpa [#allocation8], 1
    %7316 = vsyncpa [#allocation11], 1
    %7317 = vsyncpa [#allocation14], 1

</llo_original>
